<compile_context>
chip_gen: v7x
topology: tpu7x:2x2x1
jax: 0.10.0
libtpu: 0.0.40
codegen_flags: <defaults>
</compile_context>

<pallas_src>
import jax
import jax.numpy as jnp
from jax.experimental import pallas as pl
from jax.experimental.pallas import tpu as pltpu

# ----------------------------- configuration --------------------------------
BATCH = 2
IMG_C, IMG_H, IMG_W = 3, 16, 16
CNN_FEAT = 32          # cnn.n_out_features
N_TAGS = 16
K_TAGS = 4             # top-k tags fed to co-attention
EMB = 32               # word / tag / topic embedding size
ATT_H = 32             # co-attention hidden size
SENT_H = 32            # conf['lstm_sent_h_size']
WORD_H = 32            # word LSTM hidden size
VOCAB = 32             # conf['vocab_size']
N_SENT = 3
N_WORDS = 5

B_PAD = 8              # batch padded to one full sublane tile
KCOL = 32              # im2col contraction dim (C*9 = 27) padded to 32
HW = IMG_H * IMG_W
SB = N_SENT * B_PAD    # all-sentence stacked batch (24 rows)
W32 = 32

_VMEM = pl.BlockSpec(memory_space=pltpu.MemorySpace.VMEM)

# bias-slab row indices
_B_CONV, _B_SENT, _B_WORD, _B_WOUT = 0, 1, 2, 3
_B_MLC, _B_COV, _B_COVATT, _B_COA, _B_COAH = 4, 5, 6, 7, 8
_B_COFC, _B_TOPIC, _B_STOP1, _B_STOP2, _B_WAATT, _B_BAATT = 9, 10, 11, 12, 13, 14

# square-weight-slab block indices
(_W_COV_FEAT, _W_COV_H, _W_COV_ATT, _W_COA, _W_COAH, _W_COFC_V, _W_COFC_A,
 _W_TOPIC_H, _W_TOPIC_C, _W_STOP1_P, _W_STOP1_N, _W_MLC, _W_STOP2) = range(13)


# ----------------------------- fused kernel -----------------------------------

def _uc5_fused_kernel(col_ref, tok_ref, avg_mat_ref, conv_w_ref, w_sq_ref,
                      w_lstm_ref, w_out_ref, tag_embed_ref, b_ref,
                      tags_ref, stop_ref, words_ref):
    B, S, T, H = B_PAD, N_SENT, N_WORDS, SENT_H
    bf = jnp.bfloat16

    def mm(x, w):                          # MXU: bf16 operands, fp32 accumulation
        return jnp.dot(x.astype(bf), w, preferred_element_type=jnp.float32)

    def sq(i):                             # [32,32] bf16 weight block (slab slice)
        return w_sq_ref[i * W32:(i + 1) * W32, :]

    def lw(i):                             # [32,128] bf16 LSTM gate-weight block
        return w_lstm_ref[i * W32:(i + 1) * W32, :]

    def brow(i, w=128):                    # [1,w] fp32 bias row
        return b_ref[i:i + 1, :w]

    def softmax(x):
        e = jnp.exp(x - jnp.max(x, axis=-1, keepdims=True))
        return e * pl.reciprocal(jnp.sum(e, axis=-1, keepdims=True), approx=True)

    def lstm_step(gates, c):               # gate order (i, f, g, o)
        i = jax.nn.sigmoid(gates[:, 0 * H:1 * H])
        f = jax.nn.sigmoid(gates[:, 1 * H:2 * H])
        g = jnp.tanh(gates[:, 2 * H:3 * H])
        o = jax.nn.sigmoid(gates[:, 3 * H:4 * H])
        c_new = f * c + i * g
        return o * jnp.tanh(c_new), c_new

    # ---------------- CNN: lane-dense conv matmul + MXU region mean ----------
    feat = jnp.maximum(
        jnp.dot(col_ref[...], conv_w_ref[...], preferred_element_type=jnp.float32)
        + brow(_B_CONV), 0.0)                                        # [512, 128]
    avg4 = jnp.dot(avg_mat_ref[...], feat.astype(bf),
                   preferred_element_type=jnp.float32)               # [B, 128]
    # fold the 4-way spatial lane split back into 32 channels
    avg_feat = (avg4[:, 0:32] + avg4[:, 32:64]
                + avg4[:, 64:96] + avg4[:, 96:128])                  # [B, F]
    # NOTE: padded batch rows (b >= BATCH) carry zero images; their mean is
    # per-row and gets sliced off in the wrapper.
    # TODO(synk): the CNN's `cnn_est` head is returned by the base CNN but never
    # used by Uc5Model outputs, so it is omitted from the fused kernel.

    # ---------------- MLC: softmax tags + batched top-K gather-as-matmul -----
    mlc_logits = mm(avg_feat, sq(_W_MLC))[:, :N_TAGS] + brow(_B_MLC, N_TAGS)
    tags = softmax(mlc_logits)                                       # [B, N_TAGS]
    tags_ref[...] = tags

    lane = jax.lax.broadcasted_iota(jnp.int32, (B, N_TAGS), 1).astype(jnp.float32)
    scores = tags
    onehots = []
    for _ in range(K_TAGS):     # iterative masked arg-max top-k (lowest-index ties)
        mx = jnp.max(scores, axis=-1, keepdims=True)
        idx = jnp.min(jnp.where(scores >= mx, lane, jnp.float32(N_TAGS)),
                      axis=-1, keepdims=True)
        oh = (lane == idx).astype(jnp.float32)
        onehots.append(oh)
        scores = scores - oh * 1e9
    onehot_stack = jnp.concatenate(onehots, axis=0)                  # [K*B, N_TAGS]
    # exact fp32 gather of the tag-embedding table (single matmul)
    sem_stack = jnp.dot(onehot_stack, tag_embed_ref[...],
                        preferred_element_type=jnp.float32)          # [K*B, EMB]

    # ---------------- sentence-invariant co-attention projections (hoisted) --
    zv_base = mm(avg_feat, sq(_W_COV_FEAT)) + brow(_B_COV, ATT_H)    # [B, ATT_H]
    zk_base = mm(sem_stack, sq(_W_COA)) + brow(_B_COA, ATT_H)        # [K*B, ATT_H]
    wa_att_row = brow(_B_WAATT, ATT_H)                               # [1, ATT_H]
    ba_att = brow(_B_BAATT, 1)                                       # [1, 1]

    # ---------------- sentence loop: co-attention -> sentence LSTM step ------
    h = jnp.zeros((B, H), jnp.float32)     # previous_hidden_state == LSTM hidden
    c = jnp.zeros((B, H), jnp.float32)
    hprev_l, hnew_l, ctx_l = [], [], []
    for _s in range(S):
        hb = h.astype(bf)                  # one cast, reused by 3 dots
        # visual attention (channel-wise over avg_feat)
        zv = jnp.tanh(zv_base + mm(hb, sq(_W_COV_H)))
        alpha_v = softmax(mm(zv, sq(_W_COV_ATT)) + brow(_B_COVATT, CNN_FEAT))
        v_att = alpha_v * avg_feat                                   # [B, F]
        # semantic attention over the K tag embeddings (VPU score, no N=1 matmul)
        h_proj = mm(hb, sq(_W_COAH)) + brow(_B_COAH, ATT_H)
        sc = []
        for k in range(K_TAGS):
            zk = jnp.tanh(zk_base[k * B:(k + 1) * B, :] + h_proj)
            sc.append(jnp.sum(zk * wa_att_row, axis=-1, keepdims=True) + ba_att)
        mx = sc[0]
        for k in range(1, K_TAGS):
            mx = jnp.maximum(mx, sc[k])
        exps = [jnp.exp(x - mx) for x in sc]
        denom = exps[0]
        for k in range(1, K_TAGS):
            denom = denom + exps[k]
        inv = pl.reciprocal(denom, approx=True)
        a_att = (exps[0] * inv) * sem_stack[0:B, :]
        for k in range(1, K_TAGS):
            a_att = a_att + (exps[k] * inv) * sem_stack[k * B:(k + 1) * B, :]
        # fused context (split weights, no lane concat)
        ctx = mm(v_att, sq(_W_COFC_V)) + mm(a_att, sq(_W_COFC_A)) + brow(_B_COFC, EMB)
        # sentence LSTM step (split [Wih; Whh], no lane concat)
        gates = mm(ctx, lw(0)) + mm(hb, lw(1)) + brow(_B_SENT)
        h_new, c = lstm_step(gates, c)
        hprev_l.append(h)
        hnew_l.append(h_new)
        ctx_l.append(ctx)
        h = h_new

    # ---------------- batched topic / stop heads over all sentences ----------
    hprev = jnp.concatenate(hprev_l, axis=0)                         # [SB, H]
    hnew = jnp.concatenate(hnew_l, axis=0)                           # [SB, H]
    ctxs = jnp.concatenate(ctx_l, axis=0)                            # [SB, EMB]
    topic = jnp.tanh(mm(hnew, sq(_W_TOPIC_H)) + mm(ctxs, sq(_W_TOPIC_C))
                     + brow(_B_TOPIC, EMB))                          # [SB, EMB]
    zst = jnp.tanh(mm(hprev, sq(_W_STOP1_P)) + mm(hnew, sq(_W_STOP1_N))
                   + brow(_B_STOP1, ATT_H))
    # stop_w2 is lane-padded to 32 inside the slab; only lanes 0:2 are real.
    stop_ref[...] = mm(zst, sq(_W_STOP2))[:, :2] + brow(_B_STOP2, 2)  # one store

    # ---------------- word LSTM: ONE batched teacher-forced rollout ----------
    word_b = brow(_B_WORD)
    tok_proj = mm(tok_ref[...], lw(2)) + word_b                      # [(T-1)*SB, 4H]
    topic_proj = mm(topic, lw(2)) + word_b                           # [SB, 4H]
    hw = jnp.zeros((SB, WORD_H), jnp.float32)
    cw = jnp.zeros((SB, WORD_H), jnp.float32)
    hs = []
    for t in range(T):
        x_proj = topic_proj if t == 0 else tok_proj[(t - 1) * SB:t * SB, :]
        gates = x_proj + mm(hw, lw(3))
        hw, cw = lstm_step(gates, cw)
        if t >= 1:
            hs.append(hw)
    # lane-pack the 4 step outputs and emit all logits via one block-diagonal
    # output-head matmul -> a single lane-dense [SB, 4*VOCAB] = [24, 128] store.
    hcat = jnp.concatenate(hs, axis=1)                               # [SB, (T-1)*Hw]
    words_ref[...] = mm(hcat, w_out_ref[...]) + brow(_B_WOUT)


# ----------------------------- wrapper ----------------------------------------

def uc5_forward(p, images, labels, sentences, probs):
    del labels                                    # unused by the reference forward
    _ = probs.astype(jnp.int32)                   # probs.long(); unused downstream
    sentences = sentences.astype(jnp.int32)       # sentences.long()

    bf = jnp.bfloat16
    b, c, h, w = images.shape
    pad_b = B_PAD - b

    # batch padded to a full 8-row sublane tile (padded rows sliced off below)
    imgs = jnp.pad(images, ((0, pad_b), (0, 0), (0, 0), (0, 0)))
    sent_p = jnp.pad(sentences, ((0, pad_b), (0, 0), (0, 0)))

    # im2col, channel-major patch order: col[:, c*9 + ky*3 + kx] (matches [F,C,3,3]);
    # reshaped to a lane-dense [B*HW/4, 4*KCOL] = [512, 128] slab.
    xp = jnp.pad(imgs, ((0, 0), (0, 0), (1, 1), (1, 1)))
    patches = jnp.stack([xp[:, :, ky:ky + h, kx:kx + w]
                         for ky in range(3) for kx in range(3)], axis=2)  # [Bp,C,9,H,W]
    col = patches.transpose(0, 3, 4, 1, 2).reshape(B_PAD * h * w, c * 9)
    col = jnp.pad(col, ((0, 0), (0, KCOL - c * 9)))                       # K 27 -> 32
    col_wide = col.reshape(B_PAD * h * w // 4, 4 * KCOL).astype(bf)       # [512, 128]

    # token embedding lookup; rows flattened (step, sentence, batch)-major so the
    # batched rollout slices one contiguous block per step.
    # TODO(synk): integer gather has no Pallas equivalent at this size; XLA glue.
    tok = sent_p[:, :, :N_WORDS - 1]                                      # [Bp,S,T-1]
    tok_emb = jnp.take(p["word_embed"], tok, axis=0)                      # [Bp,S,T-1,E]
    tok_emb = tok_emb.transpose(2, 1, 0, 3).reshape(
        (N_WORDS - 1) * N_SENT * B_PAD, EMB).astype(bf)

    # ---- packed weights (bf16 cast once, wrapper-side) ----------------------
    conv_wm = jnp.pad(p["conv_w"].reshape(CNN_FEAT, c * 9).T,
                      ((0, KCOL - c * 9), (0, 0)))                        # [KCOL, F]
    conv_w_bd = jnp.kron(jnp.eye(4, dtype=jnp.float32), conv_wm).astype(bf)   # [128,128]
    avg_mat = (jnp.repeat(jnp.eye(B_PAD, dtype=jnp.float32), HW // 4, axis=1)
               / HW).astype(bf)                                           # [8, 512]
    word_out_bd = jnp.kron(jnp.eye(4, dtype=jnp.float32),
                           p["word_out_w"]).astype(bf)                    # [128,128]

    def pad32(x):                          # lane-pad a [32, n<32] matrix to [32,32]
        return jnp.pad(x, ((0, 0), (0, W32 - x.shape[1])))

    w_sq = jnp.concatenate([
        p["co_wv"][:CNN_FEAT],             # 0  visual-att, avg_feat half
        p["co_wv"][CNN_FEAT:],             # 1  visual-att, h half
        p["co_wv_att"],                    # 2
        p["co_wa"],                        # 3
        p["co_wah"],                       # 4
        p["co_wfc"][:CNN_FEAT],            # 5  context, v_att half
        p["co_wfc"][CNN_FEAT:],            # 6  context, a_att half
        p["topic_w"][:SENT_H],             # 7  topic, h half
        p["topic_w"][SENT_H:],             # 8  topic, ctx half
        p["stop_w1"][:SENT_H],             # 9  stop, h_prev half
        p["stop_w1"][SENT_H:],             # 10 stop, h_new half
        pad32(p["mlc_w"]),                 # 11
        pad32(p["stop_w2"]),               # 12
    ], axis=0).astype(bf)                                                 # [416, 32]

    w_lstm = jnp.concatenate([p["sent_wih"], p["sent_whh"],
                              p["word_wih"], p["word_whh"]], axis=0).astype(bf)  # [128,128]

    biases = jnp.zeros((16, 128), jnp.float32)
    biases = biases.at[_B_CONV, :].set(jnp.tile(p["conv_b"], 4))
    biases = biases.at[_B_SENT, :].set(p["sent_b"])
    biases = biases.at[_B_WORD, :].set(p["word_b"])
    biases = biases.at[_B_WOUT, :].set(jnp.tile(p["word_out_b"], 4))
    biases = biases.at[_B_MLC, :N_TAGS].set(p["mlc_b"])
    biases = biases.at[_B_COV, :ATT_H].set(p["co_bv"])
    biases = biases.at[_B_COVATT, :CNN_FEAT].set(p["co_bv_att"])
    biases = biases.at[_B_COA, :ATT_H].set(p["co_ba"])
    biases = biases.at[_B_COAH, :ATT_H].set(p["co_bah"])
    biases = biases.at[_B_COFC, :EMB].set(p["co_bfc"])
    biases = biases.at[_B_TOPIC, :EMB].set(p["topic_b"])
    biases = biases.at[_B_STOP1, :ATT_H].set(p["stop_b1"])
    biases = biases.at[_B_STOP2, :2].set(p["stop_b2"])
    biases = biases.at[_B_WAATT, :ATT_H].set(p["co_wa_att"][:, 0])
    biases = biases.at[_B_BAATT, :1].set(p["co_ba_att"])

    tags_full, stop_full, words_full = pl.pallas_call(
        _uc5_fused_kernel,
        out_shape=(
            jax.ShapeDtypeStruct((B_PAD, N_TAGS), jnp.float32),
            jax.ShapeDtypeStruct((SB, 2), jnp.float32),
            jax.ShapeDtypeStruct((SB, (N_WORDS - 1) * VOCAB), jnp.float32),
        ),
        in_specs=[_VMEM] * 9,
        out_specs=(_VMEM, _VMEM, _VMEM),
    )(col_wide, tok_emb, avg_mat, conv_w_bd, w_sq, w_lstm, word_out_bd,
      p["tag_embed"], biases)

    tags = tags_full[:b]                                             # [B, N_TAGS]
    prob_stop = stop_full.reshape(N_SENT, B_PAD, 2).transpose(1, 0, 2)[:b]
    words = words_full.reshape(N_SENT, B_PAD, N_WORDS - 1, VOCAB)
    words = words.transpose(1, 0, 2, 3)[:b]                          # [B, S, T-1, V]
    return tags, prob_stop, words


# ----------------------------- parameters ------------------------------------

def init_params(key):
    def nrm(k, shape, scale=0.1):
        return scale * jax.random.normal(k, shape, dtype=jnp.float32)

    ks = iter(jax.random.split(key, 40))
    p = {
        # CNN
        "conv_w": nrm(next(ks), (CNN_FEAT, IMG_C, 3, 3)),
        "conv_b": nrm(next(ks), (CNN_FEAT,)),
        "cnn_est_w": nrm(next(ks), (CNN_FEAT, N_TAGS)),   # unused by outputs
        "cnn_est_b": nrm(next(ks), (N_TAGS,)),
        # MLC
        "mlc_w": nrm(next(ks), (CNN_FEAT, N_TAGS)),
        "mlc_b": nrm(next(ks), (N_TAGS,)),
        "tag_embed": nrm(next(ks), (N_TAGS, EMB)),
        # Co-attention
        "co_wv": nrm(next(ks), (CNN_FEAT + SENT_H, ATT_H)),
        "co_bv": nrm(next(ks), (ATT_H,)),
        "co_wv_att": nrm(next(ks), (ATT_H, CNN_FEAT)),
        "co_bv_att": nrm(next(ks), (CNN_FEAT,)),
        "co_wa": nrm(next(ks), (EMB, ATT_H)),
        "co_ba": nrm(next(ks), (ATT_H,)),
        "co_wah": nrm(next(ks), (SENT_H, ATT_H)),
        "co_bah": nrm(next(ks), (ATT_H,)),
        "co_wa_att": nrm(next(ks), (ATT_H, 1)),
        "co_ba_att": nrm(next(ks), (1,)),
        "co_wfc": nrm(next(ks), (CNN_FEAT + EMB, EMB)),
        "co_bfc": nrm(next(ks), (EMB,)),
        # Sentence LSTM (+ topic / stop heads)
        "sent_wih": nrm(next(ks), (EMB, 4 * SENT_H)),
        "sent_whh": nrm(next(ks), (SENT_H, 4 * SENT_H)),
        "sent_b": nrm(next(ks), (4 * SENT_H,)),
        "topic_w": nrm(next(ks), (SENT_H + EMB, EMB)),
        "topic_b": nrm(next(ks), (EMB,)),
        "stop_w1": nrm(next(ks), (2 * SENT_H, ATT_H)),
        "stop_b1": nrm(next(ks), (ATT_H,)),
        "stop_w2": nrm(next(ks), (ATT_H, 2)),
        "stop_b2": nrm(next(ks), (2,)),
        # Word LSTM
        "word_embed": nrm(next(ks), (VOCAB, EMB)),
        "word_wih": nrm(next(ks), (EMB, 4 * WORD_H)),
        "word_whh": nrm(next(ks), (WORD_H, 4 * WORD_H)),
        "word_b": nrm(next(ks), (4 * WORD_H,)),
        "word_out_w": nrm(next(ks), (WORD_H, VOCAB)),
        "word_out_b": nrm(next(ks), (VOCAB,)),
    }
    return p


# --------------------------------- main ---------------------------------------

if __name__ == "__main__":
    root = jax.random.PRNGKey(0)
    k_par, k_img, k_lab, k_sen, k_prb = jax.random.split(root, 5)

    params = init_params(k_par)
    images = jax.random.normal(k_img, (BATCH, IMG_C, IMG_H, IMG_W), dtype=jnp.float32)
    labels = jax.random.bernoulli(k_lab, 0.3, (BATCH, N_TAGS)).astype(jnp.float32)
    sentences = jax.random.randint(k_sen, (BATCH, N_SENT, N_WORDS), 0, VOCAB)
    probs = jax.random.randint(k_prb, (BATCH, N_SENT), 0, 2).astype(jnp.float32)

    fwd = jax.jit(uc5_forward)
    tags, prob_stop, words = fwd(params, images, labels, sentences, probs)
    jax.block_until_ready((tags, prob_stop, words))

    assert tags.shape == (BATCH, N_TAGS)
    assert prob_stop.shape == (BATCH, N_SENT, 2)
    assert words.shape == (BATCH, N_SENT, N_WORDS - 1, VOCAB)
    print("KERNEL_OK")
</pallas_src>

<mosaic_0001>
module attributes {stable_mosaic.version = 11 : i64} {
  func.func @_uc5_fused_kernel(%arg0: memref<512x128xbf16, #tpu.memory_space<vmem>>, %arg1: memref<96x32xbf16, #tpu.memory_space<vmem>>, %arg2: memref<8x512xbf16, #tpu.memory_space<vmem>>, %arg3: memref<128x128xbf16, #tpu.memory_space<vmem>>, %arg4: memref<416x32xbf16, #tpu.memory_space<vmem>>, %arg5: memref<128x128xbf16, #tpu.memory_space<vmem>>, %arg6: memref<128x128xbf16, #tpu.memory_space<vmem>>, %arg7: memref<16x32xf32, #tpu.memory_space<vmem>>, %arg8: memref<16x128xf32, #tpu.memory_space<vmem>>, %arg9: memref<8x16xf32, #tpu.memory_space<vmem>>, %arg10: memref<24x2xf32, #tpu.memory_space<vmem>>, %arg11: memref<24x128xf32, #tpu.memory_space<vmem>>) attributes {dimension_semantics = [], scalar_prefetch = 0 : i64, scratch_operands = 0 : i64, tpu.core_type = #tpu.core_type<tc>} {
    %c0 = arith.constant 0 : index
    %c0_0 = arith.constant 0 : index
    %0 = vector.load %arg0[%c0, %c0_0] : memref<512x128xbf16, #tpu.memory_space<vmem>>, vector<512x128xbf16>
    %c0_1 = arith.constant 0 : index
    %c0_2 = arith.constant 0 : index
    %1 = vector.load %arg3[%c0_1, %c0_2] : memref<128x128xbf16, #tpu.memory_space<vmem>>, vector<128x128xbf16>
    %cst = arith.constant dense<0.000000e+00> : vector<512x128xf32>
    %2 = tpu.matmul %0, %1, %cst {dimension_numbers = #tpu.dot_dimension_numbers<[1], [0], [0], [1], [0, 0, 1, 1], [], []>} : vector<512x128xbf16>, vector<128x128xbf16>, vector<512x128xf32> -> vector<512x128xf32>
    %c0_3 = arith.constant 0 : index
    %c0_4 = arith.constant 0 : index
    %3 = vector.load %arg8[%c0_3, %c0_4] : memref<16x128xf32, #tpu.memory_space<vmem>>, vector<1x128xf32>
    %4 = vector.broadcast %3 : vector<1x128xf32> to vector<512x128xf32>
    %5 = arith.addf %2, %4 : vector<512x128xf32>
    %cst_5 = arith.constant 0.000000e+00 : f32
    %6 = vector.broadcast %cst_5 : f32 to vector<512x128xf32>
    %7 = arith.maximumf %5, %6 : vector<512x128xf32>
    %c0_6 = arith.constant 0 : index
    %c0_7 = arith.constant 0 : index
    %8 = vector.load %arg2[%c0_6, %c0_7] : memref<8x512xbf16, #tpu.memory_space<vmem>>, vector<8x512xbf16>
    %9 = arith.truncf %7 : vector<512x128xf32> to vector<512x128xbf16>
    %cst_8 = arith.constant dense<0.000000e+00> : vector<8x128xf32>
    %10 = tpu.matmul %8, %9, %cst_8 {dimension_numbers = #tpu.dot_dimension_numbers<[1], [0], [0], [1], [0, 0, 1, 1], [], []>} : vector<8x512xbf16>, vector<512x128xbf16>, vector<8x128xf32> -> vector<8x128xf32>
    %11 = vector.extract_strided_slice %10 {offsets = [0, 0], sizes = [8, 32], strides = [1, 1]} : vector<8x128xf32> to vector<8x32xf32>
    %12 = vector.extract_strided_slice %10 {offsets = [0, 32], sizes = [8, 32], strides = [1, 1]} : vector<8x128xf32> to vector<8x32xf32>
    %13 = arith.addf %11, %12 : vector<8x32xf32>
    %14 = vector.extract_strided_slice %10 {offsets = [0, 64], sizes = [8, 32], strides = [1, 1]} : vector<8x128xf32> to vector<8x32xf32>
    %15 = arith.addf %13, %14 : vector<8x32xf32>
    %16 = vector.extract_strided_slice %10 {offsets = [0, 96], sizes = [8, 32], strides = [1, 1]} : vector<8x128xf32> to vector<8x32xf32>
    %17 = arith.addf %15, %16 : vector<8x32xf32>
    %c352 = arith.constant 352 : index
    %c0_9 = arith.constant 0 : index
    %18 = vector.load %arg4[%c352, %c0_9] : memref<416x32xbf16, #tpu.memory_space<vmem>>, vector<32x32xbf16>
    %19 = arith.truncf %17 : vector<8x32xf32> to vector<8x32xbf16>
    %cst_10 = arith.constant dense<0.000000e+00> : vector<8x32xf32>
    %20 = tpu.matmul %19, %18, %cst_10 {dimension_numbers = #tpu.dot_dimension_numbers<[1], [0], [0], [1], [0, 0, 1, 1], [], []>} : vector<8x32xbf16>, vector<32x32xbf16>, vector<8x32xf32> -> vector<8x32xf32>
    %21 = vector.extract_strided_slice %20 {offsets = [0, 0], sizes = [8, 16], strides = [1, 1]} : vector<8x32xf32> to vector<8x16xf32>
    %c4 = arith.constant 4 : index
    %c0_11 = arith.constant 0 : index
    %22 = vector.load %arg8[%c4, %c0_11] : memref<16x128xf32, #tpu.memory_space<vmem>>, vector<1x16xf32>
    %23 = vector.broadcast %22 : vector<1x16xf32> to vector<8x16xf32>
    %24 = arith.addf %21, %23 : vector<8x16xf32>
    %cst_12 = arith.constant dense<0xFF800000> : vector<8xf32>
    %25 = vector.multi_reduction <maximumf>, %24, %cst_12 [1] : vector<8x16xf32> to vector<8xf32>
    %26 = vector.shape_cast %25 : vector<8xf32> to vector<8x1xf32>
    %27 = vector.broadcast %26 : vector<8x1xf32> to vector<8x16xf32>
    %28 = arith.subf %24, %27 : vector<8x16xf32>
    %29 = math.exp %28 : vector<8x16xf32>
    %cst_13 = arith.constant dense<0.000000e+00> : vector<8xf32>
    %30 = vector.multi_reduction <add>, %29, %cst_13 [1] : vector<8x16xf32> to vector<8xf32>
    %31 = vector.shape_cast %30 : vector<8xf32> to vector<8x1xf32>
    %32 = tpu.reciprocal %31 {approx = true} : vector<8x1xf32> -> vector<8x1xf32>
    %33 = vector.broadcast %32 : vector<8x1xf32> to vector<8x16xf32>
    %34 = arith.mulf %29, %33 : vector<8x16xf32>
    %c0_14 = arith.constant 0 : index
    %c0_15 = arith.constant 0 : index
    %35 = vector.load %arg9[%c0_14, %c0_15] : memref<8x16xf32, #tpu.memory_space<vmem>>, vector<8x16xf32>
    tpu.vector_store %arg9[%c0_14, %c0_15], %34 {strides = array<i32>} : memref<8x16xf32, #tpu.memory_space<vmem>>, vector<8x16xf32>,
    %36 = tpu.iota {dimensions = array<i32: 1>} : vector<8x16xi32>
    %37 = arith.sitofp %36 : vector<8x16xi32> to vector<8x16xf32>
    %cst_16 = arith.constant dense<0xFF800000> : vector<8xf32>
    %38 = vector.multi_reduction <maximumf>, %34, %cst_16 [1] : vector<8x16xf32> to vector<8xf32>
    %39 = vector.shape_cast %38 : vector<8xf32> to vector<8x1xf32>
    %40 = vector.broadcast %39 : vector<8x1xf32> to vector<8x16xf32>
    %41 = arith.cmpf oge, %34, %40 : vector<8x16xf32>
    %cst_17 = arith.constant 1.600000e+01 : f32
    %42 = vector.broadcast %cst_17 : f32 to vector<8x16xf32>
    %43 = arith.select %41, %37, %42 : vector<8x16xi1>, vector<8x16xf32>
    %cst_18 = arith.constant dense<0x7F800000> : vector<8xf32>
    %44 = vector.multi_reduction <minimumf>, %43, %cst_18 [1] : vector<8x16xf32> to vector<8xf32>
    %45 = vector.shape_cast %44 : vector<8xf32> to vector<8x1xf32>
    %46 = vector.broadcast %45 : vector<8x1xf32> to vector<8x16xf32>
    %47 = arith.cmpf oeq, %37, %46 : vector<8x16xf32>
    %48 = arith.extui %47 : vector<8x16xi1> to vector<8x16xi32>
    %49 = arith.sitofp %48 : vector<8x16xi32> to vector<8x16xf32>
    %cst_19 = arith.constant 1.000000e+09 : f32
    %50 = vector.broadcast %cst_19 : f32 to vector<8x16xf32>
    %51 = arith.mulf %49, %50 : vector<8x16xf32>
    %52 = arith.subf %34, %51 : vector<8x16xf32>
    %cst_20 = arith.constant dense<0xFF800000> : vector<8xf32>
    %53 = vector.multi_reduction <maximumf>, %52, %cst_20 [1] : vector<8x16xf32> to vector<8xf32>
    %54 = vector.shape_cast %53 : vector<8xf32> to vector<8x1xf32>
    %55 = vector.broadcast %54 : vector<8x1xf32> to vector<8x16xf32>
    %56 = arith.cmpf oge, %52, %55 : vector<8x16xf32>
    %cst_21 = arith.constant 1.600000e+01 : f32
    %57 = vector.broadcast %cst_21 : f32 to vector<8x16xf32>
    %58 = arith.select %56, %37, %57 : vector<8x16xi1>, vector<8x16xf32>
    %cst_22 = arith.constant dense<0x7F800000> : vector<8xf32>
    %59 = vector.multi_reduction <minimumf>, %58, %cst_22 [1] : vector<8x16xf32> to vector<8xf32>
    %60 = vector.shape_cast %59 : vector<8xf32> to vector<8x1xf32>
    %61 = vector.broadcast %60 : vector<8x1xf32> to vector<8x16xf32>
    %62 = arith.cmpf oeq, %37, %61 : vector<8x16xf32>
    %63 = arith.extui %62 : vector<8x16xi1> to vector<8x16xi32>
    %64 = arith.sitofp %63 : vector<8x16xi32> to vector<8x16xf32>
    %cst_23 = arith.constant 1.000000e+09 : f32
    %65 = vector.broadcast %cst_23 : f32 to vector<8x16xf32>
    %66 = arith.mulf %64, %65 : vector<8x16xf32>
    %67 = arith.subf %52, %66 : vector<8x16xf32>
    %cst_24 = arith.constant dense<0xFF800000> : vector<8xf32>
    %68 = vector.multi_reduction <maximumf>, %67, %cst_24 [1] : vector<8x16xf32> to vector<8xf32>
    %69 = vector.shape_cast %68 : vector<8xf32> to vector<8x1xf32>
    %70 = vector.broadcast %69 : vector<8x1xf32> to vector<8x16xf32>
    %71 = arith.cmpf oge, %67, %70 : vector<8x16xf32>
    %cst_25 = arith.constant 1.600000e+01 : f32
    %72 = vector.broadcast %cst_25 : f32 to vector<8x16xf32>
    %73 = arith.select %71, %37, %72 : vector<8x16xi1>, vector<8x16xf32>
    %cst_26 = arith.constant dense<0x7F800000> : vector<8xf32>
    %74 = vector.multi_reduction <minimumf>, %73, %cst_26 [1] : vector<8x16xf32> to vector<8xf32>
    %75 = vector.shape_cast %74 : vector<8xf32> to vector<8x1xf32>
    %76 = vector.broadcast %75 : vector<8x1xf32> to vector<8x16xf32>
    %77 = arith.cmpf oeq, %37, %76 : vector<8x16xf32>
    %78 = arith.extui %77 : vector<8x16xi1> to vector<8x16xi32>
    %79 = arith.sitofp %78 : vector<8x16xi32> to vector<8x16xf32>
    %cst_27 = arith.constant 1.000000e+09 : f32
    %80 = vector.broadcast %cst_27 : f32 to vector<8x16xf32>
    %81 = arith.mulf %79, %80 : vector<8x16xf32>
    %82 = arith.subf %67, %81 : vector<8x16xf32>
    %cst_28 = arith.constant dense<0xFF800000> : vector<8xf32>
    %83 = vector.multi_reduction <maximumf>, %82, %cst_28 [1] : vector<8x16xf32> to vector<8xf32>
    %84 = vector.shape_cast %83 : vector<8xf32> to vector<8x1xf32>
    %85 = vector.broadcast %84 : vector<8x1xf32> to vector<8x16xf32>
    %86 = arith.cmpf oge, %82, %85 : vector<8x16xf32>
    %cst_29 = arith.constant 1.600000e+01 : f32
    %87 = vector.broadcast %cst_29 : f32 to vector<8x16xf32>
    %88 = arith.select %86, %37, %87 : vector<8x16xi1>, vector<8x16xf32>
    %cst_30 = arith.constant dense<0x7F800000> : vector<8xf32>
    %89 = vector.multi_reduction <minimumf>, %88, %cst_30 [1] : vector<8x16xf32> to vector<8xf32>
    %90 = vector.shape_cast %89 : vector<8xf32> to vector<8x1xf32>
    %91 = vector.broadcast %90 : vector<8x1xf32> to vector<8x16xf32>
    %92 = arith.cmpf oeq, %37, %91 : vector<8x16xf32>
    %93 = arith.extui %92 : vector<8x16xi1> to vector<8x16xi32>
    %94 = arith.sitofp %93 : vector<8x16xi32> to vector<8x16xf32>
    %95 = tpu.concatenate %49, %64, %79, %94 in 0 : vector<8x16xf32>, vector<8x16xf32>, vector<8x16xf32>, vector<8x16xf32> -> vector<32x16xf32>
    %c0_31 = arith.constant 0 : index
    %c0_32 = arith.constant 0 : index
    %96 = vector.load %arg7[%c0_31, %c0_32] : memref<16x32xf32, #tpu.memory_space<vmem>>, vector<16x32xf32>
    %cst_33 = arith.constant dense<0.000000e+00> : vector<32x32xf32>
    %97 = tpu.matmul %95, %96, %cst_33 {dimension_numbers = #tpu.dot_dimension_numbers<[1], [0], [0], [1], [0, 0, 1, 1], [], []>} : vector<32x16xf32>, vector<16x32xf32>, vector<32x32xf32> -> vector<32x32xf32>
    %c0_34 = arith.constant 0 : index
    %c0_35 = arith.constant 0 : index
    %98 = vector.load %arg4[%c0_34, %c0_35] : memref<416x32xbf16, #tpu.memory_space<vmem>>, vector<32x32xbf16>
    %99 = arith.truncf %17 : vector<8x32xf32> to vector<8x32xbf16>
    %cst_36 = arith.constant dense<0.000000e+00> : vector<8x32xf32>
    %100 = tpu.matmul %99, %98, %cst_36 {dimension_numbers = #tpu.dot_dimension_numbers<[1], [0], [0], [1], [0, 0, 1, 1], [], []>} : vector<8x32xbf16>, vector<32x32xbf16>, vector<8x32xf32> -> vector<8x32xf32>
    %c5 = arith.constant 5 : index
    %c0_37 = arith.constant 0 : index
    %101 = vector.load %arg8[%c5, %c0_37] : memref<16x128xf32, #tpu.memory_space<vmem>>, vector<1x32xf32>
    %102 = vector.broadcast %101 : vector<1x32xf32> to vector<8x32xf32>
    %103 = arith.addf %100, %102 : vector<8x32xf32>
    %c96 = arith.constant 96 : index
    %c0_38 = arith.constant 0 : index
    %104 = vector.load %arg4[%c96, %c0_38] : memref<416x32xbf16, #tpu.memory_space<vmem>>, vector<32x32xbf16>
    %105 = arith.truncf %97 : vector<32x32xf32> to vector<32x32xbf16>
    %cst_39 = arith.constant dense<0.000000e+00> : vector<32x32xf32>
    %106 = tpu.matmul %105, %104, %cst_39 {dimension_numbers = #tpu.dot_dimension_numbers<[1], [0], [0], [1], [0, 0, 1, 1], [], []>} : vector<32x32xbf16>, vector<32x32xbf16>, vector<32x32xf32> -> vector<32x32xf32>
    %c7 = arith.constant 7 : index
    %c0_40 = arith.constant 0 : index
    %107 = vector.load %arg8[%c7, %c0_40] : memref<16x128xf32, #tpu.memory_space<vmem>>, vector<1x32xf32>
    %108 = vector.broadcast %107 : vector<1x32xf32> to vector<32x32xf32>
    %109 = arith.addf %106, %108 : vector<32x32xf32>
    %c13 = arith.constant 13 : index
    %c0_41 = arith.constant 0 : index
    %110 = vector.load %arg8[%c13, %c0_41] : memref<16x128xf32, #tpu.memory_space<vmem>>, vector<1x32xf32>
    %c14 = arith.constant 14 : index
    %c0_42 = arith.constant 0 : index
    %111 = vector.load %arg8[%c14, %c0_42] : memref<16x128xf32, #tpu.memory_space<vmem>>, vector<1x1xf32>
    %cst_43 = arith.constant 0.000000e+00 : f32
    %112 = vector.broadcast %cst_43 : f32 to vector<8x32xf32>
    %cst_44 = arith.constant 0.000000e+00 : f32
    %113 = vector.broadcast %cst_44 : f32 to vector<8x32xf32>
    %114 = arith.truncf %112 : vector<8x32xf32> to vector<8x32xbf16>
    %c32 = arith.constant 32 : index
    %c0_45 = arith.constant 0 : index
    %115 = vector.load %arg4[%c32, %c0_45] : memref<416x32xbf16, #tpu.memory_space<vmem>>, vector<32x32xbf16>
    %cst_46 = arith.constant dense<0.000000e+00> : vector<8x32xf32>
    %116 = tpu.matmul %114, %115, %cst_46 {dimension_numbers = #tpu.dot_dimension_numbers<[1], [0], [0], [1], [0, 0, 1, 1], [], []>} : vector<8x32xbf16>, vector<32x32xbf16>, vector<8x32xf32> -> vector<8x32xf32>
    %117 = arith.addf %103, %116 : vector<8x32xf32>
    %118 = math.tanh %117 : vector<8x32xf32>
    %c64 = arith.constant 64 : index
    %c0_47 = arith.constant 0 : index
    %119 = vector.load %arg4[%c64, %c0_47] : memref<416x32xbf16, #tpu.memory_space<vmem>>, vector<32x32xbf16>
    %120 = arith.truncf %118 : vector<8x32xf32> to vector<8x32xbf16>
    %cst_48 = arith.constant dense<0.000000e+00> : vector<8x32xf32>
    %121 = tpu.matmul %120, %119, %cst_48 {dimension_numbers = #tpu.dot_dimension_numbers<[1], [0], [0], [1], [0, 0, 1, 1], [], []>} : vector<8x32xbf16>, vector<32x32xbf16>, vector<8x32xf32> -> vector<8x32xf32>
    %c6 = arith.constant 6 : index
    %c0_49 = arith.constant 0 : index
    %122 = vector.load %arg8[%c6, %c0_49] : memref<16x128xf32, #tpu.memory_space<vmem>>, vector<1x32xf32>
    %123 = vector.broadcast %122 : vector<1x32xf32> to vector<8x32xf32>
    %124 = arith.addf %121, %123 : vector<8x32xf32>
    %cst_50 = arith.constant dense<0xFF800000> : vector<8xf32>
    %125 = vector.multi_reduction <maximumf>, %124, %cst_50 [1] : vector<8x32xf32> to vector<8xf32>
    %126 = vector.shape_cast %125 : vector<8xf32> to vector<8x1xf32>
    %127 = vector.broadcast %126 : vector<8x1xf32> to vector<8x32xf32>
    %128 = arith.subf %124, %127 : vector<8x32xf32>
    %129 = math.exp %128 : vector<8x32xf32>
    %cst_51 = arith.constant dense<0.000000e+00> : vector<8xf32>
    %130 = vector.multi_reduction <add>, %129, %cst_51 [1] : vector<8x32xf32> to vector<8xf32>
    %131 = vector.shape_cast %130 : vector<8xf32> to vector<8x1xf32>
    %132 = tpu.reciprocal %131 {approx = true} : vector<8x1xf32> -> vector<8x1xf32>
    %133 = vector.broadcast %132 : vector<8x1xf32> to vector<8x32xf32>
    %134 = arith.mulf %129, %133 : vector<8x32xf32>
    %135 = arith.mulf %134, %17 : vector<8x32xf32>
    %c128 = arith.constant 128 : index
    %c0_52 = arith.constant 0 : index
    %136 = vector.load %arg4[%c128, %c0_52] : memref<416x32xbf16, #tpu.memory_space<vmem>>, vector<32x32xbf16>
    %cst_53 = arith.constant dense<0.000000e+00> : vector<8x32xf32>
    %137 = tpu.matmul %114, %136, %cst_53 {dimension_numbers = #tpu.dot_dimension_numbers<[1], [0], [0], [1], [0, 0, 1, 1], [], []>} : vector<8x32xbf16>, vector<32x32xbf16>, vector<8x32xf32> -> vector<8x32xf32>
    %c8 = arith.constant 8 : index
    %c0_54 = arith.constant 0 : index
    %138 = vector.load %arg8[%c8, %c0_54] : memref<16x128xf32, #tpu.memory_space<vmem>>, vector<1x32xf32>
    %139 = vector.broadcast %138 : vector<1x32xf32> to vector<8x32xf32>
    %140 = arith.addf %137, %139 : vector<8x32xf32>
    %141 = vector.extract_strided_slice %109 {offsets = [0, 0], sizes = [8, 32], strides = [1, 1]} : vector<32x32xf32> to vector<8x32xf32>
    %142 = arith.addf %141, %140 : vector<8x32xf32>
    %143 = math.tanh %142 : vector<8x32xf32>
    %144 = vector.broadcast %110 : vector<1x32xf32> to vector<8x32xf32>
    %145 = arith.mulf %143, %144 : vector<8x32xf32>
    %cst_55 = arith.constant dense<0.000000e+00> : vector<8xf32>
    %146 = vector.multi_reduction <add>, %145, %cst_55 [1] : vector<8x32xf32> to vector<8xf32>
    %147 = vector.shape_cast %146 : vector<8xf32> to vector<8x1xf32>
    %148 = vector.broadcast %111 : vector<1x1xf32> to vector<8x1xf32>
    %149 = arith.addf %147, %148 : vector<8x1xf32>
    %150 = vector.extract_strided_slice %109 {offsets = [8, 0], sizes = [8, 32], strides = [1, 1]} : vector<32x32xf32> to vector<8x32xf32>
    %151 = arith.addf %150, %140 : vector<8x32xf32>
    %152 = math.tanh %151 : vector<8x32xf32>
    %153 = vector.broadcast %110 : vector<1x32xf32> to vector<8x32xf32>
    %154 = arith.mulf %152, %153 : vector<8x32xf32>
    %cst_56 = arith.constant dense<0.000000e+00> : vector<8xf32>
    %155 = vector.multi_reduction <add>, %154, %cst_56 [1] : vector<8x32xf32> to vector<8xf32>
    %156 = vector.shape_cast %155 : vector<8xf32> to vector<8x1xf32>
    %157 = vector.broadcast %111 : vector<1x1xf32> to vector<8x1xf32>
    %158 = arith.addf %156, %157 : vector<8x1xf32>
    %159 = vector.extract_strided_slice %109 {offsets = [16, 0], sizes = [8, 32], strides = [1, 1]} : vector<32x32xf32> to vector<8x32xf32>
    %160 = arith.addf %159, %140 : vector<8x32xf32>
    %161 = math.tanh %160 : vector<8x32xf32>
    %162 = vector.broadcast %110 : vector<1x32xf32> to vector<8x32xf32>
    %163 = arith.mulf %161, %162 : vector<8x32xf32>
    %cst_57 = arith.constant dense<0.000000e+00> : vector<8xf32>
    %164 = vector.multi_reduction <add>, %163, %cst_57 [1] : vector<8x32xf32> to vector<8xf32>
    %165 = vector.shape_cast %164 : vector<8xf32> to vector<8x1xf32>
    %166 = vector.broadcast %111 : vector<1x1xf32> to vector<8x1xf32>
    %167 = arith.addf %165, %166 : vector<8x1xf32>
    %168 = vector.extract_strided_slice %109 {offsets = [24, 0], sizes = [8, 32], strides = [1, 1]} : vector<32x32xf32> to vector<8x32xf32>
    %169 = arith.addf %168, %140 : vector<8x32xf32>
    %170 = math.tanh %169 : vector<8x32xf32>
    %171 = vector.broadcast %110 : vector<1x32xf32> to vector<8x32xf32>
    %172 = arith.mulf %170, %171 : vector<8x32xf32>
    %cst_58 = arith.constant dense<0.000000e+00> : vector<8xf32>
    %173 = vector.multi_reduction <add>, %172, %cst_58 [1] : vector<8x32xf32> to vector<8xf32>
    %174 = vector.shape_cast %173 : vector<8xf32> to vector<8x1xf32>
    %175 = vector.broadcast %111 : vector<1x1xf32> to vector<8x1xf32>
    %176 = arith.addf %174, %175 : vector<8x1xf32>
    %177 = arith.maximumf %149, %158 : vector<8x1xf32>
    %178 = arith.maximumf %177, %167 : vector<8x1xf32>
    %179 = arith.maximumf %178, %176 : vector<8x1xf32>
    %180 = arith.subf %149, %179 : vector<8x1xf32>
    %181 = math.exp %180 : vector<8x1xf32>
    %182 = arith.subf %158, %179 : vector<8x1xf32>
    %183 = math.exp %182 : vector<8x1xf32>
    %184 = arith.subf %167, %179 : vector<8x1xf32>
    %185 = math.exp %184 : vector<8x1xf32>
    %186 = arith.subf %176, %179 : vector<8x1xf32>
    %187 = math.exp %186 : vector<8x1xf32>
    %188 = arith.addf %181, %183 : vector<8x1xf32>
    %189 = arith.addf %188, %185 : vector<8x1xf32>
    %190 = arith.addf %189, %187 : vector<8x1xf32>
    %191 = tpu.reciprocal %190 {approx = true} : vector<8x1xf32> -> vector<8x1xf32>
    %192 = arith.mulf %181, %191 : vector<8x1xf32>
    %193 = vector.extract_strided_slice %97 {offsets = [0, 0], sizes = [8, 32], strides = [1, 1]} : vector<32x32xf32> to vector<8x32xf32>
    %194 = vector.broadcast %192 : vector<8x1xf32> to vector<8x32xf32>
    %195 = arith.mulf %194, %193 : vector<8x32xf32>
    %196 = arith.mulf %183, %191 : vector<8x1xf32>
    %197 = vector.extract_strided_slice %97 {offsets = [8, 0], sizes = [8, 32], strides = [1, 1]} : vector<32x32xf32> to vector<8x32xf32>
    %198 = vector.broadcast %196 : vector<8x1xf32> to vector<8x32xf32>
    %199 = arith.mulf %198, %197 : vector<8x32xf32>
    %200 = arith.addf %195, %199 : vector<8x32xf32>
    %201 = arith.mulf %185, %191 : vector<8x1xf32>
    %202 = vector.extract_strided_slice %97 {offsets = [16, 0], sizes = [8, 32], strides = [1, 1]} : vector<32x32xf32> to vector<8x32xf32>
    %203 = vector.broadcast %201 : vector<8x1xf32> to vector<8x32xf32>
    %204 = arith.mulf %203, %202 : vector<8x32xf32>
    %205 = arith.addf %200, %204 : vector<8x32xf32>
    %206 = arith.mulf %187, %191 : vector<8x1xf32>
    %207 = vector.extract_strided_slice %97 {offsets = [24, 0], sizes = [8, 32], strides = [1, 1]} : vector<32x32xf32> to vector<8x32xf32>
    %208 = vector.broadcast %206 : vector<8x1xf32> to vector<8x32xf32>
    %209 = arith.mulf %208, %207 : vector<8x32xf32>
    %210 = arith.addf %205, %209 : vector<8x32xf32>
    %c160 = arith.constant 160 : index
    %c0_59 = arith.constant 0 : index
    %211 = vector.load %arg4[%c160, %c0_59] : memref<416x32xbf16, #tpu.memory_space<vmem>>, vector<32x32xbf16>
    %212 = arith.truncf %135 : vector<8x32xf32> to vector<8x32xbf16>
    %cst_60 = arith.constant dense<0.000000e+00> : vector<8x32xf32>
    %213 = tpu.matmul %212, %211, %cst_60 {dimension_numbers = #tpu.dot_dimension_numbers<[1], [0], [0], [1], [0, 0, 1, 1], [], []>} : vector<8x32xbf16>, vector<32x32xbf16>, vector<8x32xf32> -> vector<8x32xf32>
    %c192 = arith.constant 192 : index
    %c0_61 = arith.constant 0 : index
    %214 = vector.load %arg4[%c192, %c0_61] : memref<416x32xbf16, #tpu.memory_space<vmem>>, vector<32x32xbf16>
    %215 = arith.truncf %210 : vector<8x32xf32> to vector<8x32xbf16>
    %cst_62 = arith.constant dense<0.000000e+00> : vector<8x32xf32>
    %216 = tpu.matmul %215, %214, %cst_62 {dimension_numbers = #tpu.dot_dimension_numbers<[1], [0], [0], [1], [0, 0, 1, 1], [], []>} : vector<8x32xbf16>, vector<32x32xbf16>, vector<8x32xf32> -> vector<8x32xf32>
    %217 = arith.addf %213, %216 : vector<8x32xf32>
    %c9 = arith.constant 9 : index
    %c0_63 = arith.constant 0 : index
    %218 = vector.load %arg8[%c9, %c0_63] : memref<16x128xf32, #tpu.memory_space<vmem>>, vector<1x32xf32>
    %219 = vector.broadcast %218 : vector<1x32xf32> to vector<8x32xf32>
    %220 = arith.addf %217, %219 : vector<8x32xf32>
    %c0_64 = arith.constant 0 : index
    %c0_65 = arith.constant 0 : index
    %221 = vector.load %arg5[%c0_64, %c0_65] : memref<128x128xbf16, #tpu.memory_space<vmem>>, vector<32x128xbf16>
    %222 = arith.truncf %220 : vector<8x32xf32> to vector<8x32xbf16>
    %cst_66 = arith.constant dense<0.000000e+00> : vector<8x128xf32>
    %223 = tpu.matmul %222, %221, %cst_66 {dimension_numbers = #tpu.dot_dimension_numbers<[1], [0], [0], [1], [0, 0, 1, 1], [], []>} : vector<8x32xbf16>, vector<32x128xbf16>, vector<8x128xf32> -> vector<8x128xf32>
    %c32_67 = arith.constant 32 : index
    %c0_68 = arith.constant 0 : index
    %224 = vector.load %arg5[%c32_67, %c0_68] : memref<128x128xbf16, #tpu.memory_space<vmem>>, vector<32x128xbf16>
    %cst_69 = arith.constant dense<0.000000e+00> : vector<8x128xf32>
    %225 = tpu.matmul %114, %224, %cst_69 {dimension_numbers = #tpu.dot_dimension_numbers<[1], [0], [0], [1], [0, 0, 1, 1], [], []>} : vector<8x32xbf16>, vector<32x128xbf16>, vector<8x128xf32> -> vector<8x128xf32>
    %226 = arith.addf %223, %225 : vector<8x128xf32>
    %c1 = arith.constant 1 : index
    %c0_70 = arith.constant 0 : index
    %227 = vector.load %arg8[%c1, %c0_70] : memref<16x128xf32, #tpu.memory_space<vmem>>, vector<1x128xf32>
    %228 = vector.broadcast %227 : vector<1x128xf32> to vector<8x128xf32>
    %229 = arith.addf %226, %228 : vector<8x128xf32>
    %230 = vector.extract_strided_slice %229 {offsets = [0, 0], sizes = [8, 32], strides = [1, 1]} : vector<8x128xf32> to vector<8x32xf32>
    %231 = arith.negf %230 : vector<8x32xf32>
    %232 = math.exp %231 : vector<8x32xf32>
    %cst_71 = arith.constant 1.000000e+00 : f32
    %233 = vector.broadcast %cst_71 : f32 to vector<8x32xf32>
    %234 = arith.addf %233, %232 : vector<8x32xf32>
    %235 = arith.divf %233, %234 : vector<8x32xf32>
    %236 = vector.extract_strided_slice %229 {offsets = [0, 32], sizes = [8, 32], strides = [1, 1]} : vector<8x128xf32> to vector<8x32xf32>
    %237 = arith.negf %236 : vector<8x32xf32>
    %238 = math.exp %237 : vector<8x32xf32>
    %cst_72 = arith.constant 1.000000e+00 : f32
    %239 = vector.broadcast %cst_72 : f32 to vector<8x32xf32>
    %240 = arith.addf %239, %238 : vector<8x32xf32>
    %241 = arith.divf %239, %240 : vector<8x32xf32>
    %242 = vector.extract_strided_slice %229 {offsets = [0, 64], sizes = [8, 32], strides = [1, 1]} : vector<8x128xf32> to vector<8x32xf32>
    %243 = math.tanh %242 : vector<8x32xf32>
    %244 = vector.extract_strided_slice %229 {offsets = [0, 96], sizes = [8, 32], strides = [1, 1]} : vector<8x128xf32> to vector<8x32xf32>
    %245 = arith.negf %244 : vector<8x32xf32>
    %246 = math.exp %245 : vector<8x32xf32>
    %cst_73 = arith.constant 1.000000e+00 : f32
    %247 = vector.broadcast %cst_73 : f32 to vector<8x32xf32>
    %248 = arith.addf %247, %246 : vector<8x32xf32>
    %249 = arith.divf %247, %248 : vector<8x32xf32>
    %250 = arith.mulf %241, %113 : vector<8x32xf32>
    %251 = arith.mulf %235, %243 : vector<8x32xf32>
    %252 = arith.addf %250, %251 : vector<8x32xf32>
    %253 = math.tanh %252 : vector<8x32xf32>
    %254 = arith.mulf %249, %253 : vector<8x32xf32>
    %255 = arith.truncf %254 : vector<8x32xf32> to vector<8x32xbf16>
    %c32_74 = arith.constant 32 : index
    %c0_75 = arith.constant 0 : index
    %256 = vector.load %arg4[%c32_74, %c0_75] : memref<416x32xbf16, #tpu.memory_space<vmem>>, vector<32x32xbf16>
    %cst_76 = arith.constant dense<0.000000e+00> : vector<8x32xf32>
    %257 = tpu.matmul %255, %256, %cst_76 {dimension_numbers = #tpu.dot_dimension_numbers<[1], [0], [0], [1], [0, 0, 1, 1], [], []>} : vector<8x32xbf16>, vector<32x32xbf16>, vector<8x32xf32> -> vector<8x32xf32>
    %258 = arith.addf %103, %257 : vector<8x32xf32>
    %259 = math.tanh %258 : vector<8x32xf32>
    %c64_77 = arith.constant 64 : index
    %c0_78 = arith.constant 0 : index
    %260 = vector.load %arg4[%c64_77, %c0_78] : memref<416x32xbf16, #tpu.memory_space<vmem>>, vector<32x32xbf16>
    %261 = arith.truncf %259 : vector<8x32xf32> to vector<8x32xbf16>
    %cst_79 = arith.constant dense<0.000000e+00> : vector<8x32xf32>
    %262 = tpu.matmul %261, %260, %cst_79 {dimension_numbers = #tpu.dot_dimension_numbers<[1], [0], [0], [1], [0, 0, 1, 1], [], []>} : vector<8x32xbf16>, vector<32x32xbf16>, vector<8x32xf32> -> vector<8x32xf32>
    %c6_80 = arith.constant 6 : index
    %c0_81 = arith.constant 0 : index
    %263 = vector.load %arg8[%c6_80, %c0_81] : memref<16x128xf32, #tpu.memory_space<vmem>>, vector<1x32xf32>
    %264 = vector.broadcast %263 : vector<1x32xf32> to vector<8x32xf32>
    %265 = arith.addf %262, %264 : vector<8x32xf32>
    %cst_82 = arith.constant dense<0xFF800000> : vector<8xf32>
    %266 = vector.multi_reduction <maximumf>, %265, %cst_82 [1] : vector<8x32xf32> to vector<8xf32>
    %267 = vector.shape_cast %266 : vector<8xf32> to vector<8x1xf32>
    %268 = vector.broadcast %267 : vector<8x1xf32> to vector<8x32xf32>
    %269 = arith.subf %265, %268 : vector<8x32xf32>
    %270 = math.exp %269 : vector<8x32xf32>
    %cst_83 = arith.constant dense<0.000000e+00> : vector<8xf32>
    %271 = vector.multi_reduction <add>, %270, %cst_83 [1] : vector<8x32xf32> to vector<8xf32>
    %272 = vector.shape_cast %271 : vector<8xf32> to vector<8x1xf32>
    %273 = tpu.reciprocal %272 {approx = true} : vector<8x1xf32> -> vector<8x1xf32>
    %274 = vector.broadcast %273 : vector<8x1xf32> to vector<8x32xf32>
    %275 = arith.mulf %270, %274 : vector<8x32xf32>
    %276 = arith.mulf %275, %17 : vector<8x32xf32>
    %c128_84 = arith.constant 128 : index
    %c0_85 = arith.constant 0 : index
    %277 = vector.load %arg4[%c128_84, %c0_85] : memref<416x32xbf16, #tpu.memory_space<vmem>>, vector<32x32xbf16>
    %cst_86 = arith.constant dense<0.000000e+00> : vector<8x32xf32>
    %278 = tpu.matmul %255, %277, %cst_86 {dimension_numbers = #tpu.dot_dimension_numbers<[1], [0], [0], [1], [0, 0, 1, 1], [], []>} : vector<8x32xbf16>, vector<32x32xbf16>, vector<8x32xf32> -> vector<8x32xf32>
    %c8_87 = arith.constant 8 : index
    %c0_88 = arith.constant 0 : index
    %279 = vector.load %arg8[%c8_87, %c0_88] : memref<16x128xf32, #tpu.memory_space<vmem>>, vector<1x32xf32>
    %280 = vector.broadcast %279 : vector<1x32xf32> to vector<8x32xf32>
    %281 = arith.addf %278, %280 : vector<8x32xf32>
    %282 = vector.extract_strided_slice %109 {offsets = [0, 0], sizes = [8, 32], strides = [1, 1]} : vector<32x32xf32> to vector<8x32xf32>
    %283 = arith.addf %282, %281 : vector<8x32xf32>
    %284 = math.tanh %283 : vector<8x32xf32>
    %285 = vector.broadcast %110 : vector<1x32xf32> to vector<8x32xf32>
    %286 = arith.mulf %284, %285 : vector<8x32xf32>
    %cst_89 = arith.constant dense<0.000000e+00> : vector<8xf32>
    %287 = vector.multi_reduction <add>, %286, %cst_89 [1] : vector<8x32xf32> to vector<8xf32>
    %288 = vector.shape_cast %287 : vector<8xf32> to vector<8x1xf32>
    %289 = vector.broadcast %111 : vector<1x1xf32> to vector<8x1xf32>
    %290 = arith.addf %288, %289 : vector<8x1xf32>
    %291 = vector.extract_strided_slice %109 {offsets = [8, 0], sizes = [8, 32], strides = [1, 1]} : vector<32x32xf32> to vector<8x32xf32>
    %292 = arith.addf %291, %281 : vector<8x32xf32>
    %293 = math.tanh %292 : vector<8x32xf32>
    %294 = vector.broadcast %110 : vector<1x32xf32> to vector<8x32xf32>
    %295 = arith.mulf %293, %294 : vector<8x32xf32>
    %cst_90 = arith.constant dense<0.000000e+00> : vector<8xf32>
    %296 = vector.multi_reduction <add>, %295, %cst_90 [1] : vector<8x32xf32> to vector<8xf32>
    %297 = vector.shape_cast %296 : vector<8xf32> to vector<8x1xf32>
    %298 = vector.broadcast %111 : vector<1x1xf32> to vector<8x1xf32>
    %299 = arith.addf %297, %298 : vector<8x1xf32>
    %300 = vector.extract_strided_slice %109 {offsets = [16, 0], sizes = [8, 32], strides = [1, 1]} : vector<32x32xf32> to vector<8x32xf32>
    %301 = arith.addf %300, %281 : vector<8x32xf32>
    %302 = math.tanh %301 : vector<8x32xf32>
    %303 = vector.broadcast %110 : vector<1x32xf32> to vector<8x32xf32>
    %304 = arith.mulf %302, %303 : vector<8x32xf32>
    %cst_91 = arith.constant dense<0.000000e+00> : vector<8xf32>
    %305 = vector.multi_reduction <add>, %304, %cst_91 [1] : vector<8x32xf32> to vector<8xf32>
    %306 = vector.shape_cast %305 : vector<8xf32> to vector<8x1xf32>
    %307 = vector.broadcast %111 : vector<1x1xf32> to vector<8x1xf32>
    %308 = arith.addf %306, %307 : vector<8x1xf32>
    %309 = vector.extract_strided_slice %109 {offsets = [24, 0], sizes = [8, 32], strides = [1, 1]} : vector<32x32xf32> to vector<8x32xf32>
    %310 = arith.addf %309, %281 : vector<8x32xf32>
    %311 = math.tanh %310 : vector<8x32xf32>
    %312 = vector.broadcast %110 : vector<1x32xf32> to vector<8x32xf32>
    %313 = arith.mulf %311, %312 : vector<8x32xf32>
    %cst_92 = arith.constant dense<0.000000e+00> : vector<8xf32>
    %314 = vector.multi_reduction <add>, %313, %cst_92 [1] : vector<8x32xf32> to vector<8xf32>
    %315 = vector.shape_cast %314 : vector<8xf32> to vector<8x1xf32>
    %316 = vector.broadcast %111 : vector<1x1xf32> to vector<8x1xf32>
    %317 = arith.addf %315, %316 : vector<8x1xf32>
    %318 = arith.maximumf %290, %299 : vector<8x1xf32>
    %319 = arith.maximumf %318, %308 : vector<8x1xf32>
    %320 = arith.maximumf %319, %317 : vector<8x1xf32>
    %321 = arith.subf %290, %320 : vector<8x1xf32>
    %322 = math.exp %321 : vector<8x1xf32>
    %323 = arith.subf %299, %320 : vector<8x1xf32>
    %324 = math.exp %323 : vector<8x1xf32>
    %325 = arith.subf %308, %320 : vector<8x1xf32>
    %326 = math.exp %325 : vector<8x1xf32>
    %327 = arith.subf %317, %320 : vector<8x1xf32>
    %328 = math.exp %327 : vector<8x1xf32>
    %329 = arith.addf %322, %324 : vector<8x1xf32>
    %330 = arith.addf %329, %326 : vector<8x1xf32>
    %331 = arith.addf %330, %328 : vector<8x1xf32>
    %332 = tpu.reciprocal %331 {approx = true} : vector<8x1xf32> -> vector<8x1xf32>
    %333 = arith.mulf %322, %332 : vector<8x1xf32>
    %334 = vector.extract_strided_slice %97 {offsets = [0, 0], sizes = [8, 32], strides = [1, 1]} : vector<32x32xf32> to vector<8x32xf32>
    %335 = vector.broadcast %333 : vector<8x1xf32> to vector<8x32xf32>
    %336 = arith.mulf %335, %334 : vector<8x32xf32>
    %337 = arith.mulf %324, %332 : vector<8x1xf32>
    %338 = vector.extract_strided_slice %97 {offsets = [8, 0], sizes = [8, 32], strides = [1, 1]} : vector<32x32xf32> to vector<8x32xf32>
    %339 = vector.broadcast %337 : vector<8x1xf32> to vector<8x32xf32>
    %340 = arith.mulf %339, %338 : vector<8x32xf32>
    %341 = arith.addf %336, %340 : vector<8x32xf32>
    %342 = arith.mulf %326, %332 : vector<8x1xf32>
    %343 = vector.extract_strided_slice %97 {offsets = [16, 0], sizes = [8, 32], strides = [1, 1]} : vector<32x32xf32> to vector<8x32xf32>
    %344 = vector.broadcast %342 : vector<8x1xf32> to vector<8x32xf32>
    %345 = arith.mulf %344, %343 : vector<8x32xf32>
    %346 = arith.addf %341, %345 : vector<8x32xf32>
    %347 = arith.mulf %328, %332 : vector<8x1xf32>
    %348 = vector.extract_strided_slice %97 {offsets = [24, 0], sizes = [8, 32], strides = [1, 1]} : vector<32x32xf32> to vector<8x32xf32>
    %349 = vector.broadcast %347 : vector<8x1xf32> to vector<8x32xf32>
    %350 = arith.mulf %349, %348 : vector<8x32xf32>
    %351 = arith.addf %346, %350 : vector<8x32xf32>
    %c160_93 = arith.constant 160 : index
    %c0_94 = arith.constant 0 : index
    %352 = vector.load %arg4[%c160_93, %c0_94] : memref<416x32xbf16, #tpu.memory_space<vmem>>, vector<32x32xbf16>
    %353 = arith.truncf %276 : vector<8x32xf32> to vector<8x32xbf16>
    %cst_95 = arith.constant dense<0.000000e+00> : vector<8x32xf32>
    %354 = tpu.matmul %353, %352, %cst_95 {dimension_numbers = #tpu.dot_dimension_numbers<[1], [0], [0], [1], [0, 0, 1, 1], [], []>} : vector<8x32xbf16>, vector<32x32xbf16>, vector<8x32xf32> -> vector<8x32xf32>
    %c192_96 = arith.constant 192 : index
    %c0_97 = arith.constant 0 : index
    %355 = vector.load %arg4[%c192_96, %c0_97] : memref<416x32xbf16, #tpu.memory_space<vmem>>, vector<32x32xbf16>
    %356 = arith.truncf %351 : vector<8x32xf32> to vector<8x32xbf16>
    %cst_98 = arith.constant dense<0.000000e+00> : vector<8x32xf32>
    %357 = tpu.matmul %356, %355, %cst_98 {dimension_numbers = #tpu.dot_dimension_numbers<[1], [0], [0], [1], [0, 0, 1, 1], [], []>} : vector<8x32xbf16>, vector<32x32xbf16>, vector<8x32xf32> -> vector<8x32xf32>
    %358 = arith.addf %354, %357 : vector<8x32xf32>
    %c9_99 = arith.constant 9 : index
    %c0_100 = arith.constant 0 : index
    %359 = vector.load %arg8[%c9_99, %c0_100] : memref<16x128xf32, #tpu.memory_space<vmem>>, vector<1x32xf32>
    %360 = vector.broadcast %359 : vector<1x32xf32> to vector<8x32xf32>
    %361 = arith.addf %358, %360 : vector<8x32xf32>
    %c0_101 = arith.constant 0 : index
    %c0_102 = arith.constant 0 : index
    %362 = vector.load %arg5[%c0_101, %c0_102] : memref<128x128xbf16, #tpu.memory_space<vmem>>, vector<32x128xbf16>
    %363 = arith.truncf %361 : vector<8x32xf32> to vector<8x32xbf16>
    %cst_103 = arith.constant dense<0.000000e+00> : vector<8x128xf32>
    %364 = tpu.matmul %363, %362, %cst_103 {dimension_numbers = #tpu.dot_dimension_numbers<[1], [0], [0], [1], [0, 0, 1, 1], [], []>} : vector<8x32xbf16>, vector<32x128xbf16>, vector<8x128xf32> -> vector<8x128xf32>
    %c32_104 = arith.constant 32 : index
    %c0_105 = arith.constant 0 : index
    %365 = vector.load %arg5[%c32_104, %c0_105] : memref<128x128xbf16, #tpu.memory_space<vmem>>, vector<32x128xbf16>
    %cst_106 = arith.constant dense<0.000000e+00> : vector<8x128xf32>
    %366 = tpu.matmul %255, %365, %cst_106 {dimension_numbers = #tpu.dot_dimension_numbers<[1], [0], [0], [1], [0, 0, 1, 1], [], []>} : vector<8x32xbf16>, vector<32x128xbf16>, vector<8x128xf32> -> vector<8x128xf32>
    %367 = arith.addf %364, %366 : vector<8x128xf32>
    %c1_107 = arith.constant 1 : index
    %c0_108 = arith.constant 0 : index
    %368 = vector.load %arg8[%c1_107, %c0_108] : memref<16x128xf32, #tpu.memory_space<vmem>>, vector<1x128xf32>
    %369 = vector.broadcast %368 : vector<1x128xf32> to vector<8x128xf32>
    %370 = arith.addf %367, %369 : vector<8x128xf32>
    %371 = vector.extract_strided_slice %370 {offsets = [0, 0], sizes = [8, 32], strides = [1, 1]} : vector<8x128xf32> to vector<8x32xf32>
    %372 = arith.negf %371 : vector<8x32xf32>
    %373 = math.exp %372 : vector<8x32xf32>
    %cst_109 = arith.constant 1.000000e+00 : f32
    %374 = vector.broadcast %cst_109 : f32 to vector<8x32xf32>
    %375 = arith.addf %374, %373 : vector<8x32xf32>
    %376 = arith.divf %374, %375 : vector<8x32xf32>
    %377 = vector.extract_strided_slice %370 {offsets = [0, 32], sizes = [8, 32], strides = [1, 1]} : vector<8x128xf32> to vector<8x32xf32>
    %378 = arith.negf %377 : vector<8x32xf32>
    %379 = math.exp %378 : vector<8x32xf32>
    %cst_110 = arith.constant 1.000000e+00 : f32
    %380 = vector.broadcast %cst_110 : f32 to vector<8x32xf32>
    %381 = arith.addf %380, %379 : vector<8x32xf32>
    %382 = arith.divf %380, %381 : vector<8x32xf32>
    %383 = vector.extract_strided_slice %370 {offsets = [0, 64], sizes = [8, 32], strides = [1, 1]} : vector<8x128xf32> to vector<8x32xf32>
    %384 = math.tanh %383 : vector<8x32xf32>
    %385 = vector.extract_strided_slice %370 {offsets = [0, 96], sizes = [8, 32], strides = [1, 1]} : vector<8x128xf32> to vector<8x32xf32>
    %386 = arith.negf %385 : vector<8x32xf32>
    %387 = math.exp %386 : vector<8x32xf32>
    %cst_111 = arith.constant 1.000000e+00 : f32
    %388 = vector.broadcast %cst_111 : f32 to vector<8x32xf32>
    %389 = arith.addf %388, %387 : vector<8x32xf32>
    %390 = arith.divf %388, %389 : vector<8x32xf32>
    %391 = arith.mulf %382, %252 : vector<8x32xf32>
    %392 = arith.mulf %376, %384 : vector<8x32xf32>
    %393 = arith.addf %391, %392 : vector<8x32xf32>
    %394 = math.tanh %393 : vector<8x32xf32>
    %395 = arith.mulf %390, %394 : vector<8x32xf32>
    %396 = arith.truncf %395 : vector<8x32xf32> to vector<8x32xbf16>
    %c32_112 = arith.constant 32 : index
    %c0_113 = arith.constant 0 : index
    %397 = vector.load %arg4[%c32_112, %c0_113] : memref<416x32xbf16, #tpu.memory_space<vmem>>, vector<32x32xbf16>
    %cst_114 = arith.constant dense<0.000000e+00> : vector<8x32xf32>
    %398 = tpu.matmul %396, %397, %cst_114 {dimension_numbers = #tpu.dot_dimension_numbers<[1], [0], [0], [1], [0, 0, 1, 1], [], []>} : vector<8x32xbf16>, vector<32x32xbf16>, vector<8x32xf32> -> vector<8x32xf32>
    %399 = arith.addf %103, %398 : vector<8x32xf32>
    %400 = math.tanh %399 : vector<8x32xf32>
    %c64_115 = arith.constant 64 : index
    %c0_116 = arith.constant 0 : index
    %401 = vector.load %arg4[%c64_115, %c0_116] : memref<416x32xbf16, #tpu.memory_space<vmem>>, vector<32x32xbf16>
    %402 = arith.truncf %400 : vector<8x32xf32> to vector<8x32xbf16>
    %cst_117 = arith.constant dense<0.000000e+00> : vector<8x32xf32>
    %403 = tpu.matmul %402, %401, %cst_117 {dimension_numbers = #tpu.dot_dimension_numbers<[1], [0], [0], [1], [0, 0, 1, 1], [], []>} : vector<8x32xbf16>, vector<32x32xbf16>, vector<8x32xf32> -> vector<8x32xf32>
    %c6_118 = arith.constant 6 : index
    %c0_119 = arith.constant 0 : index
    %404 = vector.load %arg8[%c6_118, %c0_119] : memref<16x128xf32, #tpu.memory_space<vmem>>, vector<1x32xf32>
    %405 = vector.broadcast %404 : vector<1x32xf32> to vector<8x32xf32>
    %406 = arith.addf %403, %405 : vector<8x32xf32>
    %cst_120 = arith.constant dense<0xFF800000> : vector<8xf32>
    %407 = vector.multi_reduction <maximumf>, %406, %cst_120 [1] : vector<8x32xf32> to vector<8xf32>
    %408 = vector.shape_cast %407 : vector<8xf32> to vector<8x1xf32>
    %409 = vector.broadcast %408 : vector<8x1xf32> to vector<8x32xf32>
    %410 = arith.subf %406, %409 : vector<8x32xf32>
    %411 = math.exp %410 : vector<8x32xf32>
    %cst_121 = arith.constant dense<0.000000e+00> : vector<8xf32>
    %412 = vector.multi_reduction <add>, %411, %cst_121 [1] : vector<8x32xf32> to vector<8xf32>
    %413 = vector.shape_cast %412 : vector<8xf32> to vector<8x1xf32>
    %414 = tpu.reciprocal %413 {approx = true} : vector<8x1xf32> -> vector<8x1xf32>
    %415 = vector.broadcast %414 : vector<8x1xf32> to vector<8x32xf32>
    %416 = arith.mulf %411, %415 : vector<8x32xf32>
    %417 = arith.mulf %416, %17 : vector<8x32xf32>
    %c128_122 = arith.constant 128 : index
    %c0_123 = arith.constant 0 : index
    %418 = vector.load %arg4[%c128_122, %c0_123] : memref<416x32xbf16, #tpu.memory_space<vmem>>, vector<32x32xbf16>
    %cst_124 = arith.constant dense<0.000000e+00> : vector<8x32xf32>
    %419 = tpu.matmul %396, %418, %cst_124 {dimension_numbers = #tpu.dot_dimension_numbers<[1], [0], [0], [1], [0, 0, 1, 1], [], []>} : vector<8x32xbf16>, vector<32x32xbf16>, vector<8x32xf32> -> vector<8x32xf32>
    %c8_125 = arith.constant 8 : index
    %c0_126 = arith.constant 0 : index
    %420 = vector.load %arg8[%c8_125, %c0_126] : memref<16x128xf32, #tpu.memory_space<vmem>>, vector<1x32xf32>
    %421 = vector.broadcast %420 : vector<1x32xf32> to vector<8x32xf32>
    %422 = arith.addf %419, %421 : vector<8x32xf32>
    %423 = vector.extract_strided_slice %109 {offsets = [0, 0], sizes = [8, 32], strides = [1, 1]} : vector<32x32xf32> to vector<8x32xf32>
    %424 = arith.addf %423, %422 : vector<8x32xf32>
    %425 = math.tanh %424 : vector<8x32xf32>
    %426 = vector.broadcast %110 : vector<1x32xf32> to vector<8x32xf32>
    %427 = arith.mulf %425, %426 : vector<8x32xf32>
    %cst_127 = arith.constant dense<0.000000e+00> : vector<8xf32>
    %428 = vector.multi_reduction <add>, %427, %cst_127 [1] : vector<8x32xf32> to vector<8xf32>
    %429 = vector.shape_cast %428 : vector<8xf32> to vector<8x1xf32>
    %430 = vector.broadcast %111 : vector<1x1xf32> to vector<8x1xf32>
    %431 = arith.addf %429, %430 : vector<8x1xf32>
    %432 = vector.extract_strided_slice %109 {offsets = [8, 0], sizes = [8, 32], strides = [1, 1]} : vector<32x32xf32> to vector<8x32xf32>
    %433 = arith.addf %432, %422 : vector<8x32xf32>
    %434 = math.tanh %433 : vector<8x32xf32>
    %435 = vector.broadcast %110 : vector<1x32xf32> to vector<8x32xf32>
    %436 = arith.mulf %434, %435 : vector<8x32xf32>
    %cst_128 = arith.constant dense<0.000000e+00> : vector<8xf32>
    %437 = vector.multi_reduction <add>, %436, %cst_128 [1] : vector<8x32xf32> to vector<8xf32>
    %438 = vector.shape_cast %437 : vector<8xf32> to vector<8x1xf32>
    %439 = vector.broadcast %111 : vector<1x1xf32> to vector<8x1xf32>
    %440 = arith.addf %438, %439 : vector<8x1xf32>
    %441 = vector.extract_strided_slice %109 {offsets = [16, 0], sizes = [8, 32], strides = [1, 1]} : vector<32x32xf32> to vector<8x32xf32>
    %442 = arith.addf %441, %422 : vector<8x32xf32>
    %443 = math.tanh %442 : vector<8x32xf32>
    %444 = vector.broadcast %110 : vector<1x32xf32> to vector<8x32xf32>
    %445 = arith.mulf %443, %444 : vector<8x32xf32>
    %cst_129 = arith.constant dense<0.000000e+00> : vector<8xf32>
    %446 = vector.multi_reduction <add>, %445, %cst_129 [1] : vector<8x32xf32> to vector<8xf32>
    %447 = vector.shape_cast %446 : vector<8xf32> to vector<8x1xf32>
    %448 = vector.broadcast %111 : vector<1x1xf32> to vector<8x1xf32>
    %449 = arith.addf %447, %448 : vector<8x1xf32>
    %450 = vector.extract_strided_slice %109 {offsets = [24, 0], sizes = [8, 32], strides = [1, 1]} : vector<32x32xf32> to vector<8x32xf32>
    %451 = arith.addf %450, %422 : vector<8x32xf32>
    %452 = math.tanh %451 : vector<8x32xf32>
    %453 = vector.broadcast %110 : vector<1x32xf32> to vector<8x32xf32>
    %454 = arith.mulf %452, %453 : vector<8x32xf32>
    %cst_130 = arith.constant dense<0.000000e+00> : vector<8xf32>
    %455 = vector.multi_reduction <add>, %454, %cst_130 [1] : vector<8x32xf32> to vector<8xf32>
    %456 = vector.shape_cast %455 : vector<8xf32> to vector<8x1xf32>
    %457 = vector.broadcast %111 : vector<1x1xf32> to vector<8x1xf32>
    %458 = arith.addf %456, %457 : vector<8x1xf32>
    %459 = arith.maximumf %431, %440 : vector<8x1xf32>
    %460 = arith.maximumf %459, %449 : vector<8x1xf32>
    %461 = arith.maximumf %460, %458 : vector<8x1xf32>
    %462 = arith.subf %431, %461 : vector<8x1xf32>
    %463 = math.exp %462 : vector<8x1xf32>
    %464 = arith.subf %440, %461 : vector<8x1xf32>
    %465 = math.exp %464 : vector<8x1xf32>
    %466 = arith.subf %449, %461 : vector<8x1xf32>
    %467 = math.exp %466 : vector<8x1xf32>
    %468 = arith.subf %458, %461 : vector<8x1xf32>
    %469 = math.exp %468 : vector<8x1xf32>
    %470 = arith.addf %463, %465 : vector<8x1xf32>
    %471 = arith.addf %470, %467 : vector<8x1xf32>
    %472 = arith.addf %471, %469 : vector<8x1xf32>
    %473 = tpu.reciprocal %472 {approx = true} : vector<8x1xf32> -> vector<8x1xf32>
    %474 = arith.mulf %463, %473 : vector<8x1xf32>
    %475 = vector.extract_strided_slice %97 {offsets = [0, 0], sizes = [8, 32], strides = [1, 1]} : vector<32x32xf32> to vector<8x32xf32>
    %476 = vector.broadcast %474 : vector<8x1xf32> to vector<8x32xf32>
    %477 = arith.mulf %476, %475 : vector<8x32xf32>
    %478 = arith.mulf %465, %473 : vector<8x1xf32>
    %479 = vector.extract_strided_slice %97 {offsets = [8, 0], sizes = [8, 32], strides = [1, 1]} : vector<32x32xf32> to vector<8x32xf32>
    %480 = vector.broadcast %478 : vector<8x1xf32> to vector<8x32xf32>
    %481 = arith.mulf %480, %479 : vector<8x32xf32>
    %482 = arith.addf %477, %481 : vector<8x32xf32>
    %483 = arith.mulf %467, %473 : vector<8x1xf32>
    %484 = vector.extract_strided_slice %97 {offsets = [16, 0], sizes = [8, 32], strides = [1, 1]} : vector<32x32xf32> to vector<8x32xf32>
    %485 = vector.broadcast %483 : vector<8x1xf32> to vector<8x32xf32>
    %486 = arith.mulf %485, %484 : vector<8x32xf32>
    %487 = arith.addf %482, %486 : vector<8x32xf32>
    %488 = arith.mulf %469, %473 : vector<8x1xf32>
    %489 = vector.extract_strided_slice %97 {offsets = [24, 0], sizes = [8, 32], strides = [1, 1]} : vector<32x32xf32> to vector<8x32xf32>
    %490 = vector.broadcast %488 : vector<8x1xf32> to vector<8x32xf32>
    %491 = arith.mulf %490, %489 : vector<8x32xf32>
    %492 = arith.addf %487, %491 : vector<8x32xf32>
    %c160_131 = arith.constant 160 : index
    %c0_132 = arith.constant 0 : index
    %493 = vector.load %arg4[%c160_131, %c0_132] : memref<416x32xbf16, #tpu.memory_space<vmem>>, vector<32x32xbf16>
    %494 = arith.truncf %417 : vector<8x32xf32> to vector<8x32xbf16>
    %cst_133 = arith.constant dense<0.000000e+00> : vector<8x32xf32>
    %495 = tpu.matmul %494, %493, %cst_133 {dimension_numbers = #tpu.dot_dimension_numbers<[1], [0], [0], [1], [0, 0, 1, 1], [], []>} : vector<8x32xbf16>, vector<32x32xbf16>, vector<8x32xf32> -> vector<8x32xf32>
    %c192_134 = arith.constant 192 : index
    %c0_135 = arith.constant 0 : index
    %496 = vector.load %arg4[%c192_134, %c0_135] : memref<416x32xbf16, #tpu.memory_space<vmem>>, vector<32x32xbf16>
    %497 = arith.truncf %492 : vector<8x32xf32> to vector<8x32xbf16>
    %cst_136 = arith.constant dense<0.000000e+00> : vector<8x32xf32>
    %498 = tpu.matmul %497, %496, %cst_136 {dimension_numbers = #tpu.dot_dimension_numbers<[1], [0], [0], [1], [0, 0, 1, 1], [], []>} : vector<8x32xbf16>, vector<32x32xbf16>, vector<8x32xf32> -> vector<8x32xf32>
    %499 = arith.addf %495, %498 : vector<8x32xf32>
    %c9_137 = arith.constant 9 : index
    %c0_138 = arith.constant 0 : index
    %500 = vector.load %arg8[%c9_137, %c0_138] : memref<16x128xf32, #tpu.memory_space<vmem>>, vector<1x32xf32>
    %501 = vector.broadcast %500 : vector<1x32xf32> to vector<8x32xf32>
    %502 = arith.addf %499, %501 : vector<8x32xf32>
    %c0_139 = arith.constant 0 : index
    %c0_140 = arith.constant 0 : index
    %503 = vector.load %arg5[%c0_139, %c0_140] : memref<128x128xbf16, #tpu.memory_space<vmem>>, vector<32x128xbf16>
    %504 = arith.truncf %502 : vector<8x32xf32> to vector<8x32xbf16>
    %cst_141 = arith.constant dense<0.000000e+00> : vector<8x128xf32>
    %505 = tpu.matmul %504, %503, %cst_141 {dimension_numbers = #tpu.dot_dimension_numbers<[1], [0], [0], [1], [0, 0, 1, 1], [], []>} : vector<8x32xbf16>, vector<32x128xbf16>, vector<8x128xf32> -> vector<8x128xf32>
    %c32_142 = arith.constant 32 : index
    %c0_143 = arith.constant 0 : index
    %506 = vector.load %arg5[%c32_142, %c0_143] : memref<128x128xbf16, #tpu.memory_space<vmem>>, vector<32x128xbf16>
    %cst_144 = arith.constant dense<0.000000e+00> : vector<8x128xf32>
    %507 = tpu.matmul %396, %506, %cst_144 {dimension_numbers = #tpu.dot_dimension_numbers<[1], [0], [0], [1], [0, 0, 1, 1], [], []>} : vector<8x32xbf16>, vector<32x128xbf16>, vector<8x128xf32> -> vector<8x128xf32>
    %508 = arith.addf %505, %507 : vector<8x128xf32>
    %c1_145 = arith.constant 1 : index
    %c0_146 = arith.constant 0 : index
    %509 = vector.load %arg8[%c1_145, %c0_146] : memref<16x128xf32, #tpu.memory_space<vmem>>, vector<1x128xf32>
    %510 = vector.broadcast %509 : vector<1x128xf32> to vector<8x128xf32>
    %511 = arith.addf %508, %510 : vector<8x128xf32>
    %512 = vector.extract_strided_slice %511 {offsets = [0, 0], sizes = [8, 32], strides = [1, 1]} : vector<8x128xf32> to vector<8x32xf32>
    %513 = arith.negf %512 : vector<8x32xf32>
    %514 = math.exp %513 : vector<8x32xf32>
    %cst_147 = arith.constant 1.000000e+00 : f32
    %515 = vector.broadcast %cst_147 : f32 to vector<8x32xf32>
    %516 = arith.addf %515, %514 : vector<8x32xf32>
    %517 = arith.divf %515, %516 : vector<8x32xf32>
    %518 = vector.extract_strided_slice %511 {offsets = [0, 32], sizes = [8, 32], strides = [1, 1]} : vector<8x128xf32> to vector<8x32xf32>
    %519 = arith.negf %518 : vector<8x32xf32>
    %520 = math.exp %519 : vector<8x32xf32>
    %cst_148 = arith.constant 1.000000e+00 : f32
    %521 = vector.broadcast %cst_148 : f32 to vector<8x32xf32>
    %522 = arith.addf %521, %520 : vector<8x32xf32>
    %523 = arith.divf %521, %522 : vector<8x32xf32>
    %524 = vector.extract_strided_slice %511 {offsets = [0, 64], sizes = [8, 32], strides = [1, 1]} : vector<8x128xf32> to vector<8x32xf32>
    %525 = math.tanh %524 : vector<8x32xf32>
    %526 = vector.extract_strided_slice %511 {offsets = [0, 96], sizes = [8, 32], strides = [1, 1]} : vector<8x128xf32> to vector<8x32xf32>
    %527 = arith.negf %526 : vector<8x32xf32>
    %528 = math.exp %527 : vector<8x32xf32>
    %cst_149 = arith.constant 1.000000e+00 : f32
    %529 = vector.broadcast %cst_149 : f32 to vector<8x32xf32>
    %530 = arith.addf %529, %528 : vector<8x32xf32>
    %531 = arith.divf %529, %530 : vector<8x32xf32>
    %532 = arith.mulf %523, %393 : vector<8x32xf32>
    %533 = arith.mulf %517, %525 : vector<8x32xf32>
    %534 = arith.addf %532, %533 : vector<8x32xf32>
    %535 = math.tanh %534 : vector<8x32xf32>
    %536 = arith.mulf %531, %535 : vector<8x32xf32>
    %537 = tpu.concatenate %112, %254, %395 in 0 : vector<8x32xf32>, vector<8x32xf32>, vector<8x32xf32> -> vector<24x32xf32>
    %538 = tpu.concatenate %254, %395, %536 in 0 : vector<8x32xf32>, vector<8x32xf32>, vector<8x32xf32> -> vector<24x32xf32>
    %539 = tpu.concatenate %220, %361, %502 in 0 : vector<8x32xf32>, vector<8x32xf32>, vector<8x32xf32> -> vector<24x32xf32>
    %c224 = arith.constant 224 : index
    %c0_150 = arith.constant 0 : index
    %540 = vector.load %arg4[%c224, %c0_150] : memref<416x32xbf16, #tpu.memory_space<vmem>>, vector<32x32xbf16>
    %541 = arith.truncf %538 : vector<24x32xf32> to vector<24x32xbf16>
    %cst_151 = arith.constant dense<0.000000e+00> : vector<24x32xf32>
    %542 = tpu.matmul %541, %540, %cst_151 {dimension_numbers = #tpu.dot_dimension_numbers<[1], [0], [0], [1], [0, 0, 1, 1], [], []>} : vector<24x32xbf16>, vector<32x32xbf16>, vector<24x32xf32> -> vector<24x32xf32>
    %c256 = arith.constant 256 : index
    %c0_152 = arith.constant 0 : index
    %543 = vector.load %arg4[%c256, %c0_152] : memref<416x32xbf16, #tpu.memory_space<vmem>>, vector<32x32xbf16>
    %544 = arith.truncf %539 : vector<24x32xf32> to vector<24x32xbf16>
    %cst_153 = arith.constant dense<0.000000e+00> : vector<24x32xf32>
    %545 = tpu.matmul %544, %543, %cst_153 {dimension_numbers = #tpu.dot_dimension_numbers<[1], [0], [0], [1], [0, 0, 1, 1], [], []>} : vector<24x32xbf16>, vector<32x32xbf16>, vector<24x32xf32> -> vector<24x32xf32>
    %546 = arith.addf %542, %545 : vector<24x32xf32>
    %c10 = arith.constant 10 : index
    %c0_154 = arith.constant 0 : index
    %547 = vector.load %arg8[%c10, %c0_154] : memref<16x128xf32, #tpu.memory_space<vmem>>, vector<1x32xf32>
    %548 = vector.broadcast %547 : vector<1x32xf32> to vector<24x32xf32>
    %549 = arith.addf %546, %548 : vector<24x32xf32>
    %550 = math.tanh %549 : vector<24x32xf32>
    %c288 = arith.constant 288 : index
    %c0_155 = arith.constant 0 : index
    %551 = vector.load %arg4[%c288, %c0_155] : memref<416x32xbf16, #tpu.memory_space<vmem>>, vector<32x32xbf16>
    %552 = arith.truncf %537 : vector<24x32xf32> to vector<24x32xbf16>
    %cst_156 = arith.constant dense<0.000000e+00> : vector<24x32xf32>
    %553 = tpu.matmul %552, %551, %cst_156 {dimension_numbers = #tpu.dot_dimension_numbers<[1], [0], [0], [1], [0, 0, 1, 1], [], []>} : vector<24x32xbf16>, vector<32x32xbf16>, vector<24x32xf32> -> vector<24x32xf32>
    %c320 = arith.constant 320 : index
    %c0_157 = arith.constant 0 : index
    %554 = vector.load %arg4[%c320, %c0_157] : memref<416x32xbf16, #tpu.memory_space<vmem>>, vector<32x32xbf16>
    %555 = arith.truncf %538 : vector<24x32xf32> to vector<24x32xbf16>
    %cst_158 = arith.constant dense<0.000000e+00> : vector<24x32xf32>
    %556 = tpu.matmul %555, %554, %cst_158 {dimension_numbers = #tpu.dot_dimension_numbers<[1], [0], [0], [1], [0, 0, 1, 1], [], []>} : vector<24x32xbf16>, vector<32x32xbf16>, vector<24x32xf32> -> vector<24x32xf32>
    %557 = arith.addf %553, %556 : vector<24x32xf32>
    %c11 = arith.constant 11 : index
    %c0_159 = arith.constant 0 : index
    %558 = vector.load %arg8[%c11, %c0_159] : memref<16x128xf32, #tpu.memory_space<vmem>>, vector<1x32xf32>
    %559 = vector.broadcast %558 : vector<1x32xf32> to vector<24x32xf32>
    %560 = arith.addf %557, %559 : vector<24x32xf32>
    %561 = math.tanh %560 : vector<24x32xf32>
    %c384 = arith.constant 384 : index
    %c0_160 = arith.constant 0 : index
    %562 = vector.load %arg4[%c384, %c0_160] : memref<416x32xbf16, #tpu.memory_space<vmem>>, vector<32x32xbf16>
    %563 = arith.truncf %561 : vector<24x32xf32> to vector<24x32xbf16>
    %cst_161 = arith.constant dense<0.000000e+00> : vector<24x32xf32>
    %564 = tpu.matmul %563, %562, %cst_161 {dimension_numbers = #tpu.dot_dimension_numbers<[1], [0], [0], [1], [0, 0, 1, 1], [], []>} : vector<24x32xbf16>, vector<32x32xbf16>, vector<24x32xf32> -> vector<24x32xf32>
    %565 = vector.extract_strided_slice %564 {offsets = [0, 0], sizes = [24, 2], strides = [1, 1]} : vector<24x32xf32> to vector<24x2xf32>
    %c12 = arith.constant 12 : index
    %c0_162 = arith.constant 0 : index
    %566 = vector.load %arg8[%c12, %c0_162] : memref<16x128xf32, #tpu.memory_space<vmem>>, vector<1x2xf32>
    %567 = vector.broadcast %566 : vector<1x2xf32> to vector<24x2xf32>
    %568 = arith.addf %565, %567 : vector<24x2xf32>
    %c0_163 = arith.constant 0 : index
    %c0_164 = arith.constant 0 : index
    %569 = vector.load %arg10[%c0_163, %c0_164] : memref<24x2xf32, #tpu.memory_space<vmem>>, vector<24x2xf32>
    tpu.vector_store %arg10[%c0_163, %c0_164], %568 {strides = array<i32>} : memref<24x2xf32, #tpu.memory_space<vmem>>, vector<24x2xf32>,
    %c2 = arith.constant 2 : index
    %c0_165 = arith.constant 0 : index
    %570 = vector.load %arg8[%c2, %c0_165] : memref<16x128xf32, #tpu.memory_space<vmem>>, vector<1x128xf32>
    %c0_166 = arith.constant 0 : index
    %c0_167 = arith.constant 0 : index
    %571 = vector.load %arg1[%c0_166, %c0_167] : memref<96x32xbf16, #tpu.memory_space<vmem>>, vector<96x32xbf16>
    %c64_168 = arith.constant 64 : index
    %c0_169 = arith.constant 0 : index
    %572 = vector.load %arg5[%c64_168, %c0_169] : memref<128x128xbf16, #tpu.memory_space<vmem>>, vector<32x128xbf16>
    %cst_170 = arith.constant dense<0.000000e+00> : vector<96x128xf32>
    %573 = tpu.matmul %571, %572, %cst_170 {dimension_numbers = #tpu.dot_dimension_numbers<[1], [0], [0], [1], [0, 0, 1, 1], [], []>} : vector<96x32xbf16>, vector<32x128xbf16>, vector<96x128xf32> -> vector<96x128xf32>
    %574 = vector.broadcast %570 : vector<1x128xf32> to vector<96x128xf32>
    %575 = arith.addf %573, %574 : vector<96x128xf32>
    %c64_171 = arith.constant 64 : index
    %c0_172 = arith.constant 0 : index
    %576 = vector.load %arg5[%c64_171, %c0_172] : memref<128x128xbf16, #tpu.memory_space<vmem>>, vector<32x128xbf16>
    %577 = arith.truncf %550 : vector<24x32xf32> to vector<24x32xbf16>
    %cst_173 = arith.constant dense<0.000000e+00> : vector<24x128xf32>
    %578 = tpu.matmul %577, %576, %cst_173 {dimension_numbers = #tpu.dot_dimension_numbers<[1], [0], [0], [1], [0, 0, 1, 1], [], []>} : vector<24x32xbf16>, vector<32x128xbf16>, vector<24x128xf32> -> vector<24x128xf32>
    %579 = vector.broadcast %570 : vector<1x128xf32> to vector<24x128xf32>
    %580 = arith.addf %578, %579 : vector<24x128xf32>
    %cst_174 = arith.constant 0.000000e+00 : f32
    %581 = vector.broadcast %cst_174 : f32 to vector<24x32xf32>
    %cst_175 = arith.constant 0.000000e+00 : f32
    %582 = vector.broadcast %cst_175 : f32 to vector<24x32xf32>
    %c96_176 = arith.constant 96 : index
    %c0_177 = arith.constant 0 : index
    %583 = vector.load %arg5[%c96_176, %c0_177] : memref<128x128xbf16, #tpu.memory_space<vmem>>, vector<32x128xbf16>
    %584 = arith.truncf %581 : vector<24x32xf32> to vector<24x32xbf16>
    %cst_178 = arith.constant dense<0.000000e+00> : vector<24x128xf32>
    %585 = tpu.matmul %584, %583, %cst_178 {dimension_numbers = #tpu.dot_dimension_numbers<[1], [0], [0], [1], [0, 0, 1, 1], [], []>} : vector<24x32xbf16>, vector<32x128xbf16>, vector<24x128xf32> -> vector<24x128xf32>
    %586 = arith.addf %580, %585 : vector<24x128xf32>
    %587 = vector.extract_strided_slice %586 {offsets = [0, 0], sizes = [24, 32], strides = [1, 1]} : vector<24x128xf32> to vector<24x32xf32>
    %588 = arith.negf %587 : vector<24x32xf32>
    %589 = math.exp %588 : vector<24x32xf32>
    %cst_179 = arith.constant 1.000000e+00 : f32
    %590 = vector.broadcast %cst_179 : f32 to vector<24x32xf32>
    %591 = arith.addf %590, %589 : vector<24x32xf32>
    %592 = arith.divf %590, %591 : vector<24x32xf32>
    %593 = vector.extract_strided_slice %586 {offsets = [0, 32], sizes = [24, 32], strides = [1, 1]} : vector<24x128xf32> to vector<24x32xf32>
    %594 = arith.negf %593 : vector<24x32xf32>
    %595 = math.exp %594 : vector<24x32xf32>
    %cst_180 = arith.constant 1.000000e+00 : f32
    %596 = vector.broadcast %cst_180 : f32 to vector<24x32xf32>
    %597 = arith.addf %596, %595 : vector<24x32xf32>
    %598 = arith.divf %596, %597 : vector<24x32xf32>
    %599 = vector.extract_strided_slice %586 {offsets = [0, 64], sizes = [24, 32], strides = [1, 1]} : vector<24x128xf32> to vector<24x32xf32>
    %600 = math.tanh %599 : vector<24x32xf32>
    %601 = vector.extract_strided_slice %586 {offsets = [0, 96], sizes = [24, 32], strides = [1, 1]} : vector<24x128xf32> to vector<24x32xf32>
    %602 = arith.negf %601 : vector<24x32xf32>
    %603 = math.exp %602 : vector<24x32xf32>
    %cst_181 = arith.constant 1.000000e+00 : f32
    %604 = vector.broadcast %cst_181 : f32 to vector<24x32xf32>
    %605 = arith.addf %604, %603 : vector<24x32xf32>
    %606 = arith.divf %604, %605 : vector<24x32xf32>
    %607 = arith.mulf %598, %582 : vector<24x32xf32>
    %608 = arith.mulf %592, %600 : vector<24x32xf32>
    %609 = arith.addf %607, %608 : vector<24x32xf32>
    %610 = math.tanh %609 : vector<24x32xf32>
    %611 = arith.mulf %606, %610 : vector<24x32xf32>
    %612 = vector.extract_strided_slice %575 {offsets = [0, 0], sizes = [24, 128], strides = [1, 1]} : vector<96x128xf32> to vector<24x128xf32>
    %c96_182 = arith.constant 96 : index
    %c0_183 = arith.constant 0 : index
    %613 = vector.load %arg5[%c96_182, %c0_183] : memref<128x128xbf16, #tpu.memory_space<vmem>>, vector<32x128xbf16>
    %614 = arith.truncf %611 : vector<24x32xf32> to vector<24x32xbf16>
    %cst_184 = arith.constant dense<0.000000e+00> : vector<24x128xf32>
    %615 = tpu.matmul %614, %613, %cst_184 {dimension_numbers = #tpu.dot_dimension_numbers<[1], [0], [0], [1], [0, 0, 1, 1], [], []>} : vector<24x32xbf16>, vector<32x128xbf16>, vector<24x128xf32> -> vector<24x128xf32>
    %616 = arith.addf %612, %615 : vector<24x128xf32>
    %617 = vector.extract_strided_slice %616 {offsets = [0, 0], sizes = [24, 32], strides = [1, 1]} : vector<24x128xf32> to vector<24x32xf32>
    %618 = arith.negf %617 : vector<24x32xf32>
    %619 = math.exp %618 : vector<24x32xf32>
    %cst_185 = arith.constant 1.000000e+00 : f32
    %620 = vector.broadcast %cst_185 : f32 to vector<24x32xf32>
    %621 = arith.addf %620, %619 : vector<24x32xf32>
    %622 = arith.divf %620, %621 : vector<24x32xf32>
    %623 = vector.extract_strided_slice %616 {offsets = [0, 32], sizes = [24, 32], strides = [1, 1]} : vector<24x128xf32> to vector<24x32xf32>
    %624 = arith.negf %623 : vector<24x32xf32>
    %625 = math.exp %624 : vector<24x32xf32>
    %cst_186 = arith.constant 1.000000e+00 : f32
    %626 = vector.broadcast %cst_186 : f32 to vector<24x32xf32>
    %627 = arith.addf %626, %625 : vector<24x32xf32>
    %628 = arith.divf %626, %627 : vector<24x32xf32>
    %629 = vector.extract_strided_slice %616 {offsets = [0, 64], sizes = [24, 32], strides = [1, 1]} : vector<24x128xf32> to vector<24x32xf32>
    %630 = math.tanh %629 : vector<24x32xf32>
    %631 = vector.extract_strided_slice %616 {offsets = [0, 96], sizes = [24, 32], strides = [1, 1]} : vector<24x128xf32> to vector<24x32xf32>
    %632 = arith.negf %631 : vector<24x32xf32>
    %633 = math.exp %632 : vector<24x32xf32>
    %cst_187 = arith.constant 1.000000e+00 : f32
    %634 = vector.broadcast %cst_187 : f32 to vector<24x32xf32>
    %635 = arith.addf %634, %633 : vector<24x32xf32>
    %636 = arith.divf %634, %635 : vector<24x32xf32>
    %637 = arith.mulf %628, %609 : vector<24x32xf32>
    %638 = arith.mulf %622, %630 : vector<24x32xf32>
    %639 = arith.addf %637, %638 : vector<24x32xf32>
    %640 = math.tanh %639 : vector<24x32xf32>
    %641 = arith.mulf %636, %640 : vector<24x32xf32>
    %642 = vector.extract_strided_slice %575 {offsets = [24, 0], sizes = [24, 128], strides = [1, 1]} : vector<96x128xf32> to vector<24x128xf32>
    %c96_188 = arith.constant 96 : index
    %c0_189 = arith.constant 0 : index
    %643 = vector.load %arg5[%c96_188, %c0_189] : memref<128x128xbf16, #tpu.memory_space<vmem>>, vector<32x128xbf16>
    %644 = arith.truncf %641 : vector<24x32xf32> to vector<24x32xbf16>
    %cst_190 = arith.constant dense<0.000000e+00> : vector<24x128xf32>
    %645 = tpu.matmul %644, %643, %cst_190 {dimension_numbers = #tpu.dot_dimension_numbers<[1], [0], [0], [1], [0, 0, 1, 1], [], []>} : vector<24x32xbf16>, vector<32x128xbf16>, vector<24x128xf32> -> vector<24x128xf32>
    %646 = arith.addf %642, %645 : vector<24x128xf32>
    %647 = vector.extract_strided_slice %646 {offsets = [0, 0], sizes = [24, 32], strides = [1, 1]} : vector<24x128xf32> to vector<24x32xf32>
    %648 = arith.negf %647 : vector<24x32xf32>
    %649 = math.exp %648 : vector<24x32xf32>
    %cst_191 = arith.constant 1.000000e+00 : f32
    %650 = vector.broadcast %cst_191 : f32 to vector<24x32xf32>
    %651 = arith.addf %650, %649 : vector<24x32xf32>
    %652 = arith.divf %650, %651 : vector<24x32xf32>
    %653 = vector.extract_strided_slice %646 {offsets = [0, 32], sizes = [24, 32], strides = [1, 1]} : vector<24x128xf32> to vector<24x32xf32>
    %654 = arith.negf %653 : vector<24x32xf32>
    %655 = math.exp %654 : vector<24x32xf32>
    %cst_192 = arith.constant 1.000000e+00 : f32
    %656 = vector.broadcast %cst_192 : f32 to vector<24x32xf32>
    %657 = arith.addf %656, %655 : vector<24x32xf32>
    %658 = arith.divf %656, %657 : vector<24x32xf32>
    %659 = vector.extract_strided_slice %646 {offsets = [0, 64], sizes = [24, 32], strides = [1, 1]} : vector<24x128xf32> to vector<24x32xf32>
    %660 = math.tanh %659 : vector<24x32xf32>
    %661 = vector.extract_strided_slice %646 {offsets = [0, 96], sizes = [24, 32], strides = [1, 1]} : vector<24x128xf32> to vector<24x32xf32>
    %662 = arith.negf %661 : vector<24x32xf32>
    %663 = math.exp %662 : vector<24x32xf32>
    %cst_193 = arith.constant 1.000000e+00 : f32
    %664 = vector.broadcast %cst_193 : f32 to vector<24x32xf32>
    %665 = arith.addf %664, %663 : vector<24x32xf32>
    %666 = arith.divf %664, %665 : vector<24x32xf32>
    %667 = arith.mulf %658, %639 : vector<24x32xf32>
    %668 = arith.mulf %652, %660 : vector<24x32xf32>
    %669 = arith.addf %667, %668 : vector<24x32xf32>
    %670 = math.tanh %669 : vector<24x32xf32>
    %671 = arith.mulf %666, %670 : vector<24x32xf32>
    %672 = vector.extract_strided_slice %575 {offsets = [48, 0], sizes = [24, 128], strides = [1, 1]} : vector<96x128xf32> to vector<24x128xf32>
    %c96_194 = arith.constant 96 : index
    %c0_195 = arith.constant 0 : index
    %673 = vector.load %arg5[%c96_194, %c0_195] : memref<128x128xbf16, #tpu.memory_space<vmem>>, vector<32x128xbf16>
    %674 = arith.truncf %671 : vector<24x32xf32> to vector<24x32xbf16>
    %cst_196 = arith.constant dense<0.000000e+00> : vector<24x128xf32>
    %675 = tpu.matmul %674, %673, %cst_196 {dimension_numbers = #tpu.dot_dimension_numbers<[1], [0], [0], [1], [0, 0, 1, 1], [], []>} : vector<24x32xbf16>, vector<32x128xbf16>, vector<24x128xf32> -> vector<24x128xf32>
    %676 = arith.addf %672, %675 : vector<24x128xf32>
    %677 = vector.extract_strided_slice %676 {offsets = [0, 0], sizes = [24, 32], strides = [1, 1]} : vector<24x128xf32> to vector<24x32xf32>
    %678 = arith.negf %677 : vector<24x32xf32>
    %679 = math.exp %678 : vector<24x32xf32>
    %cst_197 = arith.constant 1.000000e+00 : f32
    %680 = vector.broadcast %cst_197 : f32 to vector<24x32xf32>
    %681 = arith.addf %680, %679 : vector<24x32xf32>
    %682 = arith.divf %680, %681 : vector<24x32xf32>
    %683 = vector.extract_strided_slice %676 {offsets = [0, 32], sizes = [24, 32], strides = [1, 1]} : vector<24x128xf32> to vector<24x32xf32>
    %684 = arith.negf %683 : vector<24x32xf32>
    %685 = math.exp %684 : vector<24x32xf32>
    %cst_198 = arith.constant 1.000000e+00 : f32
    %686 = vector.broadcast %cst_198 : f32 to vector<24x32xf32>
    %687 = arith.addf %686, %685 : vector<24x32xf32>
    %688 = arith.divf %686, %687 : vector<24x32xf32>
    %689 = vector.extract_strided_slice %676 {offsets = [0, 64], sizes = [24, 32], strides = [1, 1]} : vector<24x128xf32> to vector<24x32xf32>
    %690 = math.tanh %689 : vector<24x32xf32>
    %691 = vector.extract_strided_slice %676 {offsets = [0, 96], sizes = [24, 32], strides = [1, 1]} : vector<24x128xf32> to vector<24x32xf32>
    %692 = arith.negf %691 : vector<24x32xf32>
    %693 = math.exp %692 : vector<24x32xf32>
    %cst_199 = arith.constant 1.000000e+00 : f32
    %694 = vector.broadcast %cst_199 : f32 to vector<24x32xf32>
    %695 = arith.addf %694, %693 : vector<24x32xf32>
    %696 = arith.divf %694, %695 : vector<24x32xf32>
    %697 = arith.mulf %688, %669 : vector<24x32xf32>
    %698 = arith.mulf %682, %690 : vector<24x32xf32>
    %699 = arith.addf %697, %698 : vector<24x32xf32>
    %700 = math.tanh %699 : vector<24x32xf32>
    %701 = arith.mulf %696, %700 : vector<24x32xf32>
    %702 = vector.extract_strided_slice %575 {offsets = [72, 0], sizes = [24, 128], strides = [1, 1]} : vector<96x128xf32> to vector<24x128xf32>
    %c96_200 = arith.constant 96 : index
    %c0_201 = arith.constant 0 : index
    %703 = vector.load %arg5[%c96_200, %c0_201] : memref<128x128xbf16, #tpu.memory_space<vmem>>, vector<32x128xbf16>
    %704 = arith.truncf %701 : vector<24x32xf32> to vector<24x32xbf16>
    %cst_202 = arith.constant dense<0.000000e+00> : vector<24x128xf32>
    %705 = tpu.matmul %704, %703, %cst_202 {dimension_numbers = #tpu.dot_dimension_numbers<[1], [0], [0], [1], [0, 0, 1, 1], [], []>} : vector<24x32xbf16>, vector<32x128xbf16>, vector<24x128xf32> -> vector<24x128xf32>
    %706 = arith.addf %702, %705 : vector<24x128xf32>
    %707 = vector.extract_strided_slice %706 {offsets = [0, 0], sizes = [24, 32], strides = [1, 1]} : vector<24x128xf32> to vector<24x32xf32>
    %708 = arith.negf %707 : vector<24x32xf32>
    %709 = math.exp %708 : vector<24x32xf32>
    %cst_203 = arith.constant 1.000000e+00 : f32
    %710 = vector.broadcast %cst_203 : f32 to vector<24x32xf32>
    %711 = arith.addf %710, %709 : vector<24x32xf32>
    %712 = arith.divf %710, %711 : vector<24x32xf32>
    %713 = vector.extract_strided_slice %706 {offsets = [0, 32], sizes = [24, 32], strides = [1, 1]} : vector<24x128xf32> to vector<24x32xf32>
    %714 = arith.negf %713 : vector<24x32xf32>
    %715 = math.exp %714 : vector<24x32xf32>
    %cst_204 = arith.constant 1.000000e+00 : f32
    %716 = vector.broadcast %cst_204 : f32 to vector<24x32xf32>
    %717 = arith.addf %716, %715 : vector<24x32xf32>
    %718 = arith.divf %716, %717 : vector<24x32xf32>
    %719 = vector.extract_strided_slice %706 {offsets = [0, 64], sizes = [24, 32], strides = [1, 1]} : vector<24x128xf32> to vector<24x32xf32>
    %720 = math.tanh %719 : vector<24x32xf32>
    %721 = vector.extract_strided_slice %706 {offsets = [0, 96], sizes = [24, 32], strides = [1, 1]} : vector<24x128xf32> to vector<24x32xf32>
    %722 = arith.negf %721 : vector<24x32xf32>
    %723 = math.exp %722 : vector<24x32xf32>
    %cst_205 = arith.constant 1.000000e+00 : f32
    %724 = vector.broadcast %cst_205 : f32 to vector<24x32xf32>
    %725 = arith.addf %724, %723 : vector<24x32xf32>
    %726 = arith.divf %724, %725 : vector<24x32xf32>
    %727 = arith.mulf %718, %699 : vector<24x32xf32>
    %728 = arith.mulf %712, %720 : vector<24x32xf32>
    %729 = arith.addf %727, %728 : vector<24x32xf32>
    %730 = math.tanh %729 : vector<24x32xf32>
    %731 = arith.mulf %726, %730 : vector<24x32xf32>
    %732 = tpu.concatenate %641, %671, %701, %731 in 1 : vector<24x32xf32>, vector<24x32xf32>, vector<24x32xf32>, vector<24x32xf32> -> vector<24x128xf32>
    %c0_206 = arith.constant 0 : index
    %c0_207 = arith.constant 0 : index
    %733 = vector.load %arg6[%c0_206, %c0_207] : memref<128x128xbf16, #tpu.memory_space<vmem>>, vector<128x128xbf16>
    %734 = arith.truncf %732 : vector<24x128xf32> to vector<24x128xbf16>
    %cst_208 = arith.constant dense<0.000000e+00> : vector<24x128xf32>
    %735 = tpu.matmul %734, %733, %cst_208 {dimension_numbers = #tpu.dot_dimension_numbers<[1], [0], [0], [1], [0, 0, 1, 1], [], []>} : vector<24x128xbf16>, vector<128x128xbf16>, vector<24x128xf32> -> vector<24x128xf32>
    %c3 = arith.constant 3 : index
    %c0_209 = arith.constant 0 : index
    %736 = vector.load %arg8[%c3, %c0_209] : memref<16x128xf32, #tpu.memory_space<vmem>>, vector<1x128xf32>
    %737 = vector.broadcast %736 : vector<1x128xf32> to vector<24x128xf32>
    %738 = arith.addf %735, %737 : vector<24x128xf32>
    %c0_210 = arith.constant 0 : index
    %c0_211 = arith.constant 0 : index
    %739 = vector.load %arg11[%c0_210, %c0_211] : memref<24x128xf32, #tpu.memory_space<vmem>>, vector<24x128xf32>
    tpu.vector_store %arg11[%c0_210, %c0_211], %738 {strides = array<i32>} : memref<24x128xf32, #tpu.memory_space<vmem>>, vector<24x128xf32>,
    return
  }
}

</mosaic_0001>

<llo_original>
// kernel: tile.13
$region0: #{tile.13}
  #allocation0 [shape = 's32[1]{0}', space=sflag, size = 0x4, scoped, tag = 'scoped memory for tile.13']
  %s0 = inlined_call_operand.vmem [shape: f32[32], index: 0, kind: input, shape index: {}]
  %s1 = inlined_call_operand.vmem [shape: f32[4,32], index: 1, kind: output, shape index: {}]
  // Predicated region
  $region2: #{tile.13} parent=0 // pred_check
    _
  $region3: #{tile.13} parent=0 // pred_check_branch
    %3 = sbr.rel (0) target = $region5
  $region4: #{tile.13} parent=0 // pred_region
    _
  $region5: #{tile.13} parent=0 // pred_fallthru
    _
  %v4 = vld [vmem:[%s0] ss:$0 sm:$0xff]
  %5 = vst [vmem:[%s1] sm:$0xf] %v4

// kernel: uc5_forward.1
$region0: #{uc5_forward.1}
  #allocation0 [shape = 'u32[]', space=smem, size = 0x4, offset = 0x4, fixed_abs, tag = 'smem constant byte address 0x4 - core index']
  #allocation1 [shape = 'u32[144,128]{1,0:T(1,128)}', space=vmem, size = 0x12000, scoped, tag = 'internal scratch']
  %s0 = inlined_call_operand.vmem [shape: bf16[512,128], index: 0, kind: input, shape index: {}]
  %s1 = inlined_call_operand.vmem [shape: bf16[96,32], index: 1, kind: input, shape index: {}]
  %s2 = inlined_call_operand.vmem [shape: bf16[8,512], index: 2, kind: input, shape index: {}]
  %s3 = inlined_call_operand.vmem [shape: bf16[128,128], index: 3, kind: input, shape index: {}]
  %s4 = inlined_call_operand.vmem [shape: bf16[416,32], index: 4, kind: input, shape index: {}]
  %s5 = inlined_call_operand.vmem [shape: bf16[128,128], index: 5, kind: input, shape index: {}]
  %s6 = inlined_call_operand.vmem [shape: bf16[128,128], index: 6, kind: input, shape index: {}]
  %s7 = inlined_call_operand.vmem [shape: f32[16,32], index: 7, kind: input, shape index: {}]
  %s8 = inlined_call_operand.vmem [shape: f32[16,128], index: 8, kind: input, shape index: {}]
  %s9 = inlined_call_operand.vmem [shape: f32[8,16], index: 9, kind: output, shape index: {0}]
  %s10 = inlined_call_operand.vmem [shape: f32[24,2], index: 10, kind: output, shape index: {1}]
  %s11 = inlined_call_operand.vmem [shape: f32[24,128], index: 11, kind: output, shape index: {2}]
  %12 = xla_tuple %s9, %s10, %s11
  %s13 = sld [smem:[#allocation0]]
  $region62: #{uc5_forward.1} parent=0
    _
  %s15 = ssub.s32 1, %s13
  %s16 = scalar_select 0, %s15, %s13
  // Predicated region
  $region2: #{uc5_forward.1} parent=0 // pred_check
    _
  $region3: #{uc5_forward.1} parent=0 // pred_check_branch
    %18 = sbr.rel (0) target = $region5
  $region4: #{uc5_forward.1} parent=0 // pred_region
    _
  $region5: #{uc5_forward.1} parent=0 // pred_fallthru
    _
  // Predicated region
  $region6: #{uc5_forward.1} parent=0 // pred_check
    _
  $region7: #{uc5_forward.1} parent=0 // pred_check_branch
    %20 = sbr.rel (0) target = $region9
  $region8: #{uc5_forward.1} parent=0 // pred_region
    _
  $region9: #{uc5_forward.1} parent=0 // pred_fallthru
    _
  // Predicated region
  $region10: #{uc5_forward.1} parent=0 // pred_check
    _
  $region11: #{uc5_forward.1} parent=0 // pred_check_branch
    %22 = sbr.rel (0) target = $region13
  $region12: #{uc5_forward.1} parent=0 // pred_region
    _
  $region13: #{uc5_forward.1} parent=0 // pred_fallthru
    _
  // Predicated region
  $region14: #{uc5_forward.1} parent=0 // pred_check
    _
  $region15: #{uc5_forward.1} parent=0 // pred_check_branch
    %24 = sbr.rel (0) target = $region17
  $region16: #{uc5_forward.1} parent=0 // pred_region
    _
  $region17: #{uc5_forward.1} parent=0 // pred_fallthru
    _
  // Predicated region
  $region18: #{uc5_forward.1} parent=0 // pred_check
    _
  $region19: #{uc5_forward.1} parent=0 // pred_check_branch
    %26 = sbr.rel (0) target = $region21
  $region20: #{uc5_forward.1} parent=0 // pred_region
    _
  $region21: #{uc5_forward.1} parent=0 // pred_fallthru
    _
  // Predicated region
  $region22: #{uc5_forward.1} parent=0 // pred_check
    _
  $region23: #{uc5_forward.1} parent=0 // pred_check_branch
    %28 = sbr.rel (0) target = $region25
  $region24: #{uc5_forward.1} parent=0 // pred_region
    _
  $region25: #{uc5_forward.1} parent=0 // pred_fallthru
    _
  // Predicated region
  $region26: #{uc5_forward.1} parent=0 // pred_check
    _
  $region27: #{uc5_forward.1} parent=0 // pred_check_branch
    %30 = sbr.rel (0) target = $region29
  $region28: #{uc5_forward.1} parent=0 // pred_region
    _
  $region29: #{uc5_forward.1} parent=0 // pred_fallthru
    _
  // Predicated region
  $region30: #{uc5_forward.1} parent=0 // pred_check
    _
  $region31: #{uc5_forward.1} parent=0 // pred_check_branch
    %32 = sbr.rel (0) target = $region33
  $region32: #{uc5_forward.1} parent=0 // pred_region
    _
  $region33: #{uc5_forward.1} parent=0 // pred_fallthru
    _
  // Predicated region
  $region34: #{uc5_forward.1} parent=0 // pred_check
    _
  $region35: #{uc5_forward.1} parent=0 // pred_check_branch
    %34 = sbr.rel (0) target = $region37
  $region36: #{uc5_forward.1} parent=0 // pred_region
    _
  $region37: #{uc5_forward.1} parent=0 // pred_fallthru
    _
  %v36 = vld [vmem:[%s0] sm:$0xf]
  %v37 = vld [vmem:[%s0 + $0x4] sm:$0xf]
  %v38 = vld [vmem:[%s0 + $0x8] sm:$0xf]
  %v39 = vld [vmem:[%s0 + $0xc] sm:$0xf]
  %v40 = vld [vmem:[%s0 + $0x10] sm:$0xf]
  %v41 = vld [vmem:[%s0 + $0x14] sm:$0xf]
  %v42 = vld [vmem:[%s0 + $0x18] sm:$0xf]
  %v43 = vld [vmem:[%s0 + $0x1c] sm:$0xf]
  %v44 = vld [vmem:[%s0 + $0x20] sm:$0xf]
  %v45 = vld [vmem:[%s0 + $0x24] sm:$0xf]
  %v46 = vld [vmem:[%s0 + $0x28] sm:$0xf]
  %v47 = vld [vmem:[%s0 + $0x2c] sm:$0xf]
  %v48 = vld [vmem:[%s0 + $0x30] sm:$0xf]
  %v49 = vld [vmem:[%s0 + $0x34] sm:$0xf]
  %v50 = vld [vmem:[%s0 + $0x38] sm:$0xf]
  %v51 = vld [vmem:[%s0 + $0x3c] sm:$0xf]
  %v52 = vld [vmem:[%s0 + $0x40] sm:$0xf]
  %v53 = vld [vmem:[%s0 + $0x44] sm:$0xf]
  %v54 = vld [vmem:[%s0 + $0x48] sm:$0xf]
  %v55 = vld [vmem:[%s0 + $0x4c] sm:$0xf]
  %v56 = vld [vmem:[%s0 + $0x50] sm:$0xf]
  %v57 = vld [vmem:[%s0 + $0x54] sm:$0xf]
  %v58 = vld [vmem:[%s0 + $0x58] sm:$0xf]
  %v59 = vld [vmem:[%s0 + $0x5c] sm:$0xf]
  %v60 = vld [vmem:[%s0 + $0x60] sm:$0xf]
  %v61 = vld [vmem:[%s0 + $0x64] sm:$0xf]
  %v62 = vld [vmem:[%s0 + $0x68] sm:$0xf]
  %v63 = vld [vmem:[%s0 + $0x6c] sm:$0xf]
  %v64 = vld [vmem:[%s0 + $0x70] sm:$0xf]
  %v65 = vld [vmem:[%s0 + $0x74] sm:$0xf]
  %v66 = vld [vmem:[%s0 + $0x78] sm:$0xf]
  %v67 = vld [vmem:[%s0 + $0x7c] sm:$0xf]
  %v68 = vld [vmem:[%s0 + $0x80] sm:$0xf]
  %v69 = vld [vmem:[%s0 + $0x84] sm:$0xf]
  %v70 = vld [vmem:[%s0 + $0x88] sm:$0xf]
  %v71 = vld [vmem:[%s0 + $0x8c] sm:$0xf]
  %v72 = vld [vmem:[%s0 + $0x90] sm:$0xf]
  %v73 = vld [vmem:[%s0 + $0x94] sm:$0xf]
  %v74 = vld [vmem:[%s0 + $0x98] sm:$0xf]
  %v75 = vld [vmem:[%s0 + $0x9c] sm:$0xf]
  %v76 = vld [vmem:[%s0 + $0xa0] sm:$0xf]
  %v77 = vld [vmem:[%s0 + $0xa4] sm:$0xf]
  %v78 = vld [vmem:[%s0 + $0xa8] sm:$0xf]
  %v79 = vld [vmem:[%s0 + $0xac] sm:$0xf]
  %v80 = vld [vmem:[%s0 + $0xb0] sm:$0xf]
  %v81 = vld [vmem:[%s0 + $0xb4] sm:$0xf]
  %v82 = vld [vmem:[%s0 + $0xb8] sm:$0xf]
  %v83 = vld [vmem:[%s0 + $0xbc] sm:$0xf]
  %v84 = vld [vmem:[%s0 + $0xc0] sm:$0xf]
  %v85 = vld [vmem:[%s0 + $0xc4] sm:$0xf]
  %v86 = vld [vmem:[%s0 + $0xc8] sm:$0xf]
  %v87 = vld [vmem:[%s0 + $0xcc] sm:$0xf]
  %v88 = vld [vmem:[%s0 + $0xd0] sm:$0xf]
  %v89 = vld [vmem:[%s0 + $0xd4] sm:$0xf]
  %v90 = vld [vmem:[%s0 + $0xd8] sm:$0xf]
  %v91 = vld [vmem:[%s0 + $0xdc] sm:$0xf]
  %v92 = vld [vmem:[%s0 + $0xe0] sm:$0xf]
  %v93 = vld [vmem:[%s0 + $0xe4] sm:$0xf]
  %v94 = vld [vmem:[%s0 + $0xe8] sm:$0xf]
  %v95 = vld [vmem:[%s0 + $0xec] sm:$0xf]
  %v96 = vld [vmem:[%s0 + $0xf0] sm:$0xf]
  %v97 = vld [vmem:[%s0 + $0xf4] sm:$0xf]
  %v98 = vld [vmem:[%s0 + $0xf8] sm:$0xf]
  %v99 = vld [vmem:[%s0 + $0xfc] sm:$0xf]
  %v100 = vld [vmem:[%s3] sm:$0xf]
  %v101 = vld [vmem:[%s3 + $0x4] sm:$0xf]
  %v102 = vld [vmem:[%s3 + $0x8] sm:$0xf]
  %v103 = vld [vmem:[%s3 + $0xc] sm:$0xf]
  %v104 = vld [vmem:[%s3 + $0x10] sm:$0xf]
  %v105 = vld [vmem:[%s3 + $0x14] sm:$0xf]
  %v106 = vld [vmem:[%s3 + $0x18] sm:$0xf]
  %v107 = vld [vmem:[%s3 + $0x1c] sm:$0xf]
  %v108 = vld [vmem:[%s3 + $0x20] sm:$0xf]
  %v109 = vld [vmem:[%s3 + $0x24] sm:$0xf]
  %v110 = vld [vmem:[%s3 + $0x28] sm:$0xf]
  %v111 = vld [vmem:[%s3 + $0x2c] sm:$0xf]
  %v112 = vld [vmem:[%s3 + $0x30] sm:$0xf]
  %v113 = vld [vmem:[%s3 + $0x34] sm:$0xf]
  %v114 = vld [vmem:[%s3 + $0x38] sm:$0xf]
  %v115 = vld [vmem:[%s3 + $0x3c] sm:$0xf]
  %v116 = vld [vmem:[%s8] sm:$0x1]
  %v117 = vlaneseq
  %v118 = vshrl.u32 %v117, 7
  %v119 = vsub.s32 0, %v118
  %v120 = vrot.slane %v116, %v119
  %v185 = vunpack.c.l.b16 %v36
  %v186 = vunpack.c.l.b16 %v37
  %v187 = vunpack.c.l.b16 %v38
  %v188 = vunpack.c.l.b16 %v39
  %v189 = vunpack.c.l.b16 %v40
  %v190 = vunpack.c.l.b16 %v41
  %v191 = vunpack.c.l.b16 %v42
  %v192 = vunpack.c.l.b16 %v43
  %v193 = vunpack.c.l.b16 %v44
  %v194 = vunpack.c.l.b16 %v45
  %v195 = vunpack.c.l.b16 %v46
  %v196 = vunpack.c.l.b16 %v47
  %v197 = vunpack.c.l.b16 %v48
  %v198 = vunpack.c.l.b16 %v49
  %v199 = vunpack.c.l.b16 %v50
  %v200 = vunpack.c.l.b16 %v51
  %v201 = vunpack.c.l.b16 %v52
  %v202 = vunpack.c.l.b16 %v53
  %v203 = vunpack.c.l.b16 %v54
  %v204 = vunpack.c.l.b16 %v55
  %v205 = vunpack.c.l.b16 %v56
  %v206 = vunpack.c.l.b16 %v57
  %v207 = vunpack.c.l.b16 %v58
  %v208 = vunpack.c.l.b16 %v59
  %v209 = vunpack.c.l.b16 %v60
  %v210 = vunpack.c.l.b16 %v61
  %v211 = vunpack.c.l.b16 %v62
  %v212 = vunpack.c.l.b16 %v63
  %v213 = vunpack.c.l.b16 %v64
  %v214 = vunpack.c.l.b16 %v65
  %v215 = vunpack.c.l.b16 %v66
  %v216 = vunpack.c.l.b16 %v67
  %v217 = vunpack.c.l.b16 %v68
  %v218 = vunpack.c.l.b16 %v69
  %v219 = vunpack.c.l.b16 %v70
  %v220 = vunpack.c.l.b16 %v71
  %v221 = vunpack.c.l.b16 %v72
  %v222 = vunpack.c.l.b16 %v73
  %v223 = vunpack.c.l.b16 %v74
  %v224 = vunpack.c.l.b16 %v75
  %v225 = vunpack.c.l.b16 %v76
  %v226 = vunpack.c.l.b16 %v77
  %v227 = vunpack.c.l.b16 %v78
  %v228 = vunpack.c.l.b16 %v79
  %v229 = vunpack.c.l.b16 %v80
  %v230 = vunpack.c.l.b16 %v81
  %v231 = vunpack.c.l.b16 %v82
  %v232 = vunpack.c.l.b16 %v83
  %v233 = vunpack.c.l.b16 %v84
  %v234 = vunpack.c.l.b16 %v85
  %v235 = vunpack.c.l.b16 %v86
  %v236 = vunpack.c.l.b16 %v87
  %v237 = vunpack.c.l.b16 %v88
  %v238 = vunpack.c.l.b16 %v89
  %v239 = vunpack.c.l.b16 %v90
  %v240 = vunpack.c.l.b16 %v91
  %v241 = vunpack.c.l.b16 %v92
  %v242 = vunpack.c.l.b16 %v93
  %v243 = vunpack.c.l.b16 %v94
  %v244 = vunpack.c.l.b16 %v95
  %v245 = vunpack.c.l.b16 %v96
  %v246 = vunpack.c.l.b16 %v97
  %v247 = vunpack.c.l.b16 %v98
  %v248 = vunpack.c.l.b16 %v99
  %v249 = vpack.c.b16 %v186, %v185
  %v250 = vpack.c.b16 %v188, %v187
  %v251 = vpack.c.b16 %v190, %v189
  %v252 = vpack.c.b16 %v192, %v191
  %v253 = vpack.c.b16 %v194, %v193
  %v254 = vpack.c.b16 %v196, %v195
  %v255 = vpack.c.b16 %v198, %v197
  %v256 = vpack.c.b16 %v200, %v199
  %v257 = vpack.c.b16 %v202, %v201
  %v258 = vpack.c.b16 %v204, %v203
  %v259 = vpack.c.b16 %v206, %v205
  %v260 = vpack.c.b16 %v208, %v207
  %v261 = vpack.c.b16 %v210, %v209
  %v262 = vpack.c.b16 %v212, %v211
  %v263 = vpack.c.b16 %v214, %v213
  %v264 = vpack.c.b16 %v216, %v215
  %v265 = vpack.c.b16 %v218, %v217
  %v266 = vpack.c.b16 %v220, %v219
  %v267 = vpack.c.b16 %v222, %v221
  %v268 = vpack.c.b16 %v224, %v223
  %v269 = vpack.c.b16 %v226, %v225
  %v270 = vpack.c.b16 %v228, %v227
  %v271 = vpack.c.b16 %v230, %v229
  %v272 = vpack.c.b16 %v232, %v231
  %v273 = vpack.c.b16 %v234, %v233
  %v274 = vpack.c.b16 %v236, %v235
  %v275 = vpack.c.b16 %v238, %v237
  %v276 = vpack.c.b16 %v240, %v239
  %v277 = vpack.c.b16 %v242, %v241
  %v278 = vpack.c.b16 %v244, %v243
  %v279 = vpack.c.b16 %v246, %v245
  %v280 = vpack.c.b16 %v248, %v247
  %v329 = vunpack.c.l.b16 %v100
  %v330 = vunpack.c.l.b16 %v101
  %v331 = vunpack.c.l.b16 %v102
  %v332 = vunpack.c.l.b16 %v103
  %v333 = vunpack.c.l.b16 %v104
  %v334 = vunpack.c.l.b16 %v105
  %v335 = vunpack.c.l.b16 %v106
  %v336 = vunpack.c.l.b16 %v107
  %v337 = vunpack.c.l.b16 %v108
  %v338 = vunpack.c.l.b16 %v109
  %v339 = vunpack.c.l.b16 %v110
  %v340 = vunpack.c.l.b16 %v111
  %v341 = vunpack.c.l.b16 %v112
  %v342 = vunpack.c.l.b16 %v113
  %v343 = vunpack.c.l.b16 %v114
  %v344 = vunpack.c.l.b16 %v115
  %v345 = vpack.c.b16 %v330, %v329
  %v346 = vpack.c.b16 %v332, %v331
  %v347 = vpack.c.b16 %v334, %v333
  %v348 = vpack.c.b16 %v336, %v335
  %v349 = vpack.c.b16 %v338, %v337
  %v350 = vpack.c.b16 %v340, %v339
  %v351 = vpack.c.b16 %v342, %v341
  %v352 = vpack.c.b16 %v344, %v343
  %361 = vmatprep.subr.bf16.mxu0 0
  %362 = vmatpush1.bf16.msra.mxu0 %v345
  %363 = vmatprep.subr.bf16.mxu0 0
  %364 = vmatpush1.bf16.msra.mxu0 %v346
  %365 = vmatprep.subr.bf16.mxu0 0
  %366 = vmatpush1.bf16.msra.mxu0 %v347
  %367 = vmatprep.subr.bf16.mxu0 0
  %368 = vmatpush1.bf16.msra.mxu0 %v348
  %369 = vmatprep.subr.bf16.mxu0 0
  %370 = vmatpush1.bf16.msra.mxu0 %v349
  %371 = vmatprep.subr.bf16.mxu0 0
  %372 = vmatpush1.bf16.msra.mxu0 %v350
  %373 = vmatprep.subr.bf16.mxu0 0
  %374 = vmatpush1.bf16.msra.mxu0 %v351
  %375 = vmatprep.subr.bf16.mxu0 0
  %376 = vmatpush1.bf16.msra.mxu0 %v352
  %377 = vmatprep.subr.bf16.mxu0 0
  %378 = vmatpush1.bf16.msra.mxu0 0
  %379 = vmatprep.subr.bf16.mxu0 0
  %380 = vmatpush1.bf16.msra.mxu0 0
  %381 = vmatprep.subr.bf16.mxu0 0
  %382 = vmatpush1.bf16.msra.mxu0 0
  %383 = vmatprep.subr.bf16.mxu0 0
  %384 = vmatpush1.bf16.msra.mxu0 0
  %385 = vmatprep.subr.bf16.mxu0 0
  %386 = vmatpush1.bf16.msra.mxu0 0
  %387 = vmatprep.subr.bf16.mxu0 0
  %388 = vmatpush1.bf16.msra.mxu0 0
  %389 = vmatprep.subr.bf16.mxu0 0
  %390 = vmatpush1.bf16.msra.mxu0 0
  %391 = vmatprep.subr.bf16.mxu0 0
  %392 = vmatpush1.bf16.msra.mxu0 0
  %393 = vmatprep.mubr.bf16.mxu0 0
  %394 = vmatmul.mubr.bf16.gmra.mrb[0].mxu0 %v249
  %v395 = vpop.f32.mrb[0].mxu0
  %v396 = vadd.f32 %v120, %v395
  %v397 = vpop.f32.mrb[0].mxu0
  %v398 = vpop.f32.mrb[0].mxu0
  %v399 = vadd.f32 %v120, %v398
  %v400 = vpop.f32.mrb[0].mxu0
  %401 = vmatprep.mubr.bf16.mxu0 0
  %402 = vmatmul.mubr.bf16.gmra.mrb[0].mxu0 %v250
  %v403 = vpop.f32.mrb[0].mxu0
  %v404 = vadd.f32 %v120, %v403
  %v405 = vpop.f32.mrb[0].mxu0
  %v406 = vpop.f32.mrb[0].mxu0
  %v407 = vadd.f32 %v120, %v406
  %v408 = vpop.f32.mrb[0].mxu0
  %409 = vmatprep.mubr.bf16.mxu0 0
  %410 = vmatmul.mubr.bf16.gmra.mrb[0].mxu0 %v251
  %v411 = vpop.f32.mrb[0].mxu0
  %v412 = vadd.f32 %v120, %v411
  %v413 = vpop.f32.mrb[0].mxu0
  %v414 = vpop.f32.mrb[0].mxu0
  %v415 = vadd.f32 %v120, %v414
  %v416 = vpop.f32.mrb[0].mxu0
  %417 = vmatprep.mubr.bf16.mxu0 0
  %418 = vmatmul.mubr.bf16.gmra.mrb[0].mxu0 %v252
  %v419 = vpop.f32.mrb[0].mxu0
  %v420 = vadd.f32 %v120, %v419
  %v421 = vpop.f32.mrb[0].mxu0
  %v422 = vpop.f32.mrb[0].mxu0
  %v423 = vadd.f32 %v120, %v422
  %v424 = vpop.f32.mrb[0].mxu0
  %425 = vmatprep.mubr.bf16.mxu0 0
  %426 = vmatmul.mubr.bf16.gmra.mrb[0].mxu0 %v253
  %v427 = vpop.f32.mrb[0].mxu0
  %v428 = vadd.f32 %v120, %v427
  %v429 = vpop.f32.mrb[0].mxu0
  %v430 = vpop.f32.mrb[0].mxu0
  %v431 = vadd.f32 %v120, %v430
  %v432 = vpop.f32.mrb[0].mxu0
  %433 = vmatprep.mubr.bf16.mxu0 0
  %434 = vmatmul.mubr.bf16.gmra.mrb[0].mxu0 %v254
  %v435 = vpop.f32.mrb[0].mxu0
  %v436 = vadd.f32 %v120, %v435
  %v437 = vpop.f32.mrb[0].mxu0
  %v438 = vpop.f32.mrb[0].mxu0
  %v439 = vadd.f32 %v120, %v438
  %v440 = vpop.f32.mrb[0].mxu0
  %441 = vmatprep.mubr.bf16.mxu0 0
  %442 = vmatmul.mubr.bf16.gmra.mrb[0].mxu0 %v255
  %v443 = vpop.f32.mrb[0].mxu0
  %v444 = vadd.f32 %v120, %v443
  %v445 = vpop.f32.mrb[0].mxu0
  %v446 = vpop.f32.mrb[0].mxu0
  %v447 = vadd.f32 %v120, %v446
  %v448 = vpop.f32.mrb[0].mxu0
  %449 = vmatprep.mubr.bf16.mxu0 0
  %450 = vmatmul.mubr.bf16.gmra.mrb[0].mxu0 %v256
  %v451 = vpop.f32.mrb[0].mxu0
  %v452 = vadd.f32 %v120, %v451
  %v453 = vpop.f32.mrb[0].mxu0
  %v454 = vpop.f32.mrb[0].mxu0
  %v455 = vadd.f32 %v120, %v454
  %v456 = vpop.f32.mrb[0].mxu0
  %457 = vmatprep.mubr.bf16.mxu0 0
  %458 = vmatmul.mubr.bf16.gmra.mrb[0].mxu0 %v257
  %v459 = vpop.f32.mrb[0].mxu0
  %v460 = vadd.f32 %v120, %v459
  %v461 = vpop.f32.mrb[0].mxu0
  %v462 = vpop.f32.mrb[0].mxu0
  %v463 = vadd.f32 %v120, %v462
  %v464 = vpop.f32.mrb[0].mxu0
  %465 = vmatprep.mubr.bf16.mxu0 0
  %466 = vmatmul.mubr.bf16.gmra.mrb[0].mxu0 %v258
  %v467 = vpop.f32.mrb[0].mxu0
  %v468 = vadd.f32 %v120, %v467
  %v469 = vpop.f32.mrb[0].mxu0
  %v470 = vpop.f32.mrb[0].mxu0
  %v471 = vadd.f32 %v120, %v470
  %v472 = vpop.f32.mrb[0].mxu0
  %473 = vmatprep.mubr.bf16.mxu0 0
  %474 = vmatmul.mubr.bf16.gmra.mrb[0].mxu0 %v259
  %v475 = vpop.f32.mrb[0].mxu0
  %v476 = vadd.f32 %v120, %v475
  %v477 = vpop.f32.mrb[0].mxu0
  %v478 = vpop.f32.mrb[0].mxu0
  %v479 = vadd.f32 %v120, %v478
  %v480 = vpop.f32.mrb[0].mxu0
  %481 = vmatprep.mubr.bf16.mxu0 0
  %482 = vmatmul.mubr.bf16.gmra.mrb[0].mxu0 %v260
  %v483 = vpop.f32.mrb[0].mxu0
  %v484 = vadd.f32 %v120, %v483
  %v485 = vpop.f32.mrb[0].mxu0
  %v486 = vpop.f32.mrb[0].mxu0
  %v487 = vadd.f32 %v120, %v486
  %v488 = vpop.f32.mrb[0].mxu0
  %489 = vmatprep.mubr.bf16.mxu0 0
  %490 = vmatmul.mubr.bf16.gmra.mrb[0].mxu0 %v261
  %v491 = vpop.f32.mrb[0].mxu0
  %v492 = vadd.f32 %v120, %v491
  %v493 = vpop.f32.mrb[0].mxu0
  %v494 = vpop.f32.mrb[0].mxu0
  %v495 = vadd.f32 %v120, %v494
  %v496 = vpop.f32.mrb[0].mxu0
  %497 = vmatprep.mubr.bf16.mxu0 0
  %498 = vmatmul.mubr.bf16.gmra.mrb[0].mxu0 %v262
  %v499 = vpop.f32.mrb[0].mxu0
  %v500 = vadd.f32 %v120, %v499
  %v501 = vpop.f32.mrb[0].mxu0
  %v502 = vpop.f32.mrb[0].mxu0
  %v503 = vadd.f32 %v120, %v502
  %v504 = vpop.f32.mrb[0].mxu0
  %505 = vmatprep.mubr.bf16.mxu0 0
  %506 = vmatmul.mubr.bf16.gmra.mrb[0].mxu0 %v263
  %v507 = vpop.f32.mrb[0].mxu0
  %v508 = vadd.f32 %v120, %v507
  %v509 = vpop.f32.mrb[0].mxu0
  %v510 = vpop.f32.mrb[0].mxu0
  %v511 = vadd.f32 %v120, %v510
  %v512 = vpop.f32.mrb[0].mxu0
  %513 = vmatprep.mubr.bf16.mxu0 0
  %514 = vmatmul.mubr.bf16.gmra.mrb[0].mxu0 %v264
  %v515 = vpop.f32.mrb[0].mxu0
  %v516 = vadd.f32 %v120, %v515
  %v517 = vpop.f32.mrb[0].mxu0
  %v518 = vpop.f32.mrb[0].mxu0
  %v519 = vadd.f32 %v120, %v518
  %v520 = vpop.f32.mrb[0].mxu0
  %521 = vmatprep.mubr.bf16.mxu0 0
  %522 = vmatmul.mubr.bf16.gmra.mrb[0].mxu0 %v265
  %v523 = vpop.f32.mrb[0].mxu0
  %v524 = vadd.f32 %v120, %v523
  %v525 = vpop.f32.mrb[0].mxu0
  %v526 = vpop.f32.mrb[0].mxu0
  %v527 = vadd.f32 %v120, %v526
  %v528 = vpop.f32.mrb[0].mxu0
  %529 = vmatprep.mubr.bf16.mxu0 0
  %530 = vmatmul.mubr.bf16.gmra.mrb[0].mxu0 %v266
  %v531 = vpop.f32.mrb[0].mxu0
  %v532 = vadd.f32 %v120, %v531
  %v533 = vpop.f32.mrb[0].mxu0
  %v534 = vpop.f32.mrb[0].mxu0
  %v535 = vadd.f32 %v120, %v534
  %v536 = vpop.f32.mrb[0].mxu0
  %537 = vmatprep.mubr.bf16.mxu0 0
  %538 = vmatmul.mubr.bf16.gmra.mrb[0].mxu0 %v267
  %v539 = vpop.f32.mrb[0].mxu0
  %v540 = vadd.f32 %v120, %v539
  %v541 = vpop.f32.mrb[0].mxu0
  %v542 = vpop.f32.mrb[0].mxu0
  %v543 = vadd.f32 %v120, %v542
  %v544 = vpop.f32.mrb[0].mxu0
  %545 = vmatprep.mubr.bf16.mxu0 0
  %546 = vmatmul.mubr.bf16.gmra.mrb[0].mxu0 %v268
  %v547 = vpop.f32.mrb[0].mxu0
  %v548 = vadd.f32 %v120, %v547
  %v549 = vpop.f32.mrb[0].mxu0
  %v550 = vpop.f32.mrb[0].mxu0
  %v551 = vadd.f32 %v120, %v550
  %v552 = vpop.f32.mrb[0].mxu0
  %553 = vmatprep.mubr.bf16.mxu0 0
  %554 = vmatmul.mubr.bf16.gmra.mrb[0].mxu0 %v269
  %v555 = vpop.f32.mrb[0].mxu0
  %v556 = vadd.f32 %v120, %v555
  %v557 = vpop.f32.mrb[0].mxu0
  %v558 = vpop.f32.mrb[0].mxu0
  %v559 = vadd.f32 %v120, %v558
  %v560 = vpop.f32.mrb[0].mxu0
  %561 = vmatprep.mubr.bf16.mxu0 0
  %562 = vmatmul.mubr.bf16.gmra.mrb[0].mxu0 %v270
  %v563 = vpop.f32.mrb[0].mxu0
  %v564 = vadd.f32 %v120, %v563
  %v565 = vpop.f32.mrb[0].mxu0
  %v566 = vpop.f32.mrb[0].mxu0
  %v567 = vadd.f32 %v120, %v566
  %v568 = vpop.f32.mrb[0].mxu0
  %569 = vmatprep.mubr.bf16.mxu0 0
  %570 = vmatmul.mubr.bf16.gmra.mrb[0].mxu0 %v271
  %v571 = vpop.f32.mrb[0].mxu0
  %v572 = vadd.f32 %v120, %v571
  %v573 = vpop.f32.mrb[0].mxu0
  %v574 = vpop.f32.mrb[0].mxu0
  %v575 = vadd.f32 %v120, %v574
  %v576 = vpop.f32.mrb[0].mxu0
  %577 = vmatprep.mubr.bf16.mxu0 0
  %578 = vmatmul.mubr.bf16.gmra.mrb[0].mxu0 %v272
  %v579 = vpop.f32.mrb[0].mxu0
  %v580 = vadd.f32 %v120, %v579
  %v581 = vpop.f32.mrb[0].mxu0
  %v582 = vpop.f32.mrb[0].mxu0
  %v583 = vadd.f32 %v120, %v582
  %v584 = vpop.f32.mrb[0].mxu0
  %585 = vmatprep.mubr.bf16.mxu0 0
  %586 = vmatmul.mubr.bf16.gmra.mrb[0].mxu0 %v273
  %v587 = vpop.f32.mrb[0].mxu0
  %v588 = vadd.f32 %v120, %v587
  %v589 = vpop.f32.mrb[0].mxu0
  %v590 = vpop.f32.mrb[0].mxu0
  %v591 = vadd.f32 %v120, %v590
  %v592 = vpop.f32.mrb[0].mxu0
  %593 = vmatprep.mubr.bf16.mxu0 0
  %594 = vmatmul.mubr.bf16.gmra.mrb[0].mxu0 %v274
  %v595 = vpop.f32.mrb[0].mxu0
  %v596 = vadd.f32 %v120, %v595
  %v597 = vpop.f32.mrb[0].mxu0
  %v598 = vpop.f32.mrb[0].mxu0
  %v599 = vadd.f32 %v120, %v598
  %v600 = vpop.f32.mrb[0].mxu0
  %601 = vmatprep.mubr.bf16.mxu0 0
  %602 = vmatmul.mubr.bf16.gmra.mrb[0].mxu0 %v275
  %v603 = vpop.f32.mrb[0].mxu0
  %v604 = vadd.f32 %v120, %v603
  %v605 = vpop.f32.mrb[0].mxu0
  %v606 = vpop.f32.mrb[0].mxu0
  %v607 = vadd.f32 %v120, %v606
  %v608 = vpop.f32.mrb[0].mxu0
  %609 = vmatprep.mubr.bf16.mxu0 0
  %610 = vmatmul.mubr.bf16.gmra.mrb[0].mxu0 %v276
  %v611 = vpop.f32.mrb[0].mxu0
  %v612 = vadd.f32 %v120, %v611
  %v613 = vpop.f32.mrb[0].mxu0
  %v614 = vpop.f32.mrb[0].mxu0
  %v615 = vadd.f32 %v120, %v614
  %v616 = vpop.f32.mrb[0].mxu0
  %617 = vmatprep.mubr.bf16.mxu0 0
  %618 = vmatmul.mubr.bf16.gmra.mrb[0].mxu0 %v277
  %v619 = vpop.f32.mrb[0].mxu0
  %v620 = vadd.f32 %v120, %v619
  %v621 = vpop.f32.mrb[0].mxu0
  %v622 = vpop.f32.mrb[0].mxu0
  %v623 = vadd.f32 %v120, %v622
  %v624 = vpop.f32.mrb[0].mxu0
  %625 = vmatprep.mubr.bf16.mxu0 0
  %626 = vmatmul.mubr.bf16.gmra.mrb[0].mxu0 %v278
  %v627 = vpop.f32.mrb[0].mxu0
  %v628 = vadd.f32 %v120, %v627
  %v629 = vpop.f32.mrb[0].mxu0
  %v630 = vpop.f32.mrb[0].mxu0
  %v631 = vadd.f32 %v120, %v630
  %v632 = vpop.f32.mrb[0].mxu0
  %633 = vmatprep.mubr.bf16.mxu0 0
  %634 = vmatmul.mubr.bf16.gmra.mrb[0].mxu0 %v279
  %v635 = vpop.f32.mrb[0].mxu0
  %v636 = vadd.f32 %v120, %v635
  %v637 = vpop.f32.mrb[0].mxu0
  %v638 = vpop.f32.mrb[0].mxu0
  %v639 = vadd.f32 %v120, %v638
  %v640 = vpop.f32.mrb[0].mxu0
  %641 = vmatprep.mubr.bf16.mxu0 0
  %642 = vmatmul.mubr.bf16.gmra.mrb[0].mxu0 %v280
  %v643 = vpop.f32.mrb[0].mxu0
  %v644 = vadd.f32 %v120, %v643
  %v645 = vpop.f32.mrb[0].mxu0
  %v646 = vpop.f32.mrb[0].mxu0
  %v647 = vadd.f32 %v120, %v646
  %v648 = vpop.f32.mrb[0].mxu0
  %649 = vdwg.mxu0
  %v650 = vmax.f32 %v396, 0.0
  %v651 = vmax.f32 %v399, 0.0
  %v652 = vmax.f32 %v404, 0.0
  %v653 = vmax.f32 %v407, 0.0
  %v654 = vmax.f32 %v412, 0.0
  %v655 = vmax.f32 %v415, 0.0
  %v656 = vmax.f32 %v420, 0.0
  %v657 = vmax.f32 %v423, 0.0
  %v658 = vmax.f32 %v428, 0.0
  %v659 = vmax.f32 %v431, 0.0
  %v660 = vmax.f32 %v436, 0.0
  %v661 = vmax.f32 %v439, 0.0
  %v662 = vmax.f32 %v444, 0.0
  %v663 = vmax.f32 %v447, 0.0
  %v664 = vmax.f32 %v452, 0.0
  %v665 = vmax.f32 %v455, 0.0
  %v666 = vmax.f32 %v460, 0.0
  %v667 = vmax.f32 %v463, 0.0
  %v668 = vmax.f32 %v468, 0.0
  %v669 = vmax.f32 %v471, 0.0
  %v670 = vmax.f32 %v476, 0.0
  %v671 = vmax.f32 %v479, 0.0
  %v672 = vmax.f32 %v484, 0.0
  %v673 = vmax.f32 %v487, 0.0
  %v674 = vmax.f32 %v492, 0.0
  %v675 = vmax.f32 %v495, 0.0
  %v676 = vmax.f32 %v500, 0.0
  %v677 = vmax.f32 %v503, 0.0
  %v678 = vmax.f32 %v508, 0.0
  %v679 = vmax.f32 %v511, 0.0
  %v680 = vmax.f32 %v516, 0.0
  %v681 = vmax.f32 %v519, 0.0
  %v682 = vmax.f32 %v524, 0.0
  %v683 = vmax.f32 %v527, 0.0
  %v684 = vmax.f32 %v532, 0.0
  %v685 = vmax.f32 %v535, 0.0
  %v686 = vmax.f32 %v540, 0.0
  %v687 = vmax.f32 %v543, 0.0
  %v688 = vmax.f32 %v548, 0.0
  %v689 = vmax.f32 %v551, 0.0
  %v690 = vmax.f32 %v556, 0.0
  %v691 = vmax.f32 %v559, 0.0
  %v692 = vmax.f32 %v564, 0.0
  %v693 = vmax.f32 %v567, 0.0
  %v694 = vmax.f32 %v572, 0.0
  %v695 = vmax.f32 %v575, 0.0
  %v696 = vmax.f32 %v580, 0.0
  %v697 = vmax.f32 %v583, 0.0
  %v698 = vmax.f32 %v588, 0.0
  %v699 = vmax.f32 %v591, 0.0
  %v700 = vmax.f32 %v596, 0.0
  %v701 = vmax.f32 %v599, 0.0
  %v702 = vmax.f32 %v604, 0.0
  %v703 = vmax.f32 %v607, 0.0
  %v704 = vmax.f32 %v612, 0.0
  %v705 = vmax.f32 %v615, 0.0
  %v706 = vmax.f32 %v620, 0.0
  %v707 = vmax.f32 %v623, 0.0
  %v708 = vmax.f32 %v628, 0.0
  %v709 = vmax.f32 %v631, 0.0
  %v710 = vmax.f32 %v636, 0.0
  %v711 = vmax.f32 %v639, 0.0
  %v712 = vmax.f32 %v644, 0.0
  %v713 = vmax.f32 %v647, 0.0
  %v714 = vld [vmem:[%s2] sm:$0xff]
  %v715 = vld [vmem:[%s2 + $0x8] sm:$0xff]
  %v716 = vpack.c.bf16 %v651, %v650
  %v717 = vpack.c.bf16 %v653, %v652
  %v718 = vpack.c.bf16 %v655, %v654
  %v719 = vpack.c.bf16 %v657, %v656
  %v720 = vpack.c.bf16 %v659, %v658
  %v721 = vpack.c.bf16 %v661, %v660
  %v722 = vpack.c.bf16 %v663, %v662
  %v723 = vpack.c.bf16 %v665, %v664
  %v724 = vpack.c.bf16 %v667, %v666
  %v725 = vpack.c.bf16 %v669, %v668
  %v726 = vpack.c.bf16 %v671, %v670
  %v727 = vpack.c.bf16 %v673, %v672
  %v728 = vpack.c.bf16 %v675, %v674
  %v729 = vpack.c.bf16 %v677, %v676
  %v730 = vpack.c.bf16 %v679, %v678
  %v731 = vpack.c.bf16 %v681, %v680
  %v732 = vpack.c.bf16 %v683, %v682
  %v733 = vpack.c.bf16 %v685, %v684
  %v734 = vpack.c.bf16 %v687, %v686
  %v735 = vpack.c.bf16 %v689, %v688
  %v736 = vpack.c.bf16 %v691, %v690
  %v737 = vpack.c.bf16 %v693, %v692
  %v738 = vpack.c.bf16 %v695, %v694
  %v739 = vpack.c.bf16 %v697, %v696
  %v740 = vpack.c.bf16 %v699, %v698
  %v741 = vpack.c.bf16 %v701, %v700
  %v742 = vpack.c.bf16 %v703, %v702
  %v743 = vpack.c.bf16 %v705, %v704
  %v744 = vpack.c.bf16 %v707, %v706
  %v745 = vpack.c.bf16 %v709, %v708
  %v746 = vpack.c.bf16 %v711, %v710
  %v747 = vpack.c.bf16 %v713, %v712
  %v750 = vunpack.c.l.b16 %v714
  %v751 = vunpack.c.h.b16 %v714
  %v752 = vunpack.c.l.b16 %v715
  %v753 = vunpack.c.h.b16 %v715
  %v754 = vpack.c.b16 %v750, %v750
  %v755 = vpack.c.b16 %v751, %v751
  %v756 = vpack.c.b16 %v752, %v752
  %v757 = vpack.c.b16 %v753, %v753
  %762 = vmatprep.subr.bf16.mxu0 0
  %763 = vmatpush1.bf16.msra.mxu0 %v716
  %764 = vmatprep.subr.bf16.mxu0 0
  %765 = vmatpush1.bf16.msra.mxu0 %v717
  %766 = vmatprep.subr.bf16.mxu0 0
  %767 = vmatpush1.bf16.msra.mxu0 %v718
  %768 = vmatprep.subr.bf16.mxu0 0
  %769 = vmatpush1.bf16.msra.mxu0 %v719
  %770 = vmatprep.subr.bf16.mxu0 0
  %771 = vmatpush1.bf16.msra.mxu0 %v720
  %772 = vmatprep.subr.bf16.mxu0 0
  %773 = vmatpush1.bf16.msra.mxu0 %v721
  %774 = vmatprep.subr.bf16.mxu0 0
  %775 = vmatpush1.bf16.msra.mxu0 %v722
  %776 = vmatprep.subr.bf16.mxu0 0
  %777 = vmatpush1.bf16.msra.mxu0 %v723
  %778 = vmatprep.subr.bf16.mxu0 0
  %779 = vmatpush1.bf16.msra.mxu0 %v724
  %780 = vmatprep.subr.bf16.mxu0 0
  %781 = vmatpush1.bf16.msra.mxu0 %v725
  %782 = vmatprep.subr.bf16.mxu0 0
  %783 = vmatpush1.bf16.msra.mxu0 %v726
  %784 = vmatprep.subr.bf16.mxu0 0
  %785 = vmatpush1.bf16.msra.mxu0 %v727
  %786 = vmatprep.subr.bf16.mxu0 0
  %787 = vmatpush1.bf16.msra.mxu0 %v728
  %788 = vmatprep.subr.bf16.mxu0 0
  %789 = vmatpush1.bf16.msra.mxu0 %v729
  %790 = vmatprep.subr.bf16.mxu0 0
  %791 = vmatpush1.bf16.msra.mxu0 %v730
  %792 = vmatprep.subr.bf16.mxu0 0
  %793 = vmatpush1.bf16.msra.mxu0 %v731
  %794 = vmatprep.mubr.bf16.mxu0 %v755
  %795 = vmatmul.mubr.bf16.gmra.mrb[0].mxu0 %v754
  %v796 = vpop.f32.mrb[0].mxu0
  %v797 = vadd.f32 0.0, %v796
  %v798 = vpop.f32.mrb[0].mxu0
  %v799 = vpop.f32.mrb[0].mxu0
  %v800 = vpop.f32.mrb[0].mxu0
  %801 = vdwg.mxu0
  %802 = vmatprep.subr.bf16.mxu0 0
  %803 = vmatpush1.bf16.msra.mxu0 %v732
  %804 = vmatprep.subr.bf16.mxu0 0
  %805 = vmatpush1.bf16.msra.mxu0 %v733
  %806 = vmatprep.subr.bf16.mxu0 0
  %807 = vmatpush1.bf16.msra.mxu0 %v734
  %808 = vmatprep.subr.bf16.mxu0 0
  %809 = vmatpush1.bf16.msra.mxu0 %v735
  %810 = vmatprep.subr.bf16.mxu0 0
  %811 = vmatpush1.bf16.msra.mxu0 %v736
  %812 = vmatprep.subr.bf16.mxu0 0
  %813 = vmatpush1.bf16.msra.mxu0 %v737
  %814 = vmatprep.subr.bf16.mxu0 0
  %815 = vmatpush1.bf16.msra.mxu0 %v738
  %816 = vmatprep.subr.bf16.mxu0 0
  %817 = vmatpush1.bf16.msra.mxu0 %v739
  %818 = vmatprep.subr.bf16.mxu0 0
  %819 = vmatpush1.bf16.msra.mxu0 %v740
  %820 = vmatprep.subr.bf16.mxu0 0
  %821 = vmatpush1.bf16.msra.mxu0 %v741
  %822 = vmatprep.subr.bf16.mxu0 0
  %823 = vmatpush1.bf16.msra.mxu0 %v742
  %824 = vmatprep.subr.bf16.mxu0 0
  %825 = vmatpush1.bf16.msra.mxu0 %v743
  %826 = vmatprep.subr.bf16.mxu0 0
  %827 = vmatpush1.bf16.msra.mxu0 %v744
  %828 = vmatprep.subr.bf16.mxu0 0
  %829 = vmatpush1.bf16.msra.mxu0 %v745
  %830 = vmatprep.subr.bf16.mxu0 0
  %831 = vmatpush1.bf16.msra.mxu0 %v746
  %832 = vmatprep.subr.bf16.mxu0 0
  %833 = vmatpush1.bf16.msra.mxu0 %v747
  %834 = vmatprep.mubr.bf16.mxu0 %v757
  %835 = vmatmul.mubr.bf16.gmra.mrb[0].mxu0 %v756
  %v836 = vpop.f32.mrb[0].mxu0
  %v837 = vadd.f32 %v797, %v836
  %v838 = vpop.f32.mrb[0].mxu0
  %v839 = vpop.f32.mrb[0].mxu0
  %v840 = vpop.f32.mrb[0].mxu0
  %841 = vdwg.mxu0
  %843 = vrot.lane.b32.xlu0 %v837, 96
  %v844 = vpop.permute.xlu0 %843
  %v846 = vadd.f32 %v837, %v844
  %847 = vrot.lane.b32.xlu0 %v837, 64
  %v848 = vpop.permute.xlu0 %847
  %v850 = vadd.f32 %v846, %v848
  %851 = vrot.lane.b32.xlu0 %v837, 32
  %v852 = vpop.permute.xlu0 %851
  %v854 = vadd.f32 %v850, %v852
  %v855 = vld [vmem:[%s4 + $0xb0] sm:$0xf]
  %v856 = vld [vmem:[%s4 + $0xb4] sm:$0xf]
  %v857 = vld [vmem:[%s4 + $0xb8] sm:$0xf]
  %v858 = vld [vmem:[%s4 + $0xbc] sm:$0xf]
  %v859 = vpack.c.bf16 %v854, %v854
  %v864 = vunpack.c.l.b16 %v855
  %v865 = vunpack.c.l.b16 %v856
  %v866 = vunpack.c.l.b16 %v857
  %v867 = vunpack.c.l.b16 %v858
  %v868 = vpack.c.b16 %v865, %v864
  %v869 = vpack.c.b16 %v867, %v866
  %vm872 = vcmask 261120
  %v874 = vsel %vm872, %v859, 0
  %876 = vmatprep.subr.bf16.mxu0 0
  %877 = vmatpush1.bf16.msra.mxu0 %v868
  %878 = vmatprep.subr.bf16.mxu0 0
  %879 = vmatpush1.bf16.msra.mxu0 %v869
  %880 = vmatprep.subr.bf16.mxu0 0
  %881 = vmatpush1.bf16.msra.mxu0 0
  %882 = vmatprep.subr.bf16.mxu0 0
  %883 = vmatpush1.bf16.msra.mxu0 0
  %884 = vmatprep.subr.bf16.mxu0 0
  %885 = vmatpush1.bf16.msra.mxu0 0
  %886 = vmatprep.subr.bf16.mxu0 0
  %887 = vmatpush1.bf16.msra.mxu0 0
  %888 = vmatprep.subr.bf16.mxu0 0
  %889 = vmatpush1.bf16.msra.mxu0 0
  %890 = vmatprep.subr.bf16.mxu0 0
  %891 = vmatpush1.bf16.msra.mxu0 0
  %892 = vmatprep.subr.bf16.mxu0 0
  %893 = vmatpush1.bf16.msra.mxu0 0
  %894 = vmatprep.subr.bf16.mxu0 0
  %895 = vmatpush1.bf16.msra.mxu0 0
  %896 = vmatprep.subr.bf16.mxu0 0
  %897 = vmatpush1.bf16.msra.mxu0 0
  %898 = vmatprep.subr.bf16.mxu0 0
  %899 = vmatpush1.bf16.msra.mxu0 0
  %900 = vmatprep.subr.bf16.mxu0 0
  %901 = vmatpush1.bf16.msra.mxu0 0
  %902 = vmatprep.subr.bf16.mxu0 0
  %903 = vmatpush1.bf16.msra.mxu0 0
  %904 = vmatprep.subr.bf16.mxu0 0
  %905 = vmatpush1.bf16.msra.mxu0 0
  %906 = vmatprep.subr.bf16.mxu0 0
  %907 = vmatpush1.bf16.msra.mxu0 0
  %908 = vmatprep.mubr.bf16.mxu0 0
  %909 = vmatmul.mubr.bf16.gmra.mrb[0].mxu0 %v874
  %v910 = vpop.f32.mrb[0].mxu0
  %v911 = vadd.f32 0.0, %v910
  %v912 = vpop.f32.mrb[0].mxu0
  %v913 = vpop.f32.mrb[0].mxu0
  %v914 = vpop.f32.mrb[0].mxu0
  %915 = vdwg.mxu0
  %v916 = vld [vmem:[%s8 + $0x4] sm:$0x1]
  %v917 = vlaneseq
  %v918 = vshrl.u32 %v917, 7
  %v919 = vsub.s32 0, %v918
  %v920 = vrot.slane %v916, %v919
  %v921 = vadd.f32 %v911, %v920
  %vm922 = vcmask 130048
  %v923 = vsel %vm922, %v921, -inf
  %924 = vmax.xlane.f32.xlu0 %v923
  %v925 = vpop.xlane.xlu0 %924
  %v926 = vsub.f32 %v921, %v925
  %v927 = vmul.f32 %v926, 1.442695
  %v928 = vpow.pop %v927
  %v929 = vsel %vm922, %v928, 0.0
  %930 = vadd.xlane.f32.xlu0 %v929
  %v931 = vpop.xlane.xlu0 %930
  %v932 = vrcp.pop %v931
  %v933 = vmul.f32 %v928, %v932
  %934 = vst.msk [vmem:[%s9] sm:$0xff] %vm922, %v933
  %v935 = vlaneseq
  %v936 = vand.u32 %v935, 127
  %v937 = vcvt.s32.f32 %v936
  %v938 = vsel %vm922, %v933, -inf
  %939 = vmax.xlane.f32.xlu0 %v938
  %v940 = vpop.xlane.xlu0 %939
  %vm941 = vcmp.ge.f32.partialorder %v933, %v940
  %v942 = vsel %vm941, %v937, 16.0
  %v943 = vsel %vm922, %v942, inf
  %944 = vmin.xlane.f32.xlu0 %v943
  %v945 = vpop.xlane.xlu0 %944
  %vm946 = vcmp.eq.f32.partialorder %v937, %v945
  %v947 = vsel %vm946, 1, 0
  %v948 = vcvt.s32.f32 %v947
  %v949 = vmul.f32 %v948, 1e+09
  %v950 = vsub.f32 %v933, %v949
  %v951 = vsel %vm922, %v950, -inf
  %952 = vmax.xlane.f32.xlu0 %v951
  %v953 = vpop.xlane.xlu0 %952
  %vm954 = vcmp.ge.f32.partialorder %v950, %v953
  %v955 = vsel %vm954, %v937, 16.0
  %v956 = vsel %vm922, %v955, inf
  %957 = vmin.xlane.f32.xlu0 %v956
  %v958 = vpop.xlane.xlu0 %957
  %vm959 = vcmp.eq.f32.partialorder %v937, %v958
  %v960 = vsel %vm959, 1, 0
  %v961 = vcvt.s32.f32 %v960
  %v962 = vmul.f32 %v961, 1e+09
  %v963 = vsub.f32 %v950, %v962
  %v964 = vsel %vm922, %v963, -inf
  %965 = vmax.xlane.f32.xlu0 %v964
  %v966 = vpop.xlane.xlu0 %965
  %vm967 = vcmp.ge.f32.partialorder %v963, %v966
  %v968 = vsel %vm967, %v937, 16.0
  %v969 = vsel %vm922, %v968, inf
  %970 = vmin.xlane.f32.xlu0 %v969
  %v971 = vpop.xlane.xlu0 %970
  %vm972 = vcmp.eq.f32.partialorder %v937, %v971
  %v973 = vsel %vm972, 1, 0
  %v974 = vcvt.s32.f32 %v973
  %v975 = vmul.f32 %v974, 1e+09
  %v976 = vsub.f32 %v963, %v975
  %v977 = vsel %vm922, %v976, -inf
  %978 = vmax.xlane.f32.xlu0 %v977
  %v979 = vpop.xlane.xlu0 %978
  %vm980 = vcmp.ge.f32.partialorder %v976, %v979
  %v981 = vsel %vm980, %v937, 16.0
  %v982 = vsel %vm922, %v981, inf
  %983 = vmin.xlane.f32.xlu0 %v982
  %v984 = vpop.xlane.xlu0 %983
  %vm985 = vcmp.eq.f32.partialorder %v937, %v984
  %v986 = vsel %vm985, 1, 0
  %v987 = vcvt.s32.f32 %v986
  %v988 = vld [vmem:[%s7] sm:$0xff]
  %v989 = vld [vmem:[%s7 + $0x8] sm:$0xff]
  %v991 = vsel %vm922, %v948, 0
  %v994 = vsel %vm922, %v961, 0
  %v997 = vsel %vm922, %v974, 0
  %v1000 = vsel %vm922, %v987, 0
  %1002 = vmatprep.subr.mxu0 0.0
  %1003 = vmatpush1.msra.mxu0 %v988
  %1004 = vmatprep.subr.mxu0 0.0
  %1005 = vmatpush1.msra.mxu0 %v989
  %1006 = vmatprep.subr.mxu0 0.0
  %1007 = vmatpush1.msra.mxu0 0.0
  %1008 = vmatprep.subr.mxu0 0.0
  %1009 = vmatpush1.msra.mxu0 0.0
  %1010 = vmatprep.subr.mxu0 0.0
  %1011 = vmatpush1.msra.mxu0 0.0
  %1012 = vmatprep.subr.mxu0 0.0
  %1013 = vmatpush1.msra.mxu0 0.0
  %1014 = vmatprep.subr.mxu0 0.0
  %1015 = vmatpush1.msra.mxu0 0.0
  %1016 = vmatprep.subr.mxu0 0.0
  %1017 = vmatpush1.msra.mxu0 0.0
  %1018 = vmatprep.subr.mxu0 0.0
  %1019 = vmatpush1.msra.mxu0 0.0
  %1020 = vmatprep.subr.mxu0 0.0
  %1021 = vmatpush1.msra.mxu0 0.0
  %1022 = vmatprep.subr.mxu0 0.0
  %1023 = vmatpush1.msra.mxu0 0.0
  %1024 = vmatprep.subr.mxu0 0.0
  %1025 = vmatpush1.msra.mxu0 0.0
  %1026 = vmatprep.subr.mxu0 0.0
  %1027 = vmatpush1.msra.mxu0 0.0
  %1028 = vmatprep.subr.mxu0 0.0
  %1029 = vmatpush1.msra.mxu0 0.0
  %1030 = vmatprep.subr.mxu0 0.0
  %1031 = vmatpush1.msra.mxu0 0.0
  %1032 = vmatprep.subr.mxu0 0.0
  %1033 = vmatpush1.msra.mxu0 0.0
  %1034 = vmatprep.subr.mxu0 0.0
  %1035 = vmatpush1.msra.mxu0 0.0
  %1036 = vmatprep.subr.mxu0 0.0
  %1037 = vmatpush1.msra.mxu0 0.0
  %1038 = vmatprep.subr.mxu0 0.0
  %1039 = vmatpush1.msra.mxu0 0.0
  %1040 = vmatprep.subr.mxu0 0.0
  %1041 = vmatpush1.msra.mxu0 0.0
  %1042 = vmatprep.subr.mxu0 0.0
  %1043 = vmatpush1.msra.mxu0 0.0
  %1044 = vmatprep.subr.mxu0 0.0
  %1045 = vmatpush1.msra.mxu0 0.0
  %1046 = vmatprep.subr.mxu0 0.0
  %1047 = vmatpush1.msra.mxu0 0.0
  %1048 = vmatprep.subr.mxu0 0.0
  %1049 = vmatpush1.msra.mxu0 0.0
  %1050 = vmatprep.subr.mxu0 0.0
  %1051 = vmatpush1.msra.mxu0 0.0
  %1052 = vmatprep.subr.mxu0 0.0
  %1053 = vmatpush1.msra.mxu0 0.0
  %1054 = vmatprep.subr.mxu0 0.0
  %1055 = vmatpush1.msra.mxu0 0.0
  %1056 = vmatprep.subr.mxu0 0.0
  %1057 = vmatpush1.msra.mxu0 0.0
  %1058 = vmatprep.subr.mxu0 0.0
  %1059 = vmatpush1.msra.mxu0 0.0
  %1060 = vmatprep.subr.mxu0 0.0
  %1061 = vmatpush1.msra.mxu0 0.0
  %1062 = vmatprep.subr.mxu0 0.0
  %1063 = vmatpush1.msra.mxu0 0.0
  %1064 = vmatprep.subr.mxu0 0.0
  %1065 = vmatpush1.msra.mxu0 0.0
  %1066 = vmatprep.mubr.f32.mxu0 0.0
  %1067 = vmatmul.mubr.f32.gmra.mrb[0].mxu0 %v991
  %v1068 = vpop.f32.mrb[0].mxu0
  %v1069 = vadd.f32 0.0, %v1068
  %v1070 = vpop.f32.mrb[0].mxu0
  %1071 = vmatprep.mubr.f32.mxu0 0.0
  %1072 = vmatmul.mubr.f32.gmra.mrb[0].mxu0 %v994
  %v1073 = vpop.f32.mrb[0].mxu0
  %v1074 = vadd.f32 0.0, %v1073
  %v1075 = vpop.f32.mrb[0].mxu0
  %1076 = vmatprep.mubr.f32.mxu0 0.0
  %1077 = vmatmul.mubr.f32.gmra.mrb[0].mxu0 %v997
  %v1078 = vpop.f32.mrb[0].mxu0
  %v1079 = vadd.f32 0.0, %v1078
  %v1080 = vpop.f32.mrb[0].mxu0
  %1081 = vmatprep.mubr.f32.mxu0 0.0
  %1082 = vmatmul.mubr.f32.gmra.mrb[0].mxu0 %v1000
  %v1083 = vpop.f32.mrb[0].mxu0
  %v1084 = vadd.f32 0.0, %v1083
  %v1085 = vpop.f32.mrb[0].mxu0
  %1086 = vdwg.mxu0
  %v1087 = vld [vmem:[%s4] sm:$0xf]
  %v1088 = vld [vmem:[%s4 + $0x4] sm:$0xf]
  %v1089 = vld [vmem:[%s4 + $0x8] sm:$0xf]
  %v1090 = vld [vmem:[%s4 + $0xc] sm:$0xf]
  %v1091 = vld [vmem:[%s8 + $0x5] sm:$0x1]
  %v1092 = vlaneseq
  %v1093 = vshrl.u32 %v1092, 7
  %v1094 = vsub.s32 0, %v1093
  %v1095 = vrot.slane %v1091, %v1094
  %v1100 = vunpack.c.l.b16 %v1087
  %v1101 = vunpack.c.l.b16 %v1088
  %v1102 = vunpack.c.l.b16 %v1089
  %v1103 = vunpack.c.l.b16 %v1090
  %v1104 = vpack.c.b16 %v1101, %v1100
  %v1105 = vpack.c.b16 %v1103, %v1102
  %1108 = vmatprep.subr.bf16.mxu0 0
  %1109 = vmatpush1.bf16.msra.mxu0 %v1104
  %1110 = vmatprep.subr.bf16.mxu0 0
  %1111 = vmatpush1.bf16.msra.mxu0 %v1105
  %1112 = vmatprep.subr.bf16.mxu0 0
  %1113 = vmatpush1.bf16.msra.mxu0 0
  %1114 = vmatprep.subr.bf16.mxu0 0
  %1115 = vmatpush1.bf16.msra.mxu0 0
  %1116 = vmatprep.subr.bf16.mxu0 0
  %1117 = vmatpush1.bf16.msra.mxu0 0
  %1118 = vmatprep.subr.bf16.mxu0 0
  %1119 = vmatpush1.bf16.msra.mxu0 0
  %1120 = vmatprep.subr.bf16.mxu0 0
  %1121 = vmatpush1.bf16.msra.mxu0 0
  %1122 = vmatprep.subr.bf16.mxu0 0
  %1123 = vmatpush1.bf16.msra.mxu0 0
  %1124 = vmatprep.subr.bf16.mxu0 0
  %1125 = vmatpush1.bf16.msra.mxu0 0
  %1126 = vmatprep.subr.bf16.mxu0 0
  %1127 = vmatpush1.bf16.msra.mxu0 0
  %1128 = vmatprep.subr.bf16.mxu0 0
  %1129 = vmatpush1.bf16.msra.mxu0 0
  %1130 = vmatprep.subr.bf16.mxu0 0
  %1131 = vmatpush1.bf16.msra.mxu0 0
  %1132 = vmatprep.subr.bf16.mxu0 0
  %1133 = vmatpush1.bf16.msra.mxu0 0
  %1134 = vmatprep.subr.bf16.mxu0 0
  %1135 = vmatpush1.bf16.msra.mxu0 0
  %1136 = vmatprep.subr.bf16.mxu0 0
  %1137 = vmatpush1.bf16.msra.mxu0 0
  %1138 = vmatprep.subr.bf16.mxu0 0
  %1139 = vmatpush1.bf16.msra.mxu0 0
  %1140 = vmatprep.mubr.bf16.mxu0 0
  %1141 = vmatmul.mubr.bf16.gmra.mrb[0].mxu0 %v874
  %v1142 = vpop.f32.mrb[0].mxu0
  %v1143 = vadd.f32 %v1095, %v1142
  %v1144 = vpop.f32.mrb[0].mxu0
  %v1145 = vpop.f32.mrb[0].mxu0
  %v1146 = vpop.f32.mrb[0].mxu0
  %1147 = vdwg.mxu0
  %v1148 = vld [vmem:[%s4 + $0x30] sm:$0xf]
  %v1149 = vld [vmem:[%s4 + $0x34] sm:$0xf]
  %v1150 = vld [vmem:[%s4 + $0x38] sm:$0xf]
  %v1151 = vld [vmem:[%s4 + $0x3c] sm:$0xf]
  %v1152 = vpack.c.bf16 %v1074, %v1069
  %v1153 = vpack.c.bf16 %v1084, %v1079
  %v1154 = vld [vmem:[%s8 + $0x7] sm:$0x1]
  %v1155 = vlaneseq
  %v1156 = vshrl.u32 %v1155, 7
  %v1157 = vsub.s32 0, %v1156
  %v1158 = vrot.slane %v1154, %v1157
  %v1163 = vunpack.c.l.b16 %v1148
  %v1164 = vunpack.c.l.b16 %v1149
  %v1165 = vunpack.c.l.b16 %v1150
  %v1166 = vunpack.c.l.b16 %v1151
  %v1167 = vpack.c.b16 %v1164, %v1163
  %v1168 = vpack.c.b16 %v1166, %v1165
  %v1172 = vsel %vm872, %v1152, 0
  %v1175 = vsel %vm872, %v1153, 0
  %1177 = vmatprep.subr.bf16.mxu0 0
  %1178 = vmatpush1.bf16.msra.mxu0 %v1167
  %1179 = vmatprep.subr.bf16.mxu0 0
  %1180 = vmatpush1.bf16.msra.mxu0 %v1168
  %1181 = vmatprep.subr.bf16.mxu0 0
  %1182 = vmatpush1.bf16.msra.mxu0 0
  %1183 = vmatprep.subr.bf16.mxu0 0
  %1184 = vmatpush1.bf16.msra.mxu0 0
  %1185 = vmatprep.subr.bf16.mxu0 0
  %1186 = vmatpush1.bf16.msra.mxu0 0
  %1187 = vmatprep.subr.bf16.mxu0 0
  %1188 = vmatpush1.bf16.msra.mxu0 0
  %1189 = vmatprep.subr.bf16.mxu0 0
  %1190 = vmatpush1.bf16.msra.mxu0 0
  %1191 = vmatprep.subr.bf16.mxu0 0
  %1192 = vmatpush1.bf16.msra.mxu0 0
  %1193 = vmatprep.subr.bf16.mxu0 0
  %1194 = vmatpush1.bf16.msra.mxu0 0
  %1195 = vmatprep.subr.bf16.mxu0 0
  %1196 = vmatpush1.bf16.msra.mxu0 0
  %1197 = vmatprep.subr.bf16.mxu0 0
  %1198 = vmatpush1.bf16.msra.mxu0 0
  %1199 = vmatprep.subr.bf16.mxu0 0
  %1200 = vmatpush1.bf16.msra.mxu0 0
  %1201 = vmatprep.subr.bf16.mxu0 0
  %1202 = vmatpush1.bf16.msra.mxu0 0
  %1203 = vmatprep.subr.bf16.mxu0 0
  %1204 = vmatpush1.bf16.msra.mxu0 0
  %1205 = vmatprep.subr.bf16.mxu0 0
  %1206 = vmatpush1.bf16.msra.mxu0 0
  %1207 = vmatprep.subr.bf16.mxu0 0
  %1208 = vmatpush1.bf16.msra.mxu0 0
  %1209 = vmatprep.mubr.bf16.mxu0 0
  %1210 = vmatmul.mubr.bf16.gmra.mrb[0].mxu0 %v1172
  %v1211 = vpop.f32.mrb[0].mxu0
  %v1212 = vadd.f32 %v1158, %v1211
  %v1213 = vpop.f32.mrb[0].mxu0
  %v1214 = vpop.f32.mrb[0].mxu0
  %v1215 = vadd.f32 %v1158, %v1214
  %v1216 = vpop.f32.mrb[0].mxu0
  %1217 = vmatprep.mubr.bf16.mxu0 0
  %1218 = vmatmul.mubr.bf16.gmra.mrb[0].mxu0 %v1175
  %v1219 = vpop.f32.mrb[0].mxu0
  %v1220 = vadd.f32 %v1158, %v1219
  %v1221 = vpop.f32.mrb[0].mxu0
  %v1222 = vpop.f32.mrb[0].mxu0
  %v1223 = vadd.f32 %v1158, %v1222
  %v1224 = vpop.f32.mrb[0].mxu0
  %1225 = vdwg.mxu0
  %v1226 = vld [vmem:[%s8 + $0xd] sm:$0x1]
  %v1227 = vld [vmem:[%s8 + $0xe] sm:$0x1]
  %v1228 = vld [vmem:[%s4 + $0x10] sm:$0xf]
  %v1229 = vld [vmem:[%s4 + $0x14] sm:$0xf]
  %v1230 = vld [vmem:[%s4 + $0x18] sm:$0xf]
  %v1231 = vld [vmem:[%s4 + $0x1c] sm:$0xf]
  %v1236 = vunpack.c.l.b16 %v1228
  %v1237 = vunpack.c.l.b16 %v1229
  %v1238 = vunpack.c.l.b16 %v1230
  %v1239 = vunpack.c.l.b16 %v1231
  %v1240 = vpack.c.b16 %v1237, %v1236
  %v1241 = vpack.c.b16 %v1239, %v1238
  %v1245 = vsel %vm872, 0, 0
  %1247 = vmatprep.subr.bf16.mxu0 0
  %1248 = vmatpush1.bf16.msra.mxu0 %v1240
  %1249 = vmatprep.subr.bf16.mxu0 0
  %1250 = vmatpush1.bf16.msra.mxu0 %v1241
  %1251 = vmatprep.subr.bf16.mxu0 0
  %1252 = vmatpush1.bf16.msra.mxu0 0
  %1253 = vmatprep.subr.bf16.mxu0 0
  %1254 = vmatpush1.bf16.msra.mxu0 0
  %1255 = vmatprep.subr.bf16.mxu0 0
  %1256 = vmatpush1.bf16.msra.mxu0 0
  %1257 = vmatprep.subr.bf16.mxu0 0
  %1258 = vmatpush1.bf16.msra.mxu0 0
  %1259 = vmatprep.subr.bf16.mxu0 0
  %1260 = vmatpush1.bf16.msra.mxu0 0
  %1261 = vmatprep.subr.bf16.mxu0 0
  %1262 = vmatpush1.bf16.msra.mxu0 0
  %1263 = vmatprep.subr.bf16.mxu0 0
  %1264 = vmatpush1.bf16.msra.mxu0 0
  %1265 = vmatprep.subr.bf16.mxu0 0
  %1266 = vmatpush1.bf16.msra.mxu0 0
  %1267 = vmatprep.subr.bf16.mxu0 0
  %1268 = vmatpush1.bf16.msra.mxu0 0
  %1269 = vmatprep.subr.bf16.mxu0 0
  %1270 = vmatpush1.bf16.msra.mxu0 0
  %1271 = vmatprep.subr.bf16.mxu0 0
  %1272 = vmatpush1.bf16.msra.mxu0 0
  %1273 = vmatprep.subr.bf16.mxu0 0
  %1274 = vmatpush1.bf16.msra.mxu0 0
  %1275 = vmatprep.subr.bf16.mxu0 0
  %1276 = vmatpush1.bf16.msra.mxu0 0
  %1277 = vmatprep.subr.bf16.mxu0 0
  %1278 = vmatpush1.bf16.msra.mxu0 0
  %1279 = vmatprep.mubr.bf16.mxu0 0
  %1280 = vmatmul.mubr.bf16.gmra.mrb[0].mxu0 %v1245
  %v1281 = vpop.f32.mrb[0].mxu0
  %v1282 = vadd.f32 0.0, %v1281
  %v1283 = vpop.f32.mrb[0].mxu0
  %v1284 = vpop.f32.mrb[0].mxu0
  %v1285 = vpop.f32.mrb[0].mxu0
  %1286 = vdwg.mxu0
  %v1287 = vadd.f32 %v1143, %v1282
  %v1288 = vtanh.pop %v1287
  %v1289 = vld [vmem:[%s4 + $0x20] sm:$0xf]
  %v1290 = vld [vmem:[%s4 + $0x24] sm:$0xf]
  %v1291 = vld [vmem:[%s4 + $0x28] sm:$0xf]
  %v1292 = vld [vmem:[%s4 + $0x2c] sm:$0xf]
  %v1293 = vpack.c.bf16 %v1288, %v1288
  %v1294 = vld [vmem:[%s8 + $0x6] sm:$0x1]
  %v1295 = vlaneseq
  %v1296 = vshrl.u32 %v1295, 7
  %v1297 = vsub.s32 0, %v1296
  %v1298 = vrot.slane %v1294, %v1297
  %v1303 = vunpack.c.l.b16 %v1289
  %v1304 = vunpack.c.l.b16 %v1290
  %v1305 = vunpack.c.l.b16 %v1291
  %v1306 = vunpack.c.l.b16 %v1292
  %v1307 = vpack.c.b16 %v1304, %v1303
  %v1308 = vpack.c.b16 %v1306, %v1305
  %v1312 = vsel %vm872, %v1293, 0
  %1314 = vmatprep.subr.bf16.mxu0 0
  %1315 = vmatpush1.bf16.msra.mxu0 %v1307
  %1316 = vmatprep.subr.bf16.mxu0 0
  %1317 = vmatpush1.bf16.msra.mxu0 %v1308
  %1318 = vmatprep.subr.bf16.mxu0 0
  %1319 = vmatpush1.bf16.msra.mxu0 0
  %1320 = vmatprep.subr.bf16.mxu0 0
  %1321 = vmatpush1.bf16.msra.mxu0 0
  %1322 = vmatprep.subr.bf16.mxu0 0
  %1323 = vmatpush1.bf16.msra.mxu0 0
  %1324 = vmatprep.subr.bf16.mxu0 0
  %1325 = vmatpush1.bf16.msra.mxu0 0
  %1326 = vmatprep.subr.bf16.mxu0 0
  %1327 = vmatpush1.bf16.msra.mxu0 0
  %1328 = vmatprep.subr.bf16.mxu0 0
  %1329 = vmatpush1.bf16.msra.mxu0 0
  %1330 = vmatprep.subr.bf16.mxu0 0
  %1331 = vmatpush1.bf16.msra.mxu0 0
  %1332 = vmatprep.subr.bf16.mxu0 0
  %1333 = vmatpush1.bf16.msra.mxu0 0
  %1334 = vmatprep.subr.bf16.mxu0 0
  %1335 = vmatpush1.bf16.msra.mxu0 0
  %1336 = vmatprep.subr.bf16.mxu0 0
  %1337 = vmatpush1.bf16.msra.mxu0 0
  %1338 = vmatprep.subr.bf16.mxu0 0
  %1339 = vmatpush1.bf16.msra.mxu0 0
  %1340 = vmatprep.subr.bf16.mxu0 0
  %1341 = vmatpush1.bf16.msra.mxu0 0
  %1342 = vmatprep.subr.bf16.mxu0 0
  %1343 = vmatpush1.bf16.msra.mxu0 0
  %1344 = vmatprep.subr.bf16.mxu0 0
  %1345 = vmatpush1.bf16.msra.mxu0 0
  %1346 = vmatprep.mubr.bf16.mxu0 0
  %1347 = vmatmul.mubr.bf16.gmra.mrb[0].mxu0 %v1312
  %v1348 = vpop.f32.mrb[0].mxu0
  %v1349 = vadd.f32 %v1298, %v1348
  %v1350 = vpop.f32.mrb[0].mxu0
  %v1351 = vpop.f32.mrb[0].mxu0
  %v1352 = vpop.f32.mrb[0].mxu0
  %1353 = vdwg.mxu0
  %v1354 = vsel %vm872, %v1349, -inf
  %1355 = vmax.xlane.f32.xlu0 %v1354
  %v1356 = vpop.xlane.xlu0 %1355
  %v1357 = vsub.f32 %v1349, %v1356
  %v1358 = vmul.f32 %v1357, 1.442695
  %v1359 = vpow.pop %v1358
  %v1360 = vsel %vm872, %v1359, 0.0
  %1361 = vadd.xlane.f32.xlu0 %v1360
  %v1362 = vpop.xlane.xlu0 %1361
  %v1363 = vrcp.pop %v1362
  %v1364 = vmul.f32 %v1359, %v1363
  %v1365 = vmul.f32 %v1364, %v854
  %v1366 = vld [vmem:[%s4 + $0x40] sm:$0xf]
  %v1367 = vld [vmem:[%s4 + $0x44] sm:$0xf]
  %v1368 = vld [vmem:[%s4 + $0x48] sm:$0xf]
  %v1369 = vld [vmem:[%s4 + $0x4c] sm:$0xf]
  %v1370 = vld [vmem:[%s8 + $0x8] sm:$0x1]
  %v1371 = vlaneseq
  %v1372 = vshrl.u32 %v1371, 7
  %v1373 = vsub.s32 0, %v1372
  %v1374 = vrot.slane %v1370, %v1373
  %v1379 = vunpack.c.l.b16 %v1366
  %v1380 = vunpack.c.l.b16 %v1367
  %v1381 = vunpack.c.l.b16 %v1368
  %v1382 = vunpack.c.l.b16 %v1369
  %v1383 = vpack.c.b16 %v1380, %v1379
  %v1384 = vpack.c.b16 %v1382, %v1381
  %1387 = vmatprep.subr.bf16.mxu0 0
  %1388 = vmatpush1.bf16.msra.mxu0 %v1383
  %1389 = vmatprep.subr.bf16.mxu0 0
  %1390 = vmatpush1.bf16.msra.mxu0 %v1384
  %1391 = vmatprep.subr.bf16.mxu0 0
  %1392 = vmatpush1.bf16.msra.mxu0 0
  %1393 = vmatprep.subr.bf16.mxu0 0
  %1394 = vmatpush1.bf16.msra.mxu0 0
  %1395 = vmatprep.subr.bf16.mxu0 0
  %1396 = vmatpush1.bf16.msra.mxu0 0
  %1397 = vmatprep.subr.bf16.mxu0 0
  %1398 = vmatpush1.bf16.msra.mxu0 0
  %1399 = vmatprep.subr.bf16.mxu0 0
  %1400 = vmatpush1.bf16.msra.mxu0 0
  %1401 = vmatprep.subr.bf16.mxu0 0
  %1402 = vmatpush1.bf16.msra.mxu0 0
  %1403 = vmatprep.subr.bf16.mxu0 0
  %1404 = vmatpush1.bf16.msra.mxu0 0
  %1405 = vmatprep.subr.bf16.mxu0 0
  %1406 = vmatpush1.bf16.msra.mxu0 0
  %1407 = vmatprep.subr.bf16.mxu0 0
  %1408 = vmatpush1.bf16.msra.mxu0 0
  %1409 = vmatprep.subr.bf16.mxu0 0
  %1410 = vmatpush1.bf16.msra.mxu0 0
  %1411 = vmatprep.subr.bf16.mxu0 0
  %1412 = vmatpush1.bf16.msra.mxu0 0
  %1413 = vmatprep.subr.bf16.mxu0 0
  %1414 = vmatpush1.bf16.msra.mxu0 0
  %1415 = vmatprep.subr.bf16.mxu0 0
  %1416 = vmatpush1.bf16.msra.mxu0 0
  %1417 = vmatprep.subr.bf16.mxu0 0
  %1418 = vmatpush1.bf16.msra.mxu0 0
  %1419 = vmatprep.mubr.bf16.mxu0 0
  %1420 = vmatmul.mubr.bf16.gmra.mrb[0].mxu0 %v1245
  %v1421 = vpop.f32.mrb[0].mxu0
  %v1422 = vadd.f32 %v1374, %v1421
  %v1423 = vpop.f32.mrb[0].mxu0
  %v1424 = vpop.f32.mrb[0].mxu0
  %v1425 = vpop.f32.mrb[0].mxu0
  %1426 = vdwg.mxu0
  %v1427 = vadd.f32 %v1212, %v1422
  %v1428 = vtanh.pop %v1427
  %v1429 = vlaneseq
  %v1430 = vshrl.u32 %v1429, 7
  %v1431 = vsub.s32 0, %v1430
  %v1432 = vrot.slane %v1226, %v1431
  %v1433 = vmul.f32 %v1428, %v1432
  %v1434 = vsel %vm872, %v1433, 0.0
  %1435 = vadd.xlane.f32.xlu0 %v1434
  %v1436 = vpop.xlane.xlu0 %1435
  %v1437 = vlaneseq
  %v1438 = vshrl.u32 %v1437, 7
  %v1439 = vsub.s32 0, %v1438
  %v1440 = vrot.slane %v1227, %v1439
  %v1441 = vadd.f32 %v1436, %v1440
  %v1442 = vadd.f32 %v1215, %v1422
  %v1443 = vtanh.pop %v1442
  %v1444 = vmul.f32 %v1443, %v1432
  %v1445 = vsel %vm872, %v1444, 0.0
  %1446 = vadd.xlane.f32.xlu0 %v1445
  %v1447 = vpop.xlane.xlu0 %1446
  %v1448 = vadd.f32 %v1447, %v1440
  %v1449 = vadd.f32 %v1220, %v1422
  %v1450 = vtanh.pop %v1449
  %v1451 = vmul.f32 %v1450, %v1432
  %v1452 = vsel %vm872, %v1451, 0.0
  %1453 = vadd.xlane.f32.xlu0 %v1452
  %v1454 = vpop.xlane.xlu0 %1453
  %v1455 = vadd.f32 %v1454, %v1440
  %v1456 = vadd.f32 %v1223, %v1422
  %v1457 = vtanh.pop %v1456
  %v1458 = vmul.f32 %v1457, %v1432
  %v1459 = vsel %vm872, %v1458, 0.0
  %1460 = vadd.xlane.f32.xlu0 %v1459
  %v1461 = vpop.xlane.xlu0 %1460
  %v1462 = vadd.f32 %v1461, %v1440
  %v1463 = vmax.f32 %v1441, %v1448
  %v1464 = vmax.f32 %v1463, %v1455
  %v1465 = vmax.f32 %v1464, %v1462
  %v1466 = vsub.f32 %v1441, %v1465
  %v1467 = vmul.f32 %v1466, 1.442695
  %v1468 = vpow.pop %v1467
  %v1469 = vsub.f32 %v1448, %v1465
  %v1470 = vmul.f32 %v1469, 1.442695
  %v1471 = vpow.pop %v1470
  %v1472 = vsub.f32 %v1455, %v1465
  %v1473 = vmul.f32 %v1472, 1.442695
  %v1474 = vpow.pop %v1473
  %v1475 = vsub.f32 %v1462, %v1465
  %v1476 = vmul.f32 %v1475, 1.442695
  %v1477 = vpow.pop %v1476
  %v1478 = vadd.f32 %v1468, %v1471
  %v1479 = vadd.f32 %v1478, %v1474
  %v1480 = vadd.f32 %v1479, %v1477
  %v1481 = vrcp.pop %v1480
  %v1482 = vmul.f32 %v1468, %v1481
  %1484 = vset.pattern.permute.xlu0 0
  %1485 = vperm.xlu0 %1484, %v1482
  %v1486 = vpop.permute.xlu0 %1485
  %v1488 = vmul.f32 %v1486, %v1069
  %v1489 = vmul.f32 %v1471, %v1481
  %1491 = vset.pattern.permute.xlu0 0
  %1492 = vperm.xlu0 %1491, %v1489
  %v1493 = vpop.permute.xlu0 %1492
  %v1495 = vmul.f32 %v1493, %v1074
  %v1496 = vadd.f32 %v1488, %v1495
  %v1497 = vmul.f32 %v1474, %v1481
  %1499 = vset.pattern.permute.xlu0 0
  %1500 = vperm.xlu0 %1499, %v1497
  %v1501 = vpop.permute.xlu0 %1500
  %v1503 = vmul.f32 %v1501, %v1079
  %v1504 = vadd.f32 %v1496, %v1503
  %v1505 = vmul.f32 %v1477, %v1481
  %1507 = vset.pattern.permute.xlu0 0
  %1508 = vperm.xlu0 %1507, %v1505
  %v1509 = vpop.permute.xlu0 %1508
  %v1511 = vmul.f32 %v1509, %v1084
  %v1512 = vadd.f32 %v1504, %v1511
  %v1513 = vld [vmem:[%s4 + $0x50] sm:$0xf]
  %v1514 = vld [vmem:[%s4 + $0x54] sm:$0xf]
  %v1515 = vld [vmem:[%s4 + $0x58] sm:$0xf]
  %v1516 = vld [vmem:[%s4 + $0x5c] sm:$0xf]
  %v1517 = vpack.c.bf16 %v1365, %v1365
  %v1518 = vld [vmem:[%s4 + $0x60] sm:$0xf]
  %v1519 = vld [vmem:[%s4 + $0x64] sm:$0xf]
  %v1520 = vld [vmem:[%s4 + $0x68] sm:$0xf]
  %v1521 = vld [vmem:[%s4 + $0x6c] sm:$0xf]
  %v1522 = vpack.c.bf16 %v1512, %v1512
  %v1527 = vunpack.c.l.b16 %v1518
  %v1528 = vunpack.c.l.b16 %v1519
  %v1529 = vunpack.c.l.b16 %v1520
  %v1530 = vunpack.c.l.b16 %v1521
  %v1531 = vpack.c.b16 %v1528, %v1527
  %v1532 = vpack.c.b16 %v1530, %v1529
  %v1536 = vsel %vm872, %v1522, 0
  %1538 = vmatprep.subr.bf16.mxu0 0
  %1539 = vmatpush1.bf16.msra.mxu0 %v1531
  %1540 = vmatprep.subr.bf16.mxu0 0
  %1541 = vmatpush1.bf16.msra.mxu0 %v1532
  %1542 = vmatprep.subr.bf16.mxu0 0
  %1543 = vmatpush1.bf16.msra.mxu0 0
  %1544 = vmatprep.subr.bf16.mxu0 0
  %1545 = vmatpush1.bf16.msra.mxu0 0
  %1546 = vmatprep.subr.bf16.mxu0 0
  %1547 = vmatpush1.bf16.msra.mxu0 0
  %1548 = vmatprep.subr.bf16.mxu0 0
  %1549 = vmatpush1.bf16.msra.mxu0 0
  %1550 = vmatprep.subr.bf16.mxu0 0
  %1551 = vmatpush1.bf16.msra.mxu0 0
  %1552 = vmatprep.subr.bf16.mxu0 0
  %1553 = vmatpush1.bf16.msra.mxu0 0
  %1554 = vmatprep.subr.bf16.mxu0 0
  %1555 = vmatpush1.bf16.msra.mxu0 0
  %1556 = vmatprep.subr.bf16.mxu0 0
  %1557 = vmatpush1.bf16.msra.mxu0 0
  %1558 = vmatprep.subr.bf16.mxu0 0
  %1559 = vmatpush1.bf16.msra.mxu0 0
  %1560 = vmatprep.subr.bf16.mxu0 0
  %1561 = vmatpush1.bf16.msra.mxu0 0
  %1562 = vmatprep.subr.bf16.mxu0 0
  %1563 = vmatpush1.bf16.msra.mxu0 0
  %1564 = vmatprep.subr.bf16.mxu0 0
  %1565 = vmatpush1.bf16.msra.mxu0 0
  %1566 = vmatprep.subr.bf16.mxu0 0
  %1567 = vmatpush1.bf16.msra.mxu0 0
  %1568 = vmatprep.subr.bf16.mxu0 0
  %1569 = vmatpush1.bf16.msra.mxu0 0
  %1570 = vmatprep.mubr.bf16.mxu0 0
  %1571 = vmatmul.mubr.bf16.gmra.mrb[0].mxu0 %v1536
  %v1572 = vpop.f32.mrb[0].mxu0
  %v1573 = vadd.f32 0.0, %v1572
  %v1574 = vpop.f32.mrb[0].mxu0
  %v1575 = vpop.f32.mrb[0].mxu0
  %v1576 = vpop.f32.mrb[0].mxu0
  %1577 = vdwg.mxu0
  %v1582 = vunpack.c.l.b16 %v1513
  %v1583 = vunpack.c.l.b16 %v1514
  %v1584 = vunpack.c.l.b16 %v1515
  %v1585 = vunpack.c.l.b16 %v1516
  %v1586 = vpack.c.b16 %v1583, %v1582
  %v1587 = vpack.c.b16 %v1585, %v1584
  %v1591 = vsel %vm872, %v1517, 0
  %1593 = vmatprep.subr.bf16.mxu0 0
  %1594 = vmatpush1.bf16.msra.mxu0 %v1586
  %1595 = vmatprep.subr.bf16.mxu0 0
  %1596 = vmatpush1.bf16.msra.mxu0 %v1587
  %1597 = vmatprep.subr.bf16.mxu0 0
  %1598 = vmatpush1.bf16.msra.mxu0 0
  %1599 = vmatprep.subr.bf16.mxu0 0
  %1600 = vmatpush1.bf16.msra.mxu0 0
  %1601 = vmatprep.subr.bf16.mxu0 0
  %1602 = vmatpush1.bf16.msra.mxu0 0
  %1603 = vmatprep.subr.bf16.mxu0 0
  %1604 = vmatpush1.bf16.msra.mxu0 0
  %1605 = vmatprep.subr.bf16.mxu0 0
  %1606 = vmatpush1.bf16.msra.mxu0 0
  %1607 = vmatprep.subr.bf16.mxu0 0
  %1608 = vmatpush1.bf16.msra.mxu0 0
  %1609 = vmatprep.subr.bf16.mxu0 0
  %1610 = vmatpush1.bf16.msra.mxu0 0
  %1611 = vmatprep.subr.bf16.mxu0 0
  %1612 = vmatpush1.bf16.msra.mxu0 0
  %1613 = vmatprep.subr.bf16.mxu0 0
  %1614 = vmatpush1.bf16.msra.mxu0 0
  %1615 = vmatprep.subr.bf16.mxu0 0
  %1616 = vmatpush1.bf16.msra.mxu0 0
  %1617 = vmatprep.subr.bf16.mxu0 0
  %1618 = vmatpush1.bf16.msra.mxu0 0
  %1619 = vmatprep.subr.bf16.mxu0 0
  %1620 = vmatpush1.bf16.msra.mxu0 0
  %1621 = vmatprep.subr.bf16.mxu0 0
  %1622 = vmatpush1.bf16.msra.mxu0 0
  %1623 = vmatprep.subr.bf16.mxu0 0
  %1624 = vmatpush1.bf16.msra.mxu0 0
  %1625 = vmatprep.mubr.bf16.mxu0 0
  %1626 = vmatmul.mubr.bf16.gmra.mrb[0].mxu0 %v1591
  %v1627 = vpop.f32.mrb[0].mxu0
  %v1628 = vadd.f32 %v1573, %v1627
  %v1629 = vpop.f32.mrb[0].mxu0
  %v1630 = vpop.f32.mrb[0].mxu0
  %v1631 = vpop.f32.mrb[0].mxu0
  %1632 = vdwg.mxu0
  %v1633 = vld [vmem:[%s8 + $0x9] sm:$0x1]
  %v1634 = vlaneseq
  %v1635 = vshrl.u32 %v1634, 7
  %v1636 = vsub.s32 0, %v1635
  %v1637 = vrot.slane %v1633, %v1636
  %v1638 = vadd.f32 %v1628, %v1637
  %v1639 = vld [vmem:[%s5] sm:$0xf]
  %v1640 = vld [vmem:[%s5 + $0x4] sm:$0xf]
  %v1641 = vld [vmem:[%s5 + $0x8] sm:$0xf]
  %v1642 = vld [vmem:[%s5 + $0xc] sm:$0xf]
  %v1643 = vpack.c.bf16 %v1638, %v1638
  %v1644 = vld [vmem:[%s5 + $0x10] sm:$0xf]
  %v1645 = vld [vmem:[%s5 + $0x14] sm:$0xf]
  %v1646 = vld [vmem:[%s5 + $0x18] sm:$0xf]
  %v1647 = vld [vmem:[%s5 + $0x1c] sm:$0xf]
  %v1652 = vunpack.c.l.b16 %v1644
  %v1653 = vunpack.c.l.b16 %v1645
  %v1654 = vunpack.c.l.b16 %v1646
  %v1655 = vunpack.c.l.b16 %v1647
  %v1656 = vpack.c.b16 %v1653, %v1652
  %v1657 = vpack.c.b16 %v1655, %v1654
  %1660 = vmatprep.subr.bf16.mxu0 0
  %1661 = vmatpush1.bf16.msra.mxu0 %v1656
  %1662 = vmatprep.subr.bf16.mxu0 0
  %1663 = vmatpush1.bf16.msra.mxu0 %v1657
  %1664 = vmatprep.subr.bf16.mxu0 0
  %1665 = vmatpush1.bf16.msra.mxu0 0
  %1666 = vmatprep.subr.bf16.mxu0 0
  %1667 = vmatpush1.bf16.msra.mxu0 0
  %1668 = vmatprep.subr.bf16.mxu0 0
  %1669 = vmatpush1.bf16.msra.mxu0 0
  %1670 = vmatprep.subr.bf16.mxu0 0
  %1671 = vmatpush1.bf16.msra.mxu0 0
  %1672 = vmatprep.subr.bf16.mxu0 0
  %1673 = vmatpush1.bf16.msra.mxu0 0
  %1674 = vmatprep.subr.bf16.mxu0 0
  %1675 = vmatpush1.bf16.msra.mxu0 0
  %1676 = vmatprep.subr.bf16.mxu0 0
  %1677 = vmatpush1.bf16.msra.mxu0 0
  %1678 = vmatprep.subr.bf16.mxu0 0
  %1679 = vmatpush1.bf16.msra.mxu0 0
  %1680 = vmatprep.subr.bf16.mxu0 0
  %1681 = vmatpush1.bf16.msra.mxu0 0
  %1682 = vmatprep.subr.bf16.mxu0 0
  %1683 = vmatpush1.bf16.msra.mxu0 0
  %1684 = vmatprep.subr.bf16.mxu0 0
  %1685 = vmatpush1.bf16.msra.mxu0 0
  %1686 = vmatprep.subr.bf16.mxu0 0
  %1687 = vmatpush1.bf16.msra.mxu0 0
  %1688 = vmatprep.subr.bf16.mxu0 0
  %1689 = vmatpush1.bf16.msra.mxu0 0
  %1690 = vmatprep.subr.bf16.mxu0 0
  %1691 = vmatpush1.bf16.msra.mxu0 0
  %1692 = vmatprep.mubr.bf16.mxu0 0
  %1693 = vmatmul.mubr.bf16.gmra.mrb[0].mxu0 %v1245
  %v1694 = vpop.f32.mrb[0].mxu0
  %v1695 = vadd.f32 0.0, %v1694
  %v1696 = vpop.f32.mrb[0].mxu0
  %v1697 = vpop.f32.mrb[0].mxu0
  %v1698 = vpop.f32.mrb[0].mxu0
  %1699 = vdwg.mxu0
  %v1704 = vunpack.c.l.b16 %v1639
  %v1705 = vunpack.c.l.b16 %v1640
  %v1706 = vunpack.c.l.b16 %v1641
  %v1707 = vunpack.c.l.b16 %v1642
  %v1708 = vpack.c.b16 %v1705, %v1704
  %v1709 = vpack.c.b16 %v1707, %v1706
  %v1713 = vsel %vm872, %v1643, 0
  %1715 = vmatprep.subr.bf16.mxu0 0
  %1716 = vmatpush1.bf16.msra.mxu0 %v1708
  %1717 = vmatprep.subr.bf16.mxu0 0
  %1718 = vmatpush1.bf16.msra.mxu0 %v1709
  %1719 = vmatprep.subr.bf16.mxu0 0
  %1720 = vmatpush1.bf16.msra.mxu0 0
  %1721 = vmatprep.subr.bf16.mxu0 0
  %1722 = vmatpush1.bf16.msra.mxu0 0
  %1723 = vmatprep.subr.bf16.mxu0 0
  %1724 = vmatpush1.bf16.msra.mxu0 0
  %1725 = vmatprep.subr.bf16.mxu0 0
  %1726 = vmatpush1.bf16.msra.mxu0 0
  %1727 = vmatprep.subr.bf16.mxu0 0
  %1728 = vmatpush1.bf16.msra.mxu0 0
  %1729 = vmatprep.subr.bf16.mxu0 0
  %1730 = vmatpush1.bf16.msra.mxu0 0
  %1731 = vmatprep.subr.bf16.mxu0 0
  %1732 = vmatpush1.bf16.msra.mxu0 0
  %1733 = vmatprep.subr.bf16.mxu0 0
  %1734 = vmatpush1.bf16.msra.mxu0 0
  %1735 = vmatprep.subr.bf16.mxu0 0
  %1736 = vmatpush1.bf16.msra.mxu0 0
  %1737 = vmatprep.subr.bf16.mxu0 0
  %1738 = vmatpush1.bf16.msra.mxu0 0
  %1739 = vmatprep.subr.bf16.mxu0 0
  %1740 = vmatpush1.bf16.msra.mxu0 0
  %1741 = vmatprep.subr.bf16.mxu0 0
  %1742 = vmatpush1.bf16.msra.mxu0 0
  %1743 = vmatprep.subr.bf16.mxu0 0
  %1744 = vmatpush1.bf16.msra.mxu0 0
  %1745 = vmatprep.subr.bf16.mxu0 0
  %1746 = vmatpush1.bf16.msra.mxu0 0
  %1747 = vmatprep.mubr.bf16.mxu0 0
  %1748 = vmatmul.mubr.bf16.gmra.mrb[0].mxu0 %v1713
  %v1749 = vpop.f32.mrb[0].mxu0
  %v1750 = vadd.f32 %v1695, %v1749
  %v1751 = vpop.f32.mrb[0].mxu0
  %v1752 = vpop.f32.mrb[0].mxu0
  %v1753 = vpop.f32.mrb[0].mxu0
  %1754 = vdwg.mxu0
  %v1755 = vld [vmem:[%s8 + $0x1] sm:$0x1]
  %v1756 = vlaneseq
  %v1757 = vshrl.u32 %v1756, 7
  %v1758 = vsub.s32 0, %v1757
  %v1759 = vrot.slane %v1755, %v1758
  %v1760 = vadd.f32 %v1750, %v1759
  %v1761 = vxor.u32 %v1760, 2147483648
  %v1762 = vmul.f32 %v1761, 1.442695
  %v1763 = vpow.pop %v1762
  %v1764 = vadd.f32 %v1763, 1.0
  %v1765 = vrcp.pop %v1764
  %v1766 = vmul.f32 1.0, %v1765
  %v1767 = vtanh.pop %v1760
  %v1768 = vmul.f32 %v1766, 0.0
  %1770 = vrot.lane.b32.xlu0 %v1767, 64
  %v1771 = vpop.permute.xlu0 %1770
  %v1773 = vmul.f32 %v1766, %v1771
  %1775 = vrot.lane.b32.xlu0 %v1773, 32
  %v1776 = vpop.permute.xlu0 %1775
  %v1778 = vadd.f32 %v1768, %v1776
  %v1779 = vtanh.pop %v1778
  %1781 = vrot.lane.b32.xlu0 %v1779, 64
  %v1782 = vpop.permute.xlu0 %1781
  %v1784 = vmul.f32 %v1766, %v1782
  %v1785 = vpack.c.bf16 %v1784, %v1784
  %1787 = vrot.lane.b32.xlu0 %v1785, 32
  %v1788 = vpop.permute.xlu0 %1787
  %v1790 = vsel %vm872, %v1788, 0
  %1792 = vmatprep.subr.bf16.mxu0 0
  %1793 = vmatpush1.bf16.msra.mxu0 %v1240
  %1794 = vmatprep.subr.bf16.mxu0 0
  %1795 = vmatpush1.bf16.msra.mxu0 %v1241
  %1796 = vmatprep.subr.bf16.mxu0 0
  %1797 = vmatpush1.bf16.msra.mxu0 0
  %1798 = vmatprep.subr.bf16.mxu0 0
  %1799 = vmatpush1.bf16.msra.mxu0 0
  %1800 = vmatprep.subr.bf16.mxu0 0
  %1801 = vmatpush1.bf16.msra.mxu0 0
  %1802 = vmatprep.subr.bf16.mxu0 0
  %1803 = vmatpush1.bf16.msra.mxu0 0
  %1804 = vmatprep.subr.bf16.mxu0 0
  %1805 = vmatpush1.bf16.msra.mxu0 0
  %1806 = vmatprep.subr.bf16.mxu0 0
  %1807 = vmatpush1.bf16.msra.mxu0 0
  %1808 = vmatprep.subr.bf16.mxu0 0
  %1809 = vmatpush1.bf16.msra.mxu0 0
  %1810 = vmatprep.subr.bf16.mxu0 0
  %1811 = vmatpush1.bf16.msra.mxu0 0
  %1812 = vmatprep.subr.bf16.mxu0 0
  %1813 = vmatpush1.bf16.msra.mxu0 0
  %1814 = vmatprep.subr.bf16.mxu0 0
  %1815 = vmatpush1.bf16.msra.mxu0 0
  %1816 = vmatprep.subr.bf16.mxu0 0
  %1817 = vmatpush1.bf16.msra.mxu0 0
  %1818 = vmatprep.subr.bf16.mxu0 0
  %1819 = vmatpush1.bf16.msra.mxu0 0
  %1820 = vmatprep.subr.bf16.mxu0 0
  %1821 = vmatpush1.bf16.msra.mxu0 0
  %1822 = vmatprep.subr.bf16.mxu0 0
  %1823 = vmatpush1.bf16.msra.mxu0 0
  %1824 = vmatprep.mubr.bf16.mxu0 0
  %1825 = vmatmul.mubr.bf16.gmra.mrb[0].mxu0 %v1790
  %v1826 = vpop.f32.mrb[0].mxu0
  %v1827 = vadd.f32 0.0, %v1826
  %v1828 = vpop.f32.mrb[0].mxu0
  %v1829 = vpop.f32.mrb[0].mxu0
  %v1830 = vpop.f32.mrb[0].mxu0
  %1831 = vdwg.mxu0
  %v1832 = vadd.f32 %v1143, %v1827
  %v1833 = vtanh.pop %v1832
  %v1834 = vpack.c.bf16 %v1833, %v1833
  %v1836 = vsel %vm872, %v1834, 0
  %1838 = vmatprep.subr.bf16.mxu0 0
  %1839 = vmatpush1.bf16.msra.mxu0 %v1307
  %1840 = vmatprep.subr.bf16.mxu0 0
  %1841 = vmatpush1.bf16.msra.mxu0 %v1308
  %1842 = vmatprep.subr.bf16.mxu0 0
  %1843 = vmatpush1.bf16.msra.mxu0 0
  %1844 = vmatprep.subr.bf16.mxu0 0
  %1845 = vmatpush1.bf16.msra.mxu0 0
  %1846 = vmatprep.subr.bf16.mxu0 0
  %1847 = vmatpush1.bf16.msra.mxu0 0
  %1848 = vmatprep.subr.bf16.mxu0 0
  %1849 = vmatpush1.bf16.msra.mxu0 0
  %1850 = vmatprep.subr.bf16.mxu0 0
  %1851 = vmatpush1.bf16.msra.mxu0 0
  %1852 = vmatprep.subr.bf16.mxu0 0
  %1853 = vmatpush1.bf16.msra.mxu0 0
  %1854 = vmatprep.subr.bf16.mxu0 0
  %1855 = vmatpush1.bf16.msra.mxu0 0
  %1856 = vmatprep.subr.bf16.mxu0 0
  %1857 = vmatpush1.bf16.msra.mxu0 0
  %1858 = vmatprep.subr.bf16.mxu0 0
  %1859 = vmatpush1.bf16.msra.mxu0 0
  %1860 = vmatprep.subr.bf16.mxu0 0
  %1861 = vmatpush1.bf16.msra.mxu0 0
  %1862 = vmatprep.subr.bf16.mxu0 0
  %1863 = vmatpush1.bf16.msra.mxu0 0
  %1864 = vmatprep.subr.bf16.mxu0 0
  %1865 = vmatpush1.bf16.msra.mxu0 0
  %1866 = vmatprep.subr.bf16.mxu0 0
  %1867 = vmatpush1.bf16.msra.mxu0 0
  %1868 = vmatprep.subr.bf16.mxu0 0
  %1869 = vmatpush1.bf16.msra.mxu0 0
  %1870 = vmatprep.mubr.bf16.mxu0 0
  %1871 = vmatmul.mubr.bf16.gmra.mrb[0].mxu0 %v1836
  %v1872 = vpop.f32.mrb[0].mxu0
  %v1873 = vadd.f32 %v1298, %v1872
  %v1874 = vpop.f32.mrb[0].mxu0
  %v1875 = vpop.f32.mrb[0].mxu0
  %v1876 = vpop.f32.mrb[0].mxu0
  %1877 = vdwg.mxu0
  %v1878 = vsel %vm872, %v1873, -inf
  %1879 = vmax.xlane.f32.xlu0 %v1878
  %v1880 = vpop.xlane.xlu0 %1879
  %v1881 = vsub.f32 %v1873, %v1880
  %v1882 = vmul.f32 %v1881, 1.442695
  %v1883 = vpow.pop %v1882
  %v1884 = vsel %vm872, %v1883, 0.0
  %1885 = vadd.xlane.f32.xlu0 %v1884
  %v1886 = vpop.xlane.xlu0 %1885
  %v1887 = vrcp.pop %v1886
  %v1888 = vmul.f32 %v1883, %v1887
  %v1889 = vmul.f32 %v1888, %v854
  %1890 = vmatprep.subr.bf16.mxu0 0
  %1891 = vmatpush1.bf16.msra.mxu0 %v1383
  %1892 = vmatprep.subr.bf16.mxu0 0
  %1893 = vmatpush1.bf16.msra.mxu0 %v1384
  %1894 = vmatprep.subr.bf16.mxu0 0
  %1895 = vmatpush1.bf16.msra.mxu0 0
  %1896 = vmatprep.subr.bf16.mxu0 0
  %1897 = vmatpush1.bf16.msra.mxu0 0
  %1898 = vmatprep.subr.bf16.mxu0 0
  %1899 = vmatpush1.bf16.msra.mxu0 0
  %1900 = vmatprep.subr.bf16.mxu0 0
  %1901 = vmatpush1.bf16.msra.mxu0 0
  %1902 = vmatprep.subr.bf16.mxu0 0
  %1903 = vmatpush1.bf16.msra.mxu0 0
  %1904 = vmatprep.subr.bf16.mxu0 0
  %1905 = vmatpush1.bf16.msra.mxu0 0
  %1906 = vmatprep.subr.bf16.mxu0 0
  %1907 = vmatpush1.bf16.msra.mxu0 0
  %1908 = vmatprep.subr.bf16.mxu0 0
  %1909 = vmatpush1.bf16.msra.mxu0 0
  %1910 = vmatprep.subr.bf16.mxu0 0
  %1911 = vmatpush1.bf16.msra.mxu0 0
  %1912 = vmatprep.subr.bf16.mxu0 0
  %1913 = vmatpush1.bf16.msra.mxu0 0
  %1914 = vmatprep.subr.bf16.mxu0 0
  %1915 = vmatpush1.bf16.msra.mxu0 0
  %1916 = vmatprep.subr.bf16.mxu0 0
  %1917 = vmatpush1.bf16.msra.mxu0 0
  %1918 = vmatprep.subr.bf16.mxu0 0
  %1919 = vmatpush1.bf16.msra.mxu0 0
  %1920 = vmatprep.subr.bf16.mxu0 0
  %1921 = vmatpush1.bf16.msra.mxu0 0
  %1922 = vmatprep.mubr.bf16.mxu0 0
  %1923 = vmatmul.mubr.bf16.gmra.mrb[0].mxu0 %v1790
  %v1924 = vpop.f32.mrb[0].mxu0
  %v1925 = vadd.f32 %v1374, %v1924
  %v1926 = vpop.f32.mrb[0].mxu0
  %v1927 = vpop.f32.mrb[0].mxu0
  %v1928 = vpop.f32.mrb[0].mxu0
  %1929 = vdwg.mxu0
  %v1930 = vadd.f32 %v1212, %v1925
  %v1931 = vtanh.pop %v1930
  %v1932 = vmul.f32 %v1931, %v1432
  %v1933 = vsel %vm872, %v1932, 0.0
  %1934 = vadd.xlane.f32.xlu0 %v1933
  %v1935 = vpop.xlane.xlu0 %1934
  %v1936 = vadd.f32 %v1935, %v1440
  %v1937 = vadd.f32 %v1215, %v1925
  %v1938 = vtanh.pop %v1937
  %v1939 = vmul.f32 %v1938, %v1432
  %v1940 = vsel %vm872, %v1939, 0.0
  %1941 = vadd.xlane.f32.xlu0 %v1940
  %v1942 = vpop.xlane.xlu0 %1941
  %v1943 = vadd.f32 %v1942, %v1440
  %v1944 = vadd.f32 %v1220, %v1925
  %v1945 = vtanh.pop %v1944
  %v1946 = vmul.f32 %v1945, %v1432
  %v1947 = vsel %vm872, %v1946, 0.0
  %1948 = vadd.xlane.f32.xlu0 %v1947
  %v1949 = vpop.xlane.xlu0 %1948
  %v1950 = vadd.f32 %v1949, %v1440
  %v1951 = vadd.f32 %v1223, %v1925
  %v1952 = vtanh.pop %v1951
  %v1953 = vmul.f32 %v1952, %v1432
  %v1954 = vsel %vm872, %v1953, 0.0
  %1955 = vadd.xlane.f32.xlu0 %v1954
  %v1956 = vpop.xlane.xlu0 %1955
  %v1957 = vadd.f32 %v1956, %v1440
  %v1958 = vmax.f32 %v1936, %v1943
  %v1959 = vmax.f32 %v1958, %v1950
  %v1960 = vmax.f32 %v1959, %v1957
  %v1961 = vsub.f32 %v1936, %v1960
  %v1962 = vmul.f32 %v1961, 1.442695
  %v1963 = vpow.pop %v1962
  %v1964 = vsub.f32 %v1943, %v1960
  %v1965 = vmul.f32 %v1964, 1.442695
  %v1966 = vpow.pop %v1965
  %v1967 = vsub.f32 %v1950, %v1960
  %v1968 = vmul.f32 %v1967, 1.442695
  %v1969 = vpow.pop %v1968
  %v1970 = vsub.f32 %v1957, %v1960
  %v1971 = vmul.f32 %v1970, 1.442695
  %v1972 = vpow.pop %v1971
  %v1973 = vadd.f32 %v1963, %v1966
  %v1974 = vadd.f32 %v1973, %v1969
  %v1975 = vadd.f32 %v1974, %v1972
  %v1976 = vrcp.pop %v1975
  %v1977 = vmul.f32 %v1963, %v1976
  %1979 = vset.pattern.permute.xlu0 0
  %1980 = vperm.xlu0 %1979, %v1977
  %v1981 = vpop.permute.xlu0 %1980
  %v1983 = vmul.f32 %v1981, %v1069
  %v1984 = vmul.f32 %v1966, %v1976
  %1986 = vset.pattern.permute.xlu0 0
  %1987 = vperm.xlu0 %1986, %v1984
  %v1988 = vpop.permute.xlu0 %1987
  %v1990 = vmul.f32 %v1988, %v1074
  %v1991 = vadd.f32 %v1983, %v1990
  %v1992 = vmul.f32 %v1969, %v1976
  %1994 = vset.pattern.permute.xlu0 0
  %1995 = vperm.xlu0 %1994, %v1992
  %v1996 = vpop.permute.xlu0 %1995
  %v1998 = vmul.f32 %v1996, %v1079
  %v1999 = vadd.f32 %v1991, %v1998
  %v2000 = vmul.f32 %v1972, %v1976
  %2002 = vset.pattern.permute.xlu0 0
  %2003 = vperm.xlu0 %2002, %v2000
  %v2004 = vpop.permute.xlu0 %2003
  %v2006 = vmul.f32 %v2004, %v1084
  %v2007 = vadd.f32 %v1999, %v2006
  %v2008 = vpack.c.bf16 %v1889, %v1889
  %v2009 = vpack.c.bf16 %v2007, %v2007
  %v2011 = vsel %vm872, %v2009, 0
  %2013 = vmatprep.subr.bf16.mxu0 0
  %2014 = vmatpush1.bf16.msra.mxu0 %v1531
  %2015 = vmatprep.subr.bf16.mxu0 0
  %2016 = vmatpush1.bf16.msra.mxu0 %v1532
  %2017 = vmatprep.subr.bf16.mxu0 0
  %2018 = vmatpush1.bf16.msra.mxu0 0
  %2019 = vmatprep.subr.bf16.mxu0 0
  %2020 = vmatpush1.bf16.msra.mxu0 0
  %2021 = vmatprep.subr.bf16.mxu0 0
  %2022 = vmatpush1.bf16.msra.mxu0 0
  %2023 = vmatprep.subr.bf16.mxu0 0
  %2024 = vmatpush1.bf16.msra.mxu0 0
  %2025 = vmatprep.subr.bf16.mxu0 0
  %2026 = vmatpush1.bf16.msra.mxu0 0
  %2027 = vmatprep.subr.bf16.mxu0 0
  %2028 = vmatpush1.bf16.msra.mxu0 0
  %2029 = vmatprep.subr.bf16.mxu0 0
  %2030 = vmatpush1.bf16.msra.mxu0 0
  %2031 = vmatprep.subr.bf16.mxu0 0
  %2032 = vmatpush1.bf16.msra.mxu0 0
  %2033 = vmatprep.subr.bf16.mxu0 0
  %2034 = vmatpush1.bf16.msra.mxu0 0
  %2035 = vmatprep.subr.bf16.mxu0 0
  %2036 = vmatpush1.bf16.msra.mxu0 0
  %2037 = vmatprep.subr.bf16.mxu0 0
  %2038 = vmatpush1.bf16.msra.mxu0 0
  %2039 = vmatprep.subr.bf16.mxu0 0
  %2040 = vmatpush1.bf16.msra.mxu0 0
  %2041 = vmatprep.subr.bf16.mxu0 0
  %2042 = vmatpush1.bf16.msra.mxu0 0
  %2043 = vmatprep.subr.bf16.mxu0 0
  %2044 = vmatpush1.bf16.msra.mxu0 0
  %2045 = vmatprep.mubr.bf16.mxu0 0
  %2046 = vmatmul.mubr.bf16.gmra.mrb[0].mxu0 %v2011
  %v2047 = vpop.f32.mrb[0].mxu0
  %v2048 = vadd.f32 0.0, %v2047
  %v2049 = vpop.f32.mrb[0].mxu0
  %v2050 = vpop.f32.mrb[0].mxu0
  %v2051 = vpop.f32.mrb[0].mxu0
  %2052 = vdwg.mxu0
  %v2054 = vsel %vm872, %v2008, 0
  %2056 = vmatprep.subr.bf16.mxu0 0
  %2057 = vmatpush1.bf16.msra.mxu0 %v1586
  %2058 = vmatprep.subr.bf16.mxu0 0
  %2059 = vmatpush1.bf16.msra.mxu0 %v1587
  %2060 = vmatprep.subr.bf16.mxu0 0
  %2061 = vmatpush1.bf16.msra.mxu0 0
  %2062 = vmatprep.subr.bf16.mxu0 0
  %2063 = vmatpush1.bf16.msra.mxu0 0
  %2064 = vmatprep.subr.bf16.mxu0 0
  %2065 = vmatpush1.bf16.msra.mxu0 0
  %2066 = vmatprep.subr.bf16.mxu0 0
  %2067 = vmatpush1.bf16.msra.mxu0 0
  %2068 = vmatprep.subr.bf16.mxu0 0
  %2069 = vmatpush1.bf16.msra.mxu0 0
  %2070 = vmatprep.subr.bf16.mxu0 0
  %2071 = vmatpush1.bf16.msra.mxu0 0
  %2072 = vmatprep.subr.bf16.mxu0 0
  %2073 = vmatpush1.bf16.msra.mxu0 0
  %2074 = vmatprep.subr.bf16.mxu0 0
  %2075 = vmatpush1.bf16.msra.mxu0 0
  %2076 = vmatprep.subr.bf16.mxu0 0
  %2077 = vmatpush1.bf16.msra.mxu0 0
  %2078 = vmatprep.subr.bf16.mxu0 0
  %2079 = vmatpush1.bf16.msra.mxu0 0
  %2080 = vmatprep.subr.bf16.mxu0 0
  %2081 = vmatpush1.bf16.msra.mxu0 0
  %2082 = vmatprep.subr.bf16.mxu0 0
  %2083 = vmatpush1.bf16.msra.mxu0 0
  %2084 = vmatprep.subr.bf16.mxu0 0
  %2085 = vmatpush1.bf16.msra.mxu0 0
  %2086 = vmatprep.subr.bf16.mxu0 0
  %2087 = vmatpush1.bf16.msra.mxu0 0
  %2088 = vmatprep.mubr.bf16.mxu0 0
  %2089 = vmatmul.mubr.bf16.gmra.mrb[0].mxu0 %v2054
  %v2090 = vpop.f32.mrb[0].mxu0
  %v2091 = vadd.f32 %v2048, %v2090
  %v2092 = vpop.f32.mrb[0].mxu0
  %v2093 = vpop.f32.mrb[0].mxu0
  %v2094 = vpop.f32.mrb[0].mxu0
  %2095 = vdwg.mxu0
  %v2096 = vadd.f32 %v2091, %v1637
  %v2097 = vpack.c.bf16 %v2096, %v2096
  %2098 = vmatprep.subr.bf16.mxu0 0
  %2099 = vmatpush1.bf16.msra.mxu0 %v1656
  %2100 = vmatprep.subr.bf16.mxu0 0
  %2101 = vmatpush1.bf16.msra.mxu0 %v1657
  %2102 = vmatprep.subr.bf16.mxu0 0
  %2103 = vmatpush1.bf16.msra.mxu0 0
  %2104 = vmatprep.subr.bf16.mxu0 0
  %2105 = vmatpush1.bf16.msra.mxu0 0
  %2106 = vmatprep.subr.bf16.mxu0 0
  %2107 = vmatpush1.bf16.msra.mxu0 0
  %2108 = vmatprep.subr.bf16.mxu0 0
  %2109 = vmatpush1.bf16.msra.mxu0 0
  %2110 = vmatprep.subr.bf16.mxu0 0
  %2111 = vmatpush1.bf16.msra.mxu0 0
  %2112 = vmatprep.subr.bf16.mxu0 0
  %2113 = vmatpush1.bf16.msra.mxu0 0
  %2114 = vmatprep.subr.bf16.mxu0 0
  %2115 = vmatpush1.bf16.msra.mxu0 0
  %2116 = vmatprep.subr.bf16.mxu0 0
  %2117 = vmatpush1.bf16.msra.mxu0 0
  %2118 = vmatprep.subr.bf16.mxu0 0
  %2119 = vmatpush1.bf16.msra.mxu0 0
  %2120 = vmatprep.subr.bf16.mxu0 0
  %2121 = vmatpush1.bf16.msra.mxu0 0
  %2122 = vmatprep.subr.bf16.mxu0 0
  %2123 = vmatpush1.bf16.msra.mxu0 0
  %2124 = vmatprep.subr.bf16.mxu0 0
  %2125 = vmatpush1.bf16.msra.mxu0 0
  %2126 = vmatprep.subr.bf16.mxu0 0
  %2127 = vmatpush1.bf16.msra.mxu0 0
  %2128 = vmatprep.subr.bf16.mxu0 0
  %2129 = vmatpush1.bf16.msra.mxu0 0
  %2130 = vmatprep.mubr.bf16.mxu0 0
  %2131 = vmatmul.mubr.bf16.gmra.mrb[0].mxu0 %v1790
  %v2132 = vpop.f32.mrb[0].mxu0
  %v2133 = vadd.f32 0.0, %v2132
  %v2134 = vpop.f32.mrb[0].mxu0
  %v2135 = vpop.f32.mrb[0].mxu0
  %v2136 = vpop.f32.mrb[0].mxu0
  %2137 = vdwg.mxu0
  %v2139 = vsel %vm872, %v2097, 0
  %2141 = vmatprep.subr.bf16.mxu0 0
  %2142 = vmatpush1.bf16.msra.mxu0 %v1708
  %2143 = vmatprep.subr.bf16.mxu0 0
  %2144 = vmatpush1.bf16.msra.mxu0 %v1709
  %2145 = vmatprep.subr.bf16.mxu0 0
  %2146 = vmatpush1.bf16.msra.mxu0 0
  %2147 = vmatprep.subr.bf16.mxu0 0
  %2148 = vmatpush1.bf16.msra.mxu0 0
  %2149 = vmatprep.subr.bf16.mxu0 0
  %2150 = vmatpush1.bf16.msra.mxu0 0
  %2151 = vmatprep.subr.bf16.mxu0 0
  %2152 = vmatpush1.bf16.msra.mxu0 0
  %2153 = vmatprep.subr.bf16.mxu0 0
  %2154 = vmatpush1.bf16.msra.mxu0 0
  %2155 = vmatprep.subr.bf16.mxu0 0
  %2156 = vmatpush1.bf16.msra.mxu0 0
  %2157 = vmatprep.subr.bf16.mxu0 0
  %2158 = vmatpush1.bf16.msra.mxu0 0
  %2159 = vmatprep.subr.bf16.mxu0 0
  %2160 = vmatpush1.bf16.msra.mxu0 0
  %2161 = vmatprep.subr.bf16.mxu0 0
  %2162 = vmatpush1.bf16.msra.mxu0 0
  %2163 = vmatprep.subr.bf16.mxu0 0
  %2164 = vmatpush1.bf16.msra.mxu0 0
  %2165 = vmatprep.subr.bf16.mxu0 0
  %2166 = vmatpush1.bf16.msra.mxu0 0
  %2167 = vmatprep.subr.bf16.mxu0 0
  %2168 = vmatpush1.bf16.msra.mxu0 0
  %2169 = vmatprep.subr.bf16.mxu0 0
  %2170 = vmatpush1.bf16.msra.mxu0 0
  %2171 = vmatprep.subr.bf16.mxu0 0
  %2172 = vmatpush1.bf16.msra.mxu0 0
  %2173 = vmatprep.mubr.bf16.mxu0 0
  %2174 = vmatmul.mubr.bf16.gmra.mrb[0].mxu0 %v2139
  %v2175 = vpop.f32.mrb[0].mxu0
  %v2176 = vadd.f32 %v2133, %v2175
  %v2177 = vpop.f32.mrb[0].mxu0
  %v2178 = vpop.f32.mrb[0].mxu0
  %v2179 = vpop.f32.mrb[0].mxu0
  %2180 = vdwg.mxu0
  %v2181 = vadd.f32 %v2176, %v1759
  %v2182 = vxor.u32 %v2181, 2147483648
  %v2183 = vmul.f32 %v2182, 1.442695
  %v2184 = vpow.pop %v2183
  %v2185 = vadd.f32 %v2184, 1.0
  %v2186 = vrcp.pop %v2185
  %v2187 = vmul.f32 1.0, %v2186
  %v2188 = vtanh.pop %v2181
  %v2189 = vmul.f32 %v2187, %v1778
  %2191 = vrot.lane.b32.xlu0 %v2188, 64
  %v2192 = vpop.permute.xlu0 %2191
  %v2194 = vmul.f32 %v2187, %v2192
  %2196 = vrot.lane.b32.xlu0 %v2194, 32
  %v2197 = vpop.permute.xlu0 %2196
  %v2199 = vadd.f32 %v2189, %v2197
  %v2200 = vtanh.pop %v2199
  %2202 = vrot.lane.b32.xlu0 %v2200, 64
  %v2203 = vpop.permute.xlu0 %2202
  %v2205 = vmul.f32 %v2187, %v2203
  %v2206 = vpack.c.bf16 %v2205, %v2205
  %2208 = vrot.lane.b32.xlu0 %v2206, 32
  %v2209 = vpop.permute.xlu0 %2208
  %v2211 = vsel %vm872, %v2209, 0
  %2213 = vmatprep.subr.bf16.mxu0 0
  %2214 = vmatpush1.bf16.msra.mxu0 %v1240
  %2215 = vmatprep.subr.bf16.mxu0 0
  %2216 = vmatpush1.bf16.msra.mxu0 %v1241
  %2217 = vmatprep.subr.bf16.mxu0 0
  %2218 = vmatpush1.bf16.msra.mxu0 0
  %2219 = vmatprep.subr.bf16.mxu0 0
  %2220 = vmatpush1.bf16.msra.mxu0 0
  %2221 = vmatprep.subr.bf16.mxu0 0
  %2222 = vmatpush1.bf16.msra.mxu0 0
  %2223 = vmatprep.subr.bf16.mxu0 0
  %2224 = vmatpush1.bf16.msra.mxu0 0
  %2225 = vmatprep.subr.bf16.mxu0 0
  %2226 = vmatpush1.bf16.msra.mxu0 0
  %2227 = vmatprep.subr.bf16.mxu0 0
  %2228 = vmatpush1.bf16.msra.mxu0 0
  %2229 = vmatprep.subr.bf16.mxu0 0
  %2230 = vmatpush1.bf16.msra.mxu0 0
  %2231 = vmatprep.subr.bf16.mxu0 0
  %2232 = vmatpush1.bf16.msra.mxu0 0
  %2233 = vmatprep.subr.bf16.mxu0 0
  %2234 = vmatpush1.bf16.msra.mxu0 0
  %2235 = vmatprep.subr.bf16.mxu0 0
  %2236 = vmatpush1.bf16.msra.mxu0 0
  %2237 = vmatprep.subr.bf16.mxu0 0
  %2238 = vmatpush1.bf16.msra.mxu0 0
  %2239 = vmatprep.subr.bf16.mxu0 0
  %2240 = vmatpush1.bf16.msra.mxu0 0
  %2241 = vmatprep.subr.bf16.mxu0 0
  %2242 = vmatpush1.bf16.msra.mxu0 0
  %2243 = vmatprep.subr.bf16.mxu0 0
  %2244 = vmatpush1.bf16.msra.mxu0 0
  %2245 = vmatprep.mubr.bf16.mxu0 0
  %2246 = vmatmul.mubr.bf16.gmra.mrb[0].mxu0 %v2211
  %v2247 = vpop.f32.mrb[0].mxu0
  %v2248 = vadd.f32 0.0, %v2247
  %v2249 = vpop.f32.mrb[0].mxu0
  %v2250 = vpop.f32.mrb[0].mxu0
  %v2251 = vpop.f32.mrb[0].mxu0
  %2252 = vdwg.mxu0
  %v2253 = vadd.f32 %v1143, %v2248
  %v2254 = vtanh.pop %v2253
  %v2255 = vpack.c.bf16 %v2254, %v2254
  %v2257 = vsel %vm872, %v2255, 0
  %2259 = vmatprep.subr.bf16.mxu0 0
  %2260 = vmatpush1.bf16.msra.mxu0 %v1307
  %2261 = vmatprep.subr.bf16.mxu0 0
  %2262 = vmatpush1.bf16.msra.mxu0 %v1308
  %2263 = vmatprep.subr.bf16.mxu0 0
  %2264 = vmatpush1.bf16.msra.mxu0 0
  %2265 = vmatprep.subr.bf16.mxu0 0
  %2266 = vmatpush1.bf16.msra.mxu0 0
  %2267 = vmatprep.subr.bf16.mxu0 0
  %2268 = vmatpush1.bf16.msra.mxu0 0
  %2269 = vmatprep.subr.bf16.mxu0 0
  %2270 = vmatpush1.bf16.msra.mxu0 0
  %2271 = vmatprep.subr.bf16.mxu0 0
  %2272 = vmatpush1.bf16.msra.mxu0 0
  %2273 = vmatprep.subr.bf16.mxu0 0
  %2274 = vmatpush1.bf16.msra.mxu0 0
  %2275 = vmatprep.subr.bf16.mxu0 0
  %2276 = vmatpush1.bf16.msra.mxu0 0
  %2277 = vmatprep.subr.bf16.mxu0 0
  %2278 = vmatpush1.bf16.msra.mxu0 0
  %2279 = vmatprep.subr.bf16.mxu0 0
  %2280 = vmatpush1.bf16.msra.mxu0 0
  %2281 = vmatprep.subr.bf16.mxu0 0
  %2282 = vmatpush1.bf16.msra.mxu0 0
  %2283 = vmatprep.subr.bf16.mxu0 0
  %2284 = vmatpush1.bf16.msra.mxu0 0
  %2285 = vmatprep.subr.bf16.mxu0 0
  %2286 = vmatpush1.bf16.msra.mxu0 0
  %2287 = vmatprep.subr.bf16.mxu0 0
  %2288 = vmatpush1.bf16.msra.mxu0 0
  %2289 = vmatprep.subr.bf16.mxu0 0
  %2290 = vmatpush1.bf16.msra.mxu0 0
  %2291 = vmatprep.mubr.bf16.mxu0 0
  %2292 = vmatmul.mubr.bf16.gmra.mrb[0].mxu0 %v2257
  %v2293 = vpop.f32.mrb[0].mxu0
  %v2294 = vadd.f32 %v1298, %v2293
  %v2295 = vpop.f32.mrb[0].mxu0
  %v2296 = vpop.f32.mrb[0].mxu0
  %v2297 = vpop.f32.mrb[0].mxu0
  %2298 = vdwg.mxu0
  %v2299 = vsel %vm872, %v2294, -inf
  %2300 = vmax.xlane.f32.xlu0 %v2299
  %v2301 = vpop.xlane.xlu0 %2300
  %v2302 = vsub.f32 %v2294, %v2301
  %v2303 = vmul.f32 %v2302, 1.442695
  %v2304 = vpow.pop %v2303
  %v2305 = vsel %vm872, %v2304, 0.0
  %2306 = vadd.xlane.f32.xlu0 %v2305
  %v2307 = vpop.xlane.xlu0 %2306
  %v2308 = vrcp.pop %v2307
  %v2309 = vmul.f32 %v2304, %v2308
  %v2310 = vmul.f32 %v2309, %v854
  %2311 = vmatprep.subr.bf16.mxu0 0
  %2312 = vmatpush1.bf16.msra.mxu0 %v1383
  %2313 = vmatprep.subr.bf16.mxu0 0
  %2314 = vmatpush1.bf16.msra.mxu0 %v1384
  %2315 = vmatprep.subr.bf16.mxu0 0
  %2316 = vmatpush1.bf16.msra.mxu0 0
  %2317 = vmatprep.subr.bf16.mxu0 0
  %2318 = vmatpush1.bf16.msra.mxu0 0
  %2319 = vmatprep.subr.bf16.mxu0 0
  %2320 = vmatpush1.bf16.msra.mxu0 0
  %2321 = vmatprep.subr.bf16.mxu0 0
  %2322 = vmatpush1.bf16.msra.mxu0 0
  %2323 = vmatprep.subr.bf16.mxu0 0
  %2324 = vmatpush1.bf16.msra.mxu0 0
  %2325 = vmatprep.subr.bf16.mxu0 0
  %2326 = vmatpush1.bf16.msra.mxu0 0
  %2327 = vmatprep.subr.bf16.mxu0 0
  %2328 = vmatpush1.bf16.msra.mxu0 0
  %2329 = vmatprep.subr.bf16.mxu0 0
  %2330 = vmatpush1.bf16.msra.mxu0 0
  %2331 = vmatprep.subr.bf16.mxu0 0
  %2332 = vmatpush1.bf16.msra.mxu0 0
  %2333 = vmatprep.subr.bf16.mxu0 0
  %2334 = vmatpush1.bf16.msra.mxu0 0
  %2335 = vmatprep.subr.bf16.mxu0 0
  %2336 = vmatpush1.bf16.msra.mxu0 0
  %2337 = vmatprep.subr.bf16.mxu0 0
  %2338 = vmatpush1.bf16.msra.mxu0 0
  %2339 = vmatprep.subr.bf16.mxu0 0
  %2340 = vmatpush1.bf16.msra.mxu0 0
  %2341 = vmatprep.subr.bf16.mxu0 0
  %2342 = vmatpush1.bf16.msra.mxu0 0
  %2343 = vmatprep.mubr.bf16.mxu0 0
  %2344 = vmatmul.mubr.bf16.gmra.mrb[0].mxu0 %v2211
  %v2345 = vpop.f32.mrb[0].mxu0
  %v2346 = vadd.f32 %v1374, %v2345
  %v2347 = vpop.f32.mrb[0].mxu0
  %v2348 = vpop.f32.mrb[0].mxu0
  %v2349 = vpop.f32.mrb[0].mxu0
  %2350 = vdwg.mxu0
  %v2351 = vadd.f32 %v1212, %v2346
  %v2352 = vtanh.pop %v2351
  %v2353 = vmul.f32 %v2352, %v1432
  %v2354 = vsel %vm872, %v2353, 0.0
  %2355 = vadd.xlane.f32.xlu0 %v2354
  %v2356 = vpop.xlane.xlu0 %2355
  %v2357 = vadd.f32 %v2356, %v1440
  %v2358 = vadd.f32 %v1215, %v2346
  %v2359 = vtanh.pop %v2358
  %v2360 = vmul.f32 %v2359, %v1432
  %v2361 = vsel %vm872, %v2360, 0.0
  %2362 = vadd.xlane.f32.xlu0 %v2361
  %v2363 = vpop.xlane.xlu0 %2362
  %v2364 = vadd.f32 %v2363, %v1440
  %v2365 = vadd.f32 %v1220, %v2346
  %v2366 = vtanh.pop %v2365
  %v2367 = vmul.f32 %v2366, %v1432
  %v2368 = vsel %vm872, %v2367, 0.0
  %2369 = vadd.xlane.f32.xlu0 %v2368
  %v2370 = vpop.xlane.xlu0 %2369
  %v2371 = vadd.f32 %v2370, %v1440
  %v2372 = vadd.f32 %v1223, %v2346
  %v2373 = vtanh.pop %v2372
  %v2374 = vmul.f32 %v2373, %v1432
  %v2375 = vsel %vm872, %v2374, 0.0
  %2376 = vadd.xlane.f32.xlu0 %v2375
  %v2377 = vpop.xlane.xlu0 %2376
  %v2378 = vadd.f32 %v2377, %v1440
  %v2379 = vmax.f32 %v2357, %v2364
  %v2380 = vmax.f32 %v2379, %v2371
  %v2381 = vmax.f32 %v2380, %v2378
  %v2382 = vsub.f32 %v2357, %v2381
  %v2383 = vmul.f32 %v2382, 1.442695
  %v2384 = vpow.pop %v2383
  %v2385 = vsub.f32 %v2364, %v2381
  %v2386 = vmul.f32 %v2385, 1.442695
  %v2387 = vpow.pop %v2386
  %v2388 = vsub.f32 %v2371, %v2381
  %v2389 = vmul.f32 %v2388, 1.442695
  %v2390 = vpow.pop %v2389
  %v2391 = vsub.f32 %v2378, %v2381
  %v2392 = vmul.f32 %v2391, 1.442695
  %v2393 = vpow.pop %v2392
  %v2394 = vadd.f32 %v2384, %v2387
  %v2395 = vadd.f32 %v2394, %v2390
  %v2396 = vadd.f32 %v2395, %v2393
  %v2397 = vrcp.pop %v2396
  %v2398 = vmul.f32 %v2384, %v2397
  %2400 = vset.pattern.permute.xlu0 0
  %2401 = vperm.xlu0 %2400, %v2398
  %v2402 = vpop.permute.xlu0 %2401
  %v2404 = vmul.f32 %v2402, %v1069
  %v2405 = vmul.f32 %v2387, %v2397
  %2407 = vset.pattern.permute.xlu0 0
  %2408 = vperm.xlu0 %2407, %v2405
  %v2409 = vpop.permute.xlu0 %2408
  %v2411 = vmul.f32 %v2409, %v1074
  %v2412 = vadd.f32 %v2404, %v2411
  %v2413 = vmul.f32 %v2390, %v2397
  %2415 = vset.pattern.permute.xlu0 0
  %2416 = vperm.xlu0 %2415, %v2413
  %v2417 = vpop.permute.xlu0 %2416
  %v2419 = vmul.f32 %v2417, %v1079
  %v2420 = vadd.f32 %v2412, %v2419
  %v2421 = vmul.f32 %v2393, %v2397
  %2423 = vset.pattern.permute.xlu0 0
  %2424 = vperm.xlu0 %2423, %v2421
  %v2425 = vpop.permute.xlu0 %2424
  %v2427 = vmul.f32 %v2425, %v1084
  %v2428 = vadd.f32 %v2420, %v2427
  %v2429 = vpack.c.bf16 %v2310, %v2310
  %v2430 = vpack.c.bf16 %v2428, %v2428
  %v2432 = vsel %vm872, %v2430, 0
  %2434 = vmatprep.subr.bf16.mxu0 0
  %2435 = vmatpush1.bf16.msra.mxu0 %v1531
  %2436 = vmatprep.subr.bf16.mxu0 0
  %2437 = vmatpush1.bf16.msra.mxu0 %v1532
  %2438 = vmatprep.subr.bf16.mxu0 0
  %2439 = vmatpush1.bf16.msra.mxu0 0
  %2440 = vmatprep.subr.bf16.mxu0 0
  %2441 = vmatpush1.bf16.msra.mxu0 0
  %2442 = vmatprep.subr.bf16.mxu0 0
  %2443 = vmatpush1.bf16.msra.mxu0 0
  %2444 = vmatprep.subr.bf16.mxu0 0
  %2445 = vmatpush1.bf16.msra.mxu0 0
  %2446 = vmatprep.subr.bf16.mxu0 0
  %2447 = vmatpush1.bf16.msra.mxu0 0
  %2448 = vmatprep.subr.bf16.mxu0 0
  %2449 = vmatpush1.bf16.msra.mxu0 0
  %2450 = vmatprep.subr.bf16.mxu0 0
  %2451 = vmatpush1.bf16.msra.mxu0 0
  %2452 = vmatprep.subr.bf16.mxu0 0
  %2453 = vmatpush1.bf16.msra.mxu0 0
  %2454 = vmatprep.subr.bf16.mxu0 0
  %2455 = vmatpush1.bf16.msra.mxu0 0
  %2456 = vmatprep.subr.bf16.mxu0 0
  %2457 = vmatpush1.bf16.msra.mxu0 0
  %2458 = vmatprep.subr.bf16.mxu0 0
  %2459 = vmatpush1.bf16.msra.mxu0 0
  %2460 = vmatprep.subr.bf16.mxu0 0
  %2461 = vmatpush1.bf16.msra.mxu0 0
  %2462 = vmatprep.subr.bf16.mxu0 0
  %2463 = vmatpush1.bf16.msra.mxu0 0
  %2464 = vmatprep.subr.bf16.mxu0 0
  %2465 = vmatpush1.bf16.msra.mxu0 0
  %2466 = vmatprep.mubr.bf16.mxu0 0
  %2467 = vmatmul.mubr.bf16.gmra.mrb[0].mxu0 %v2432
  %v2468 = vpop.f32.mrb[0].mxu0
  %v2469 = vadd.f32 0.0, %v2468
  %v2470 = vpop.f32.mrb[0].mxu0
  %v2471 = vpop.f32.mrb[0].mxu0
  %v2472 = vpop.f32.mrb[0].mxu0
  %2473 = vdwg.mxu0
  %v2475 = vsel %vm872, %v2429, 0
  %2477 = vmatprep.subr.bf16.mxu0 0
  %2478 = vmatpush1.bf16.msra.mxu0 %v1586
  %2479 = vmatprep.subr.bf16.mxu0 0
  %2480 = vmatpush1.bf16.msra.mxu0 %v1587
  %2481 = vmatprep.subr.bf16.mxu0 0
  %2482 = vmatpush1.bf16.msra.mxu0 0
  %2483 = vmatprep.subr.bf16.mxu0 0
  %2484 = vmatpush1.bf16.msra.mxu0 0
  %2485 = vmatprep.subr.bf16.mxu0 0
  %2486 = vmatpush1.bf16.msra.mxu0 0
  %2487 = vmatprep.subr.bf16.mxu0 0
  %2488 = vmatpush1.bf16.msra.mxu0 0
  %2489 = vmatprep.subr.bf16.mxu0 0
  %2490 = vmatpush1.bf16.msra.mxu0 0
  %2491 = vmatprep.subr.bf16.mxu0 0
  %2492 = vmatpush1.bf16.msra.mxu0 0
  %2493 = vmatprep.subr.bf16.mxu0 0
  %2494 = vmatpush1.bf16.msra.mxu0 0
  %2495 = vmatprep.subr.bf16.mxu0 0
  %2496 = vmatpush1.bf16.msra.mxu0 0
  %2497 = vmatprep.subr.bf16.mxu0 0
  %2498 = vmatpush1.bf16.msra.mxu0 0
  %2499 = vmatprep.subr.bf16.mxu0 0
  %2500 = vmatpush1.bf16.msra.mxu0 0
  %2501 = vmatprep.subr.bf16.mxu0 0
  %2502 = vmatpush1.bf16.msra.mxu0 0
  %2503 = vmatprep.subr.bf16.mxu0 0
  %2504 = vmatpush1.bf16.msra.mxu0 0
  %2505 = vmatprep.subr.bf16.mxu0 0
  %2506 = vmatpush1.bf16.msra.mxu0 0
  %2507 = vmatprep.subr.bf16.mxu0 0
  %2508 = vmatpush1.bf16.msra.mxu0 0
  %2509 = vmatprep.mubr.bf16.mxu0 0
  %2510 = vmatmul.mubr.bf16.gmra.mrb[0].mxu0 %v2475
  %v2511 = vpop.f32.mrb[0].mxu0
  %v2512 = vadd.f32 %v2469, %v2511
  %v2513 = vpop.f32.mrb[0].mxu0
  %v2514 = vpop.f32.mrb[0].mxu0
  %v2515 = vpop.f32.mrb[0].mxu0
  %2516 = vdwg.mxu0
  %v2517 = vadd.f32 %v2512, %v1637
  %v2518 = vpack.c.bf16 %v2517, %v2517
  %2519 = vmatprep.subr.bf16.mxu0 0
  %2520 = vmatpush1.bf16.msra.mxu0 %v1656
  %2521 = vmatprep.subr.bf16.mxu0 0
  %2522 = vmatpush1.bf16.msra.mxu0 %v1657
  %2523 = vmatprep.subr.bf16.mxu0 0
  %2524 = vmatpush1.bf16.msra.mxu0 0
  %2525 = vmatprep.subr.bf16.mxu0 0
  %2526 = vmatpush1.bf16.msra.mxu0 0
  %2527 = vmatprep.subr.bf16.mxu0 0
  %2528 = vmatpush1.bf16.msra.mxu0 0
  %2529 = vmatprep.subr.bf16.mxu0 0
  %2530 = vmatpush1.bf16.msra.mxu0 0
  %2531 = vmatprep.subr.bf16.mxu0 0
  %2532 = vmatpush1.bf16.msra.mxu0 0
  %2533 = vmatprep.subr.bf16.mxu0 0
  %2534 = vmatpush1.bf16.msra.mxu0 0
  %2535 = vmatprep.subr.bf16.mxu0 0
  %2536 = vmatpush1.bf16.msra.mxu0 0
  %2537 = vmatprep.subr.bf16.mxu0 0
  %2538 = vmatpush1.bf16.msra.mxu0 0
  %2539 = vmatprep.subr.bf16.mxu0 0
  %2540 = vmatpush1.bf16.msra.mxu0 0
  %2541 = vmatprep.subr.bf16.mxu0 0
  %2542 = vmatpush1.bf16.msra.mxu0 0
  %2543 = vmatprep.subr.bf16.mxu0 0
  %2544 = vmatpush1.bf16.msra.mxu0 0
  %2545 = vmatprep.subr.bf16.mxu0 0
  %2546 = vmatpush1.bf16.msra.mxu0 0
  %2547 = vmatprep.subr.bf16.mxu0 0
  %2548 = vmatpush1.bf16.msra.mxu0 0
  %2549 = vmatprep.subr.bf16.mxu0 0
  %2550 = vmatpush1.bf16.msra.mxu0 0
  %2551 = vmatprep.mubr.bf16.mxu0 0
  %2552 = vmatmul.mubr.bf16.gmra.mrb[0].mxu0 %v2211
  %v2553 = vpop.f32.mrb[0].mxu0
  %v2554 = vadd.f32 0.0, %v2553
  %v2555 = vpop.f32.mrb[0].mxu0
  %v2556 = vpop.f32.mrb[0].mxu0
  %v2557 = vpop.f32.mrb[0].mxu0
  %2558 = vdwg.mxu0
  %v2560 = vsel %vm872, %v2518, 0
  %2562 = vmatprep.subr.bf16.mxu0 0
  %2563 = vmatpush1.bf16.msra.mxu0 %v1708
  %2564 = vmatprep.subr.bf16.mxu0 0
  %2565 = vmatpush1.bf16.msra.mxu0 %v1709
  %2566 = vmatprep.subr.bf16.mxu0 0
  %2567 = vmatpush1.bf16.msra.mxu0 0
  %2568 = vmatprep.subr.bf16.mxu0 0
  %2569 = vmatpush1.bf16.msra.mxu0 0
  %2570 = vmatprep.subr.bf16.mxu0 0
  %2571 = vmatpush1.bf16.msra.mxu0 0
  %2572 = vmatprep.subr.bf16.mxu0 0
  %2573 = vmatpush1.bf16.msra.mxu0 0
  %2574 = vmatprep.subr.bf16.mxu0 0
  %2575 = vmatpush1.bf16.msra.mxu0 0
  %2576 = vmatprep.subr.bf16.mxu0 0
  %2577 = vmatpush1.bf16.msra.mxu0 0
  %2578 = vmatprep.subr.bf16.mxu0 0
  %2579 = vmatpush1.bf16.msra.mxu0 0
  %2580 = vmatprep.subr.bf16.mxu0 0
  %2581 = vmatpush1.bf16.msra.mxu0 0
  %2582 = vmatprep.subr.bf16.mxu0 0
  %2583 = vmatpush1.bf16.msra.mxu0 0
  %2584 = vmatprep.subr.bf16.mxu0 0
  %2585 = vmatpush1.bf16.msra.mxu0 0
  %2586 = vmatprep.subr.bf16.mxu0 0
  %2587 = vmatpush1.bf16.msra.mxu0 0
  %2588 = vmatprep.subr.bf16.mxu0 0
  %2589 = vmatpush1.bf16.msra.mxu0 0
  %2590 = vmatprep.subr.bf16.mxu0 0
  %2591 = vmatpush1.bf16.msra.mxu0 0
  %2592 = vmatprep.subr.bf16.mxu0 0
  %2593 = vmatpush1.bf16.msra.mxu0 0
  %2594 = vmatprep.mubr.bf16.mxu0 0
  %2595 = vmatmul.mubr.bf16.gmra.mrb[0].mxu0 %v2560
  %v2596 = vpop.f32.mrb[0].mxu0
  %v2597 = vadd.f32 %v2554, %v2596
  %v2598 = vpop.f32.mrb[0].mxu0
  %v2599 = vpop.f32.mrb[0].mxu0
  %v2600 = vpop.f32.mrb[0].mxu0
  %2601 = vdwg.mxu0
  %v2602 = vadd.f32 %v2597, %v1759
  %v2603 = vxor.u32 %v2602, 2147483648
  %v2604 = vmul.f32 %v2603, 1.442695
  %v2605 = vpow.pop %v2604
  %v2606 = vadd.f32 %v2605, 1.0
  %v2607 = vrcp.pop %v2606
  %v2608 = vmul.f32 1.0, %v2607
  %v2609 = vtanh.pop %v2602
  %v2610 = vmul.f32 %v2608, %v2199
  %2612 = vrot.lane.b32.xlu0 %v2609, 64
  %v2613 = vpop.permute.xlu0 %2612
  %v2615 = vmul.f32 %v2608, %v2613
  %2617 = vrot.lane.b32.xlu0 %v2615, 32
  %v2618 = vpop.permute.xlu0 %2617
  %v2620 = vadd.f32 %v2610, %v2618
  %v2621 = vtanh.pop %v2620
  %2623 = vrot.lane.b32.xlu0 %v2621, 64
  %v2624 = vpop.permute.xlu0 %2623
  %v2626 = vmul.f32 %v2608, %v2624
  %2628 = vrot.lane.b32.xlu0 %v1784, 32
  %v2629 = vpop.permute.xlu0 %2628
  %2632 = vrot.lane.b32.xlu0 %v2205, 32
  %v2633 = vpop.permute.xlu0 %2632
  %v2635 = vld [vmem:[%s4 + $0x70] sm:$0xf]
  %v2636 = vld [vmem:[%s4 + $0x74] sm:$0xf]
  %v2637 = vld [vmem:[%s4 + $0x78] sm:$0xf]
  %v2638 = vld [vmem:[%s4 + $0x7c] sm:$0xf]
  %v2639 = vpack.c.bf16 %v2205, %v1784
  %v2640 = vpack.c.bf16 %v2626, %v2626
  %v2641 = vld [vmem:[%s4 + $0x80] sm:$0xf]
  %v2642 = vld [vmem:[%s4 + $0x84] sm:$0xf]
  %v2643 = vld [vmem:[%s4 + $0x88] sm:$0xf]
  %v2644 = vld [vmem:[%s4 + $0x8c] sm:$0xf]
  %v2645 = vpack.c.bf16 %v2096, %v1638
  %v2650 = vunpack.c.l.b16 %v2641
  %v2651 = vunpack.c.l.b16 %v2642
  %v2652 = vunpack.c.l.b16 %v2643
  %v2653 = vunpack.c.l.b16 %v2644
  %v2654 = vpack.c.b16 %v2651, %v2650
  %v2655 = vpack.c.b16 %v2653, %v2652
  %v2659 = vsel %vm872, %v2645, 0
  %2661 = vmatprep.subr.bf16.mxu0 0
  %2662 = vmatpush1.bf16.msra.mxu0 %v2654
  %2663 = vmatprep.subr.bf16.mxu0 0
  %2664 = vmatpush1.bf16.msra.mxu0 %v2655
  %2665 = vmatprep.subr.bf16.mxu0 0
  %2666 = vmatpush1.bf16.msra.mxu0 0
  %2667 = vmatprep.subr.bf16.mxu0 0
  %2668 = vmatpush1.bf16.msra.mxu0 0
  %2669 = vmatprep.subr.bf16.mxu0 0
  %2670 = vmatpush1.bf16.msra.mxu0 0
  %2671 = vmatprep.subr.bf16.mxu0 0
  %2672 = vmatpush1.bf16.msra.mxu0 0
  %2673 = vmatprep.subr.bf16.mxu0 0
  %2674 = vmatpush1.bf16.msra.mxu0 0
  %2675 = vmatprep.subr.bf16.mxu0 0
  %2676 = vmatpush1.bf16.msra.mxu0 0
  %2677 = vmatprep.subr.bf16.mxu0 0
  %2678 = vmatpush1.bf16.msra.mxu0 0
  %2679 = vmatprep.subr.bf16.mxu0 0
  %2680 = vmatpush1.bf16.msra.mxu0 0
  %2681 = vmatprep.subr.bf16.mxu0 0
  %2682 = vmatpush1.bf16.msra.mxu0 0
  %2683 = vmatprep.subr.bf16.mxu0 0
  %2684 = vmatpush1.bf16.msra.mxu0 0
  %2685 = vmatprep.subr.bf16.mxu0 0
  %2686 = vmatpush1.bf16.msra.mxu0 0
  %2687 = vmatprep.subr.bf16.mxu0 0
  %2688 = vmatpush1.bf16.msra.mxu0 0
  %2689 = vmatprep.subr.bf16.mxu0 0
  %2690 = vmatpush1.bf16.msra.mxu0 0
  %2691 = vmatprep.subr.bf16.mxu0 0
  %2692 = vmatpush1.bf16.msra.mxu0 0
  %2693 = vmatprep.mubr.bf16.mxu0 0
  %2694 = vmatmul.mubr.bf16.gmra.mrb[0].mxu0 %v2659
  %v2695 = vpop.f32.mrb[0].mxu0
  %v2696 = vadd.f32 0.0, %v2695
  %v2697 = vpop.f32.mrb[0].mxu0
  %v2698 = vpop.f32.mrb[0].mxu0
  %v2699 = vadd.f32 0.0, %v2698
  %v2700 = vpop.f32.mrb[0].mxu0
  %2701 = vmatprep.mubr.bf16.mxu0 0
  %2702 = vmatmul.mubr.bf16.gmra.mrb[0].mxu0 %v2560
  %v2703 = vpop.f32.mrb[0].mxu0
  %v2704 = vadd.f32 0.0, %v2703
  %v2705 = vpop.f32.mrb[0].mxu0
  %v2706 = vpop.f32.mrb[0].mxu0
  %v2707 = vpop.f32.mrb[0].mxu0
  %2708 = vdwg.mxu0
  %2711 = vrot.lane.b32.xlu0 %v2639, 32
  %v2712 = vpop.permute.xlu0 %2711
  %2713 = vrot.lane.b32.xlu0 %v2640, 32
  %v2714 = vpop.permute.xlu0 %2713
  %v2719 = vunpack.c.l.b16 %v2635
  %v2720 = vunpack.c.l.b16 %v2636
  %v2721 = vunpack.c.l.b16 %v2637
  %v2722 = vunpack.c.l.b16 %v2638
  %v2723 = vpack.c.b16 %v2720, %v2719
  %v2724 = vpack.c.b16 %v2722, %v2721
  %v2728 = vsel %vm872, %v2712, 0
  %v2731 = vsel %vm872, %v2714, 0
  %2733 = vmatprep.subr.bf16.mxu0 0
  %2734 = vmatpush1.bf16.msra.mxu0 %v2723
  %2735 = vmatprep.subr.bf16.mxu0 0
  %2736 = vmatpush1.bf16.msra.mxu0 %v2724
  %2737 = vmatprep.subr.bf16.mxu0 0
  %2738 = vmatpush1.bf16.msra.mxu0 0
  %2739 = vmatprep.subr.bf16.mxu0 0
  %2740 = vmatpush1.bf16.msra.mxu0 0
  %2741 = vmatprep.subr.bf16.mxu0 0
  %2742 = vmatpush1.bf16.msra.mxu0 0
  %2743 = vmatprep.subr.bf16.mxu0 0
  %2744 = vmatpush1.bf16.msra.mxu0 0
  %2745 = vmatprep.subr.bf16.mxu0 0
  %2746 = vmatpush1.bf16.msra.mxu0 0
  %2747 = vmatprep.subr.bf16.mxu0 0
  %2748 = vmatpush1.bf16.msra.mxu0 0
  %2749 = vmatprep.subr.bf16.mxu0 0
  %2750 = vmatpush1.bf16.msra.mxu0 0
  %2751 = vmatprep.subr.bf16.mxu0 0
  %2752 = vmatpush1.bf16.msra.mxu0 0
  %2753 = vmatprep.subr.bf16.mxu0 0
  %2754 = vmatpush1.bf16.msra.mxu0 0
  %2755 = vmatprep.subr.bf16.mxu0 0
  %2756 = vmatpush1.bf16.msra.mxu0 0
  %2757 = vmatprep.subr.bf16.mxu0 0
  %2758 = vmatpush1.bf16.msra.mxu0 0
  %2759 = vmatprep.subr.bf16.mxu0 0
  %2760 = vmatpush1.bf16.msra.mxu0 0
  %2761 = vmatprep.subr.bf16.mxu0 0
  %2762 = vmatpush1.bf16.msra.mxu0 0
  %2763 = vmatprep.subr.bf16.mxu0 0
  %2764 = vmatpush1.bf16.msra.mxu0 0
  %2765 = vmatprep.mubr.bf16.mxu0 0
  %2766 = vmatmul.mubr.bf16.gmra.mrb[0].mxu0 %v2728
  %v2767 = vpop.f32.mrb[0].mxu0
  %v2768 = vadd.f32 %v2696, %v2767
  %v2769 = vpop.f32.mrb[0].mxu0
  %v2770 = vpop.f32.mrb[0].mxu0
  %v2771 = vadd.f32 %v2699, %v2770
  %v2772 = vpop.f32.mrb[0].mxu0
  %2773 = vmatprep.mubr.bf16.mxu0 0
  %2774 = vmatmul.mubr.bf16.gmra.mrb[0].mxu0 %v2731
  %v2775 = vpop.f32.mrb[0].mxu0
  %v2776 = vadd.f32 %v2704, %v2775
  %v2777 = vpop.f32.mrb[0].mxu0
  %v2778 = vpop.f32.mrb[0].mxu0
  %v2779 = vpop.f32.mrb[0].mxu0
  %2780 = vdwg.mxu0
  %v2781 = vld [vmem:[%s8 + $0xa] sm:$0x1]
  %v2782 = vlaneseq
  %v2783 = vshrl.u32 %v2782, 7
  %v2784 = vsub.s32 0, %v2783
  %v2785 = vrot.slane %v2781, %v2784
  %v2786 = vadd.f32 %v2768, %v2785
  %v2787 = vadd.f32 %v2771, %v2785
  %v2788 = vadd.f32 %v2776, %v2785
  %v2789 = vtanh.pop %v2786
  %v2790 = vtanh.pop %v2787
  %v2791 = vtanh.pop %v2788
  %v2792 = vld [vmem:[%s4 + $0x90] sm:$0xf]
  %v2793 = vld [vmem:[%s4 + $0x94] sm:$0xf]
  %v2794 = vld [vmem:[%s4 + $0x98] sm:$0xf]
  %v2795 = vld [vmem:[%s4 + $0x9c] sm:$0xf]
  %v2796 = vpack.c.bf16 %v2629, 0.0
  %v2797 = vpack.c.bf16 %v2633, %v2633
  %v2798 = vld [vmem:[%s4 + $0xa0] sm:$0xf]
  %v2799 = vld [vmem:[%s4 + $0xa4] sm:$0xf]
  %v2800 = vld [vmem:[%s4 + $0xa8] sm:$0xf]
  %v2801 = vld [vmem:[%s4 + $0xac] sm:$0xf]
  %v2806 = vunpack.c.l.b16 %v2798
  %v2807 = vunpack.c.l.b16 %v2799
  %v2808 = vunpack.c.l.b16 %v2800
  %v2809 = vunpack.c.l.b16 %v2801
  %v2810 = vpack.c.b16 %v2807, %v2806
  %v2811 = vpack.c.b16 %v2809, %v2808
  %2814 = vmatprep.subr.bf16.mxu0 0
  %2815 = vmatpush1.bf16.msra.mxu0 %v2810
  %2816 = vmatprep.subr.bf16.mxu0 0
  %2817 = vmatpush1.bf16.msra.mxu0 %v2811
  %2818 = vmatprep.subr.bf16.mxu0 0
  %2819 = vmatpush1.bf16.msra.mxu0 0
  %2820 = vmatprep.subr.bf16.mxu0 0
  %2821 = vmatpush1.bf16.msra.mxu0 0
  %2822 = vmatprep.subr.bf16.mxu0 0
  %2823 = vmatpush1.bf16.msra.mxu0 0
  %2824 = vmatprep.subr.bf16.mxu0 0
  %2825 = vmatpush1.bf16.msra.mxu0 0
  %2826 = vmatprep.subr.bf16.mxu0 0
  %2827 = vmatpush1.bf16.msra.mxu0 0
  %2828 = vmatprep.subr.bf16.mxu0 0
  %2829 = vmatpush1.bf16.msra.mxu0 0
  %2830 = vmatprep.subr.bf16.mxu0 0
  %2831 = vmatpush1.bf16.msra.mxu0 0
  %2832 = vmatprep.subr.bf16.mxu0 0
  %2833 = vmatpush1.bf16.msra.mxu0 0
  %2834 = vmatprep.subr.bf16.mxu0 0
  %2835 = vmatpush1.bf16.msra.mxu0 0
  %2836 = vmatprep.subr.bf16.mxu0 0
  %2837 = vmatpush1.bf16.msra.mxu0 0
  %2838 = vmatprep.subr.bf16.mxu0 0
  %2839 = vmatpush1.bf16.msra.mxu0 0
  %2840 = vmatprep.subr.bf16.mxu0 0
  %2841 = vmatpush1.bf16.msra.mxu0 0
  %2842 = vmatprep.subr.bf16.mxu0 0
  %2843 = vmatpush1.bf16.msra.mxu0 0
  %2844 = vmatprep.subr.bf16.mxu0 0
  %2845 = vmatpush1.bf16.msra.mxu0 0
  %2846 = vmatprep.mubr.bf16.mxu0 0
  %2847 = vmatmul.mubr.bf16.gmra.mrb[0].mxu0 %v2728
  %v2848 = vpop.f32.mrb[0].mxu0
  %v2849 = vadd.f32 0.0, %v2848
  %v2850 = vpop.f32.mrb[0].mxu0
  %v2851 = vpop.f32.mrb[0].mxu0
  %v2852 = vadd.f32 0.0, %v2851
  %v2853 = vpop.f32.mrb[0].mxu0
  %2854 = vmatprep.mubr.bf16.mxu0 0
  %2855 = vmatmul.mubr.bf16.gmra.mrb[0].mxu0 %v2731
  %v2856 = vpop.f32.mrb[0].mxu0
  %v2857 = vadd.f32 0.0, %v2856
  %v2858 = vpop.f32.mrb[0].mxu0
  %v2859 = vpop.f32.mrb[0].mxu0
  %v2860 = vpop.f32.mrb[0].mxu0
  %2861 = vdwg.mxu0
  %v2866 = vunpack.c.l.b16 %v2792
  %v2867 = vunpack.c.l.b16 %v2793
  %v2868 = vunpack.c.l.b16 %v2794
  %v2869 = vunpack.c.l.b16 %v2795
  %v2870 = vpack.c.b16 %v2867, %v2866
  %v2871 = vpack.c.b16 %v2869, %v2868
  %v2875 = vsel %vm872, %v2796, 0
  %v2878 = vsel %vm872, %v2797, 0
  %2880 = vmatprep.subr.bf16.mxu0 0
  %2881 = vmatpush1.bf16.msra.mxu0 %v2870
  %2882 = vmatprep.subr.bf16.mxu0 0
  %2883 = vmatpush1.bf16.msra.mxu0 %v2871
  %2884 = vmatprep.subr.bf16.mxu0 0
  %2885 = vmatpush1.bf16.msra.mxu0 0
  %2886 = vmatprep.subr.bf16.mxu0 0
  %2887 = vmatpush1.bf16.msra.mxu0 0
  %2888 = vmatprep.subr.bf16.mxu0 0
  %2889 = vmatpush1.bf16.msra.mxu0 0
  %2890 = vmatprep.subr.bf16.mxu0 0
  %2891 = vmatpush1.bf16.msra.mxu0 0
  %2892 = vmatprep.subr.bf16.mxu0 0
  %2893 = vmatpush1.bf16.msra.mxu0 0
  %2894 = vmatprep.subr.bf16.mxu0 0
  %2895 = vmatpush1.bf16.msra.mxu0 0
  %2896 = vmatprep.subr.bf16.mxu0 0
  %2897 = vmatpush1.bf16.msra.mxu0 0
  %2898 = vmatprep.subr.bf16.mxu0 0
  %2899 = vmatpush1.bf16.msra.mxu0 0
  %2900 = vmatprep.subr.bf16.mxu0 0
  %2901 = vmatpush1.bf16.msra.mxu0 0
  %2902 = vmatprep.subr.bf16.mxu0 0
  %2903 = vmatpush1.bf16.msra.mxu0 0
  %2904 = vmatprep.subr.bf16.mxu0 0
  %2905 = vmatpush1.bf16.msra.mxu0 0
  %2906 = vmatprep.subr.bf16.mxu0 0
  %2907 = vmatpush1.bf16.msra.mxu0 0
  %2908 = vmatprep.subr.bf16.mxu0 0
  %2909 = vmatpush1.bf16.msra.mxu0 0
  %2910 = vmatprep.subr.bf16.mxu0 0
  %2911 = vmatpush1.bf16.msra.mxu0 0
  %2912 = vmatprep.mubr.bf16.mxu0 0
  %2913 = vmatmul.mubr.bf16.gmra.mrb[0].mxu0 %v2875
  %v2914 = vpop.f32.mrb[0].mxu0
  %v2915 = vadd.f32 %v2849, %v2914
  %v2916 = vpop.f32.mrb[0].mxu0
  %v2917 = vpop.f32.mrb[0].mxu0
  %v2918 = vadd.f32 %v2852, %v2917
  %v2919 = vpop.f32.mrb[0].mxu0
  %2920 = vmatprep.mubr.bf16.mxu0 0
  %2921 = vmatmul.mubr.bf16.gmra.mrb[0].mxu0 %v2878
  %v2922 = vpop.f32.mrb[0].mxu0
  %v2923 = vadd.f32 %v2857, %v2922
  %v2924 = vpop.f32.mrb[0].mxu0
  %v2925 = vpop.f32.mrb[0].mxu0
  %v2926 = vpop.f32.mrb[0].mxu0
  %2927 = vdwg.mxu0
  %v2928 = vld [vmem:[%s8 + $0xb] sm:$0x1]
  %v2929 = vlaneseq
  %v2930 = vshrl.u32 %v2929, 7
  %v2931 = vsub.s32 0, %v2930
  %v2932 = vrot.slane %v2928, %v2931
  %v2933 = vadd.f32 %v2915, %v2932
  %v2934 = vadd.f32 %v2918, %v2932
  %v2935 = vadd.f32 %v2923, %v2932
  %v2936 = vtanh.pop %v2933
  %v2937 = vtanh.pop %v2934
  %v2938 = vtanh.pop %v2935
  %v2939 = vld [vmem:[%s4 + $0xc0] sm:$0xf]
  %v2940 = vld [vmem:[%s4 + $0xc4] sm:$0xf]
  %v2941 = vld [vmem:[%s4 + $0xc8] sm:$0xf]
  %v2942 = vld [vmem:[%s4 + $0xcc] sm:$0xf]
  %v2943 = vpack.c.bf16 %v2937, %v2936
  %v2944 = vpack.c.bf16 %v2938, %v2938
  %v2949 = vunpack.c.l.b16 %v2939
  %v2950 = vunpack.c.l.b16 %v2940
  %v2951 = vunpack.c.l.b16 %v2941
  %v2952 = vunpack.c.l.b16 %v2942
  %v2953 = vpack.c.b16 %v2950, %v2949
  %v2954 = vpack.c.b16 %v2952, %v2951
  %v2958 = vsel %vm872, %v2943, 0
  %v2961 = vsel %vm872, %v2944, 0
  %2963 = vmatprep.subr.bf16.mxu0 0
  %2964 = vmatpush1.bf16.msra.mxu0 %v2953
  %2965 = vmatprep.subr.bf16.mxu0 0
  %2966 = vmatpush1.bf16.msra.mxu0 %v2954
  %2967 = vmatprep.subr.bf16.mxu0 0
  %2968 = vmatpush1.bf16.msra.mxu0 0
  %2969 = vmatprep.subr.bf16.mxu0 0
  %2970 = vmatpush1.bf16.msra.mxu0 0
  %2971 = vmatprep.subr.bf16.mxu0 0
  %2972 = vmatpush1.bf16.msra.mxu0 0
  %2973 = vmatprep.subr.bf16.mxu0 0
  %2974 = vmatpush1.bf16.msra.mxu0 0
  %2975 = vmatprep.subr.bf16.mxu0 0
  %2976 = vmatpush1.bf16.msra.mxu0 0
  %2977 = vmatprep.subr.bf16.mxu0 0
  %2978 = vmatpush1.bf16.msra.mxu0 0
  %2979 = vmatprep.subr.bf16.mxu0 0
  %2980 = vmatpush1.bf16.msra.mxu0 0
  %2981 = vmatprep.subr.bf16.mxu0 0
  %2982 = vmatpush1.bf16.msra.mxu0 0
  %2983 = vmatprep.subr.bf16.mxu0 0
  %2984 = vmatpush1.bf16.msra.mxu0 0
  %2985 = vmatprep.subr.bf16.mxu0 0
  %2986 = vmatpush1.bf16.msra.mxu0 0
  %2987 = vmatprep.subr.bf16.mxu0 0
  %2988 = vmatpush1.bf16.msra.mxu0 0
  %2989 = vmatprep.subr.bf16.mxu0 0
  %2990 = vmatpush1.bf16.msra.mxu0 0
  %2991 = vmatprep.subr.bf16.mxu0 0
  %2992 = vmatpush1.bf16.msra.mxu0 0
  %2993 = vmatprep.subr.bf16.mxu0 0
  %2994 = vmatpush1.bf16.msra.mxu0 0
  %2995 = vmatprep.mubr.bf16.mxu0 0
  %2996 = vmatmul.mubr.bf16.gmra.mrb[0].mxu0 %v2958
  %v2997 = vpop.f32.mrb[0].mxu0
  %v2998 = vadd.f32 0.0, %v2997
  %v2999 = vpop.f32.mrb[0].mxu0
  %v3000 = vpop.f32.mrb[0].mxu0
  %v3001 = vadd.f32 0.0, %v3000
  %v3002 = vpop.f32.mrb[0].mxu0
  %3003 = vmatprep.mubr.bf16.mxu0 0
  %3004 = vmatmul.mubr.bf16.gmra.mrb[0].mxu0 %v2961
  %v3005 = vpop.f32.mrb[0].mxu0
  %v3006 = vadd.f32 0.0, %v3005
  %v3007 = vpop.f32.mrb[0].mxu0
  %v3008 = vpop.f32.mrb[0].mxu0
  %v3009 = vpop.f32.mrb[0].mxu0
  %3010 = vdwg.mxu0
  %v3011 = vld [vmem:[%s8 + $0xc] sm:$0x1]
  %v3012 = vlaneseq
  %v3013 = vshrl.u32 %v3012, 7
  %v3014 = vsub.s32 0, %v3013
  %v3015 = vrot.slane %v3011, %v3014
  %v3016 = vadd.f32 %v2998, %v3015
  %v3017 = vadd.f32 %v3001, %v3015
  %v3018 = vadd.f32 %v3006, %v3015
  %vm3019 = vcmask 15360
  %3020 = vst.msk [vmem:[%s10] sm:$0xff] %vm3019, %v3016
  %3021 = vst.msk [vmem:[%s10 + $0x8] sm:$0xff] %vm3019, %v3017
  %3022 = vst.msk [vmem:[%s10 + $0x10] sm:$0xff] %vm3019, %v3018
  %v3023 = vld [vmem:[%s8 + $0x2] sm:$0x1]
  %v3024 = vld [vmem:[%s1] sm:$0xf]
  %v3025 = vld [vmem:[%s1 + $0x4] sm:$0xf]
  %v3026 = vld [vmem:[%s1 + $0x8] sm:$0xf]
  %v3027 = vld [vmem:[%s1 + $0xc] sm:$0xf]
  %v3028 = vld [vmem:[%s1 + $0x10] sm:$0xf]
  %v3029 = vld [vmem:[%s1 + $0x14] sm:$0xf]
  %v3030 = vld [vmem:[%s1 + $0x18] sm:$0xf]
  %v3031 = vld [vmem:[%s1 + $0x1c] sm:$0xf]
  %v3032 = vld [vmem:[%s1 + $0x20] sm:$0xf]
  %v3033 = vld [vmem:[%s1 + $0x24] sm:$0xf]
  %v3034 = vld [vmem:[%s1 + $0x28] sm:$0xf]
  %v3035 = vld [vmem:[%s1 + $0x2c] sm:$0xf]
  %v3036 = vld [vmem:[%s5 + $0x20] sm:$0xf]
  %v3037 = vld [vmem:[%s5 + $0x24] sm:$0xf]
  %v3038 = vld [vmem:[%s5 + $0x28] sm:$0xf]
  %v3039 = vld [vmem:[%s5 + $0x2c] sm:$0xf]
  %v3040 = vlaneseq
  %v3041 = vshrl.u32 %v3040, 7
  %v3042 = vsub.s32 0, %v3041
  %v3043 = vrot.slane %v3023, %v3042
  %v3056 = vunpack.c.l.b16 %v3024
  %v3057 = vunpack.c.l.b16 %v3025
  %v3058 = vunpack.c.l.b16 %v3026
  %v3059 = vunpack.c.l.b16 %v3027
  %v3060 = vunpack.c.l.b16 %v3028
  %v3061 = vunpack.c.l.b16 %v3029
  %v3062 = vunpack.c.l.b16 %v3030
  %v3063 = vunpack.c.l.b16 %v3031
  %v3064 = vunpack.c.l.b16 %v3032
  %v3065 = vunpack.c.l.b16 %v3033
  %v3066 = vunpack.c.l.b16 %v3034
  %v3067 = vunpack.c.l.b16 %v3035
  %v3068 = vpack.c.b16 %v3057, %v3056
  %v3069 = vpack.c.b16 %v3059, %v3058
  %v3070 = vpack.c.b16 %v3061, %v3060
  %v3071 = vpack.c.b16 %v3063, %v3062
  %v3072 = vpack.c.b16 %v3065, %v3064
  %v3073 = vpack.c.b16 %v3067, %v3066
  %v3078 = vunpack.c.l.b16 %v3036
  %v3079 = vunpack.c.l.b16 %v3037
  %v3080 = vunpack.c.l.b16 %v3038
  %v3081 = vunpack.c.l.b16 %v3039
  %v3082 = vpack.c.b16 %v3079, %v3078
  %v3083 = vpack.c.b16 %v3081, %v3080
  %v3087 = vsel %vm872, %v3068, 0
  %v3090 = vsel %vm872, %v3069, 0
  %v3093 = vsel %vm872, %v3070, 0
  %v3096 = vsel %vm872, %v3071, 0
  %v3099 = vsel %vm872, %v3072, 0
  %v3102 = vsel %vm872, %v3073, 0
  %3104 = vmatprep.subr.bf16.mxu0 0
  %3105 = vmatpush1.bf16.msra.mxu0 %v3082
  %3106 = vmatprep.subr.bf16.mxu0 0
  %3107 = vmatpush1.bf16.msra.mxu0 %v3083
  %3108 = vmatprep.subr.bf16.mxu0 0
  %3109 = vmatpush1.bf16.msra.mxu0 0
  %3110 = vmatprep.subr.bf16.mxu0 0
  %3111 = vmatpush1.bf16.msra.mxu0 0
  %3112 = vmatprep.subr.bf16.mxu0 0
  %3113 = vmatpush1.bf16.msra.mxu0 0
  %3114 = vmatprep.subr.bf16.mxu0 0
  %3115 = vmatpush1.bf16.msra.mxu0 0
  %3116 = vmatprep.subr.bf16.mxu0 0
  %3117 = vmatpush1.bf16.msra.mxu0 0
  %3118 = vmatprep.subr.bf16.mxu0 0
  %3119 = vmatpush1.bf16.msra.mxu0 0
  %3120 = vmatprep.subr.bf16.mxu0 0
  %3121 = vmatpush1.bf16.msra.mxu0 0
  %3122 = vmatprep.subr.bf16.mxu0 0
  %3123 = vmatpush1.bf16.msra.mxu0 0
  %3124 = vmatprep.subr.bf16.mxu0 0
  %3125 = vmatpush1.bf16.msra.mxu0 0
  %3126 = vmatprep.subr.bf16.mxu0 0
  %3127 = vmatpush1.bf16.msra.mxu0 0
  %3128 = vmatprep.subr.bf16.mxu0 0
  %3129 = vmatpush1.bf16.msra.mxu0 0
  %3130 = vmatprep.subr.bf16.mxu0 0
  %3131 = vmatpush1.bf16.msra.mxu0 0
  %3132 = vmatprep.subr.bf16.mxu0 0
  %3133 = vmatpush1.bf16.msra.mxu0 0
  %3134 = vmatprep.subr.bf16.mxu0 0
  %3135 = vmatpush1.bf16.msra.mxu0 0
  %3136 = vmatprep.mubr.bf16.mxu0 0
  %3137 = vmatmul.mubr.bf16.gmra.mrb[0].mxu0 %v3087
  %v3138 = vpop.f32.mrb[0].mxu0
  %v3139 = vadd.f32 %v3043, %v3138
  %v3140 = vpop.f32.mrb[0].mxu0
  %v3141 = vpop.f32.mrb[0].mxu0
  %v3142 = vadd.f32 %v3043, %v3141
  %v3143 = vpop.f32.mrb[0].mxu0
  %3144 = vmatprep.mubr.bf16.mxu0 0
  %3145 = vmatmul.mubr.bf16.gmra.mrb[0].mxu0 %v3090
  %v3146 = vpop.f32.mrb[0].mxu0
  %v3147 = vadd.f32 %v3043, %v3146
  %v3148 = vpop.f32.mrb[0].mxu0
  %v3149 = vpop.f32.mrb[0].mxu0
  %v3150 = vadd.f32 %v3043, %v3149
  %v3151 = vpop.f32.mrb[0].mxu0
  %3152 = vmatprep.mubr.bf16.mxu0 0
  %3153 = vmatmul.mubr.bf16.gmra.mrb[0].mxu0 %v3093
  %v3154 = vpop.f32.mrb[0].mxu0
  %v3155 = vadd.f32 %v3043, %v3154
  %v3156 = vpop.f32.mrb[0].mxu0
  %v3157 = vpop.f32.mrb[0].mxu0
  %v3158 = vadd.f32 %v3043, %v3157
  %v3159 = vpop.f32.mrb[0].mxu0
  %3160 = vmatprep.mubr.bf16.mxu0 0
  %3161 = vmatmul.mubr.bf16.gmra.mrb[0].mxu0 %v3096
  %v3162 = vpop.f32.mrb[0].mxu0
  %v3163 = vadd.f32 %v3043, %v3162
  %v3164 = vpop.f32.mrb[0].mxu0
  %v3165 = vpop.f32.mrb[0].mxu0
  %v3166 = vadd.f32 %v3043, %v3165
  %v3167 = vpop.f32.mrb[0].mxu0
  %3168 = vmatprep.mubr.bf16.mxu0 0
  %3169 = vmatmul.mubr.bf16.gmra.mrb[0].mxu0 %v3099
  %v3170 = vpop.f32.mrb[0].mxu0
  %v3171 = vadd.f32 %v3043, %v3170
  %v3172 = vpop.f32.mrb[0].mxu0
  %v3173 = vpop.f32.mrb[0].mxu0
  %v3174 = vadd.f32 %v3043, %v3173
  %v3175 = vpop.f32.mrb[0].mxu0
  %3176 = vmatprep.mubr.bf16.mxu0 0
  %3177 = vmatmul.mubr.bf16.gmra.mrb[0].mxu0 %v3102
  %v3178 = vpop.f32.mrb[0].mxu0
  %v3179 = vadd.f32 %v3043, %v3178
  %v3180 = vpop.f32.mrb[0].mxu0
  %v3181 = vpop.f32.mrb[0].mxu0
  %v3182 = vadd.f32 %v3043, %v3181
  %v3183 = vpop.f32.mrb[0].mxu0
  %3184 = vdwg.mxu0
  %v3185 = vpack.c.bf16 %v2790, %v2789
  %v3186 = vpack.c.bf16 %v2791, %v2791
  %v3188 = vsel %vm872, %v3185, 0
  %v3191 = vsel %vm872, %v3186, 0
  %3193 = vmatprep.subr.bf16.mxu0 0
  %3194 = vmatpush1.bf16.msra.mxu0 %v3082
  %3195 = vmatprep.subr.bf16.mxu0 0
  %3196 = vmatpush1.bf16.msra.mxu0 %v3083
  %3197 = vmatprep.subr.bf16.mxu0 0
  %3198 = vmatpush1.bf16.msra.mxu0 0
  %3199 = vmatprep.subr.bf16.mxu0 0
  %3200 = vmatpush1.bf16.msra.mxu0 0
  %3201 = vmatprep.subr.bf16.mxu0 0
  %3202 = vmatpush1.bf16.msra.mxu0 0
  %3203 = vmatprep.subr.bf16.mxu0 0
  %3204 = vmatpush1.bf16.msra.mxu0 0
  %3205 = vmatprep.subr.bf16.mxu0 0
  %3206 = vmatpush1.bf16.msra.mxu0 0
  %3207 = vmatprep.subr.bf16.mxu0 0
  %3208 = vmatpush1.bf16.msra.mxu0 0
  %3209 = vmatprep.subr.bf16.mxu0 0
  %3210 = vmatpush1.bf16.msra.mxu0 0
  %3211 = vmatprep.subr.bf16.mxu0 0
  %3212 = vmatpush1.bf16.msra.mxu0 0
  %3213 = vmatprep.subr.bf16.mxu0 0
  %3214 = vmatpush1.bf16.msra.mxu0 0
  %3215 = vmatprep.subr.bf16.mxu0 0
  %3216 = vmatpush1.bf16.msra.mxu0 0
  %3217 = vmatprep.subr.bf16.mxu0 0
  %3218 = vmatpush1.bf16.msra.mxu0 0
  %3219 = vmatprep.subr.bf16.mxu0 0
  %3220 = vmatpush1.bf16.msra.mxu0 0
  %3221 = vmatprep.subr.bf16.mxu0 0
  %3222 = vmatpush1.bf16.msra.mxu0 0
  %3223 = vmatprep.subr.bf16.mxu0 0
  %3224 = vmatpush1.bf16.msra.mxu0 0
  %3225 = vmatprep.mubr.bf16.mxu0 0
  %3226 = vmatmul.mubr.bf16.gmra.mrb[0].mxu0 %v3188
  %v3227 = vpop.f32.mrb[0].mxu0
  %v3228 = vadd.f32 %v3043, %v3227
  %v3229 = vpop.f32.mrb[0].mxu0
  %v3230 = vpop.f32.mrb[0].mxu0
  %v3231 = vadd.f32 %v3043, %v3230
  %v3232 = vpop.f32.mrb[0].mxu0
  %3233 = vmatprep.mubr.bf16.mxu0 0
  %3234 = vmatmul.mubr.bf16.gmra.mrb[0].mxu0 %v3191
  %v3235 = vpop.f32.mrb[0].mxu0
  %v3236 = vadd.f32 %v3043, %v3235
  %v3237 = vpop.f32.mrb[0].mxu0
  %v3238 = vpop.f32.mrb[0].mxu0
  %v3239 = vpop.f32.mrb[0].mxu0
  %3240 = vdwg.mxu0
  %v3241 = vld [vmem:[%s5 + $0x30] sm:$0xf]
  %v3242 = vld [vmem:[%s5 + $0x34] sm:$0xf]
  %v3243 = vld [vmem:[%s5 + $0x38] sm:$0xf]
  %v3244 = vld [vmem:[%s5 + $0x3c] sm:$0xf]
  %v3249 = vunpack.c.l.b16 %v3241
  %v3250 = vunpack.c.l.b16 %v3242
  %v3251 = vunpack.c.l.b16 %v3243
  %v3252 = vunpack.c.l.b16 %v3244
  %v3253 = vpack.c.b16 %v3250, %v3249
  %v3254 = vpack.c.b16 %v3252, %v3251
  %3257 = vmatprep.subr.bf16.mxu0 0
  %3258 = vmatpush1.bf16.msra.mxu0 %v3253
  %3259 = vmatprep.subr.bf16.mxu0 0
  %3260 = vmatpush1.bf16.msra.mxu0 %v3254
  %3261 = vmatprep.subr.bf16.mxu0 0
  %3262 = vmatpush1.bf16.msra.mxu0 0
  %3263 = vmatprep.subr.bf16.mxu0 0
  %3264 = vmatpush1.bf16.msra.mxu0 0
  %3265 = vmatprep.subr.bf16.mxu0 0
  %3266 = vmatpush1.bf16.msra.mxu0 0
  %3267 = vmatprep.subr.bf16.mxu0 0
  %3268 = vmatpush1.bf16.msra.mxu0 0
  %3269 = vmatprep.subr.bf16.mxu0 0
  %3270 = vmatpush1.bf16.msra.mxu0 0
  %3271 = vmatprep.subr.bf16.mxu0 0
  %3272 = vmatpush1.bf16.msra.mxu0 0
  %3273 = vmatprep.subr.bf16.mxu0 0
  %3274 = vmatpush1.bf16.msra.mxu0 0
  %3275 = vmatprep.subr.bf16.mxu0 0
  %3276 = vmatpush1.bf16.msra.mxu0 0
  %3277 = vmatprep.subr.bf16.mxu0 0
  %3278 = vmatpush1.bf16.msra.mxu0 0
  %3279 = vmatprep.subr.bf16.mxu0 0
  %3280 = vmatpush1.bf16.msra.mxu0 0
  %3281 = vmatprep.subr.bf16.mxu0 0
  %3282 = vmatpush1.bf16.msra.mxu0 0
  %3283 = vmatprep.subr.bf16.mxu0 0
  %3284 = vmatpush1.bf16.msra.mxu0 0
  %3285 = vmatprep.subr.bf16.mxu0 0
  %3286 = vmatpush1.bf16.msra.mxu0 0
  %3287 = vmatprep.subr.bf16.mxu0 0
  %3288 = vmatpush1.bf16.msra.mxu0 0
  %3289 = vmatprep.mubr.bf16.mxu0 0
  %3290 = vmatmul.mubr.bf16.gmra.mrb[0].mxu0 %v1245
  %v3291 = vpop.f32.mrb[0].mxu0
  %v3292 = vadd.f32 0.0, %v3291
  %v3293 = vpop.f32.mrb[0].mxu0
  %v3294 = vpop.f32.mrb[0].mxu0
  %v3295 = vadd.f32 0.0, %v3294
  %v3296 = vpop.f32.mrb[0].mxu0
  %3297 = vmatprep.mubr.bf16.mxu0 0
  %3298 = vmatmul.mubr.bf16.gmra.mrb[0].mxu0 %v1245
  %v3299 = vpop.f32.mrb[0].mxu0
  %v3300 = vadd.f32 0.0, %v3299
  %v3301 = vpop.f32.mrb[0].mxu0
  %v3302 = vpop.f32.mrb[0].mxu0
  %v3303 = vpop.f32.mrb[0].mxu0
  %3304 = vdwg.mxu0
  %v3305 = vadd.f32 %v3228, %v3292
  %v3306 = vadd.f32 %v3231, %v3295
  %v3307 = vadd.f32 %v3236, %v3300
  %v3308 = vxor.u32 %v3305, 2147483648
  %v3309 = vxor.u32 %v3306, 2147483648
  %v3310 = vxor.u32 %v3307, 2147483648
  %v3311 = vmul.f32 %v3308, 1.442695
  %v3312 = vpow.pop %v3311
  %v3313 = vmul.f32 %v3309, 1.442695
  %v3314 = vpow.pop %v3313
  %v3315 = vmul.f32 %v3310, 1.442695
  %v3316 = vpow.pop %v3315
  %v3317 = vadd.f32 %v3312, 1.0
  %v3318 = vadd.f32 %v3314, 1.0
  %v3319 = vadd.f32 %v3316, 1.0
  %v3320 = vrcp.pop %v3317
  %v3321 = vmul.f32 1.0, %v3320
  %v3322 = vrcp.pop %v3318
  %v3323 = vmul.f32 1.0, %v3322
  %v3324 = vrcp.pop %v3319
  %v3325 = vmul.f32 1.0, %v3324
  %v3326 = vtanh.pop %v3305
  %v3327 = vtanh.pop %v3306
  %v3328 = vtanh.pop %v3307
  %v3329 = vmul.f32 %v3321, 0.0
  %v3330 = vmul.f32 %v3323, 0.0
  %v3331 = vmul.f32 %v3325, 0.0
  %3335 = vrot.lane.b32.xlu0 %v3326, 64
  %v3336 = vpop.permute.xlu0 %3335
  %3337 = vrot.lane.b32.xlu0 %v3327, 64
  %v3338 = vpop.permute.xlu0 %3337
  %3339 = vrot.lane.b32.xlu0 %v3328, 64
  %v3340 = vpop.permute.xlu0 %3339
  %v3344 = vmul.f32 %v3321, %v3336
  %v3345 = vmul.f32 %v3323, %v3338
  %v3346 = vmul.f32 %v3325, %v3340
  %3350 = vrot.lane.b32.xlu0 %v3344, 32
  %v3351 = vpop.permute.xlu0 %3350
  %3352 = vrot.lane.b32.xlu0 %v3345, 32
  %v3353 = vpop.permute.xlu0 %3352
  %3354 = vrot.lane.b32.xlu0 %v3346, 32
  %v3355 = vpop.permute.xlu0 %3354
  %v3359 = vadd.f32 %v3329, %v3351
  %v3360 = vadd.f32 %v3330, %v3353
  %v3361 = vadd.f32 %v3331, %v3355
  %v3362 = vtanh.pop %v3359
  %v3363 = vtanh.pop %v3360
  %v3364 = vtanh.pop %v3361
  %3368 = vrot.lane.b32.xlu0 %v3362, 64
  %v3369 = vpop.permute.xlu0 %3368
  %3370 = vrot.lane.b32.xlu0 %v3363, 64
  %v3371 = vpop.permute.xlu0 %3370
  %3372 = vrot.lane.b32.xlu0 %v3364, 64
  %v3373 = vpop.permute.xlu0 %3372
  %v3377 = vmul.f32 %v3321, %v3369
  %v3378 = vmul.f32 %v3323, %v3371
  %v3379 = vmul.f32 %v3325, %v3373
  %v3380 = vpack.c.bf16 %v3378, %v3377
  %v3381 = vpack.c.bf16 %v3379, %v3379
  %3384 = vrot.lane.b32.xlu0 %v3380, 32
  %v3385 = vpop.permute.xlu0 %3384
  %3386 = vrot.lane.b32.xlu0 %v3381, 32
  %v3387 = vpop.permute.xlu0 %3386
  %v3389 = vsel %vm872, %v3385, 0
  %v3392 = vsel %vm872, %v3387, 0
  %3394 = vmatprep.subr.bf16.mxu0 0
  %3395 = vmatpush1.bf16.msra.mxu0 %v3253
  %3396 = vmatprep.subr.bf16.mxu0 0
  %3397 = vmatpush1.bf16.msra.mxu0 %v3254
  %3398 = vmatprep.subr.bf16.mxu0 0
  %3399 = vmatpush1.bf16.msra.mxu0 0
  %3400 = vmatprep.subr.bf16.mxu0 0
  %3401 = vmatpush1.bf16.msra.mxu0 0
  %3402 = vmatprep.subr.bf16.mxu0 0
  %3403 = vmatpush1.bf16.msra.mxu0 0
  %3404 = vmatprep.subr.bf16.mxu0 0
  %3405 = vmatpush1.bf16.msra.mxu0 0
  %3406 = vmatprep.subr.bf16.mxu0 0
  %3407 = vmatpush1.bf16.msra.mxu0 0
  %3408 = vmatprep.subr.bf16.mxu0 0
  %3409 = vmatpush1.bf16.msra.mxu0 0
  %3410 = vmatprep.subr.bf16.mxu0 0
  %3411 = vmatpush1.bf16.msra.mxu0 0
  %3412 = vmatprep.subr.bf16.mxu0 0
  %3413 = vmatpush1.bf16.msra.mxu0 0
  %3414 = vmatprep.subr.bf16.mxu0 0
  %3415 = vmatpush1.bf16.msra.mxu0 0
  %3416 = vmatprep.subr.bf16.mxu0 0
  %3417 = vmatpush1.bf16.msra.mxu0 0
  %3418 = vmatprep.subr.bf16.mxu0 0
  %3419 = vmatpush1.bf16.msra.mxu0 0
  %3420 = vmatprep.subr.bf16.mxu0 0
  %3421 = vmatpush1.bf16.msra.mxu0 0
  %3422 = vmatprep.subr.bf16.mxu0 0
  %3423 = vmatpush1.bf16.msra.mxu0 0
  %3424 = vmatprep.subr.bf16.mxu0 0
  %3425 = vmatpush1.bf16.msra.mxu0 0
  %3426 = vmatprep.mubr.bf16.mxu0 0
  %3427 = vmatmul.mubr.bf16.gmra.mrb[0].mxu0 %v3389
  %v3428 = vpop.f32.mrb[0].mxu0
  %v3429 = vadd.f32 0.0, %v3428
  %v3430 = vpop.f32.mrb[0].mxu0
  %v3431 = vpop.f32.mrb[0].mxu0
  %v3432 = vadd.f32 0.0, %v3431
  %v3433 = vpop.f32.mrb[0].mxu0
  %3434 = vmatprep.mubr.bf16.mxu0 0
  %3435 = vmatmul.mubr.bf16.gmra.mrb[0].mxu0 %v3392
  %v3436 = vpop.f32.mrb[0].mxu0
  %v3437 = vadd.f32 0.0, %v3436
  %v3438 = vpop.f32.mrb[0].mxu0
  %v3439 = vpop.f32.mrb[0].mxu0
  %v3440 = vpop.f32.mrb[0].mxu0
  %3441 = vdwg.mxu0
  %v3442 = vadd.f32 %v3139, %v3429
  %v3443 = vadd.f32 %v3142, %v3432
  %v3444 = vadd.f32 %v3147, %v3437
  %v3445 = vxor.u32 %v3442, 2147483648
  %v3446 = vxor.u32 %v3443, 2147483648
  %v3447 = vxor.u32 %v3444, 2147483648
  %v3448 = vmul.f32 %v3445, 1.442695
  %v3449 = vpow.pop %v3448
  %v3450 = vmul.f32 %v3446, 1.442695
  %v3451 = vpow.pop %v3450
  %v3452 = vmul.f32 %v3447, 1.442695
  %v3453 = vpow.pop %v3452
  %v3454 = vadd.f32 %v3449, 1.0
  %v3455 = vadd.f32 %v3451, 1.0
  %v3456 = vadd.f32 %v3453, 1.0
  %v3457 = vrcp.pop %v3454
  %v3458 = vmul.f32 1.0, %v3457
  %v3459 = vrcp.pop %v3455
  %v3460 = vmul.f32 1.0, %v3459
  %v3461 = vrcp.pop %v3456
  %v3462 = vmul.f32 1.0, %v3461
  %v3463 = vtanh.pop %v3442
  %v3464 = vtanh.pop %v3443
  %v3465 = vtanh.pop %v3444
  %v3466 = vmul.f32 %v3458, %v3359
  %v3467 = vmul.f32 %v3460, %v3360
  %v3468 = vmul.f32 %v3462, %v3361
  %3472 = vrot.lane.b32.xlu0 %v3463, 64
  %v3473 = vpop.permute.xlu0 %3472
  %3474 = vrot.lane.b32.xlu0 %v3464, 64
  %v3475 = vpop.permute.xlu0 %3474
  %3476 = vrot.lane.b32.xlu0 %v3465, 64
  %v3477 = vpop.permute.xlu0 %3476
  %v3481 = vmul.f32 %v3458, %v3473
  %v3482 = vmul.f32 %v3460, %v3475
  %v3483 = vmul.f32 %v3462, %v3477
  %3487 = vrot.lane.b32.xlu0 %v3481, 32
  %v3488 = vpop.permute.xlu0 %3487
  %3489 = vrot.lane.b32.xlu0 %v3482, 32
  %v3490 = vpop.permute.xlu0 %3489
  %3491 = vrot.lane.b32.xlu0 %v3483, 32
  %v3492 = vpop.permute.xlu0 %3491
  %v3496 = vadd.f32 %v3466, %v3488
  %v3497 = vadd.f32 %v3467, %v3490
  %v3498 = vadd.f32 %v3468, %v3492
  %v3499 = vtanh.pop %v3496
  %v3500 = vtanh.pop %v3497
  %v3501 = vtanh.pop %v3498
  %3505 = vrot.lane.b32.xlu0 %v3499, 64
  %v3506 = vpop.permute.xlu0 %3505
  %3507 = vrot.lane.b32.xlu0 %v3500, 64
  %v3508 = vpop.permute.xlu0 %3507
  %3509 = vrot.lane.b32.xlu0 %v3501, 64
  %v3510 = vpop.permute.xlu0 %3509
  %v3514 = vmul.f32 %v3458, %v3506
  %v3515 = vmul.f32 %v3460, %v3508
  %v3516 = vmul.f32 %v3462, %v3510
  %v3517 = vpack.c.bf16 %v3515, %v3514
  %v3518 = vpack.c.bf16 %v3516, %v3516
  %3521 = vrot.lane.b32.xlu0 %v3517, 32
  %v3522 = vpop.permute.xlu0 %3521
  %3523 = vrot.lane.b32.xlu0 %v3518, 32
  %v3524 = vpop.permute.xlu0 %3523
  %v3526 = vsel %vm872, %v3522, 0
  %v3529 = vsel %vm872, %v3524, 0
  %3531 = vmatprep.subr.bf16.mxu0 0
  %3532 = vmatpush1.bf16.msra.mxu0 %v3253
  %3533 = vmatprep.subr.bf16.mxu0 0
  %3534 = vmatpush1.bf16.msra.mxu0 %v3254
  %3535 = vmatprep.subr.bf16.mxu0 0
  %3536 = vmatpush1.bf16.msra.mxu0 0
  %3537 = vmatprep.subr.bf16.mxu0 0
  %3538 = vmatpush1.bf16.msra.mxu0 0
  %3539 = vmatprep.subr.bf16.mxu0 0
  %3540 = vmatpush1.bf16.msra.mxu0 0
  %3541 = vmatprep.subr.bf16.mxu0 0
  %3542 = vmatpush1.bf16.msra.mxu0 0
  %3543 = vmatprep.subr.bf16.mxu0 0
  %3544 = vmatpush1.bf16.msra.mxu0 0
  %3545 = vmatprep.subr.bf16.mxu0 0
  %3546 = vmatpush1.bf16.msra.mxu0 0
  %3547 = vmatprep.subr.bf16.mxu0 0
  %3548 = vmatpush1.bf16.msra.mxu0 0
  %3549 = vmatprep.subr.bf16.mxu0 0
  %3550 = vmatpush1.bf16.msra.mxu0 0
  %3551 = vmatprep.subr.bf16.mxu0 0
  %3552 = vmatpush1.bf16.msra.mxu0 0
  %3553 = vmatprep.subr.bf16.mxu0 0
  %3554 = vmatpush1.bf16.msra.mxu0 0
  %3555 = vmatprep.subr.bf16.mxu0 0
  %3556 = vmatpush1.bf16.msra.mxu0 0
  %3557 = vmatprep.subr.bf16.mxu0 0
  %3558 = vmatpush1.bf16.msra.mxu0 0
  %3559 = vmatprep.subr.bf16.mxu0 0
  %3560 = vmatpush1.bf16.msra.mxu0 0
  %3561 = vmatprep.subr.bf16.mxu0 0
  %3562 = vmatpush1.bf16.msra.mxu0 0
  %3563 = vmatprep.mubr.bf16.mxu0 0
  %3564 = vmatmul.mubr.bf16.gmra.mrb[0].mxu0 %v3526
  %v3565 = vpop.f32.mrb[0].mxu0
  %v3566 = vadd.f32 0.0, %v3565
  %v3567 = vpop.f32.mrb[0].mxu0
  %v3568 = vpop.f32.mrb[0].mxu0
  %v3569 = vadd.f32 0.0, %v3568
  %v3570 = vpop.f32.mrb[0].mxu0
  %3571 = vmatprep.mubr.bf16.mxu0 0
  %3572 = vmatmul.mubr.bf16.gmra.mrb[0].mxu0 %v3529
  %v3573 = vpop.f32.mrb[0].mxu0
  %v3574 = vadd.f32 0.0, %v3573
  %v3575 = vpop.f32.mrb[0].mxu0
  %v3576 = vpop.f32.mrb[0].mxu0
  %v3577 = vpop.f32.mrb[0].mxu0
  %3578 = vdwg.mxu0
  %v3579 = vadd.f32 %v3150, %v3566
  %v3580 = vadd.f32 %v3155, %v3569
  %v3581 = vadd.f32 %v3158, %v3574
  %v3582 = vxor.u32 %v3579, 2147483648
  %v3583 = vxor.u32 %v3580, 2147483648
  %v3584 = vxor.u32 %v3581, 2147483648
  %v3585 = vmul.f32 %v3582, 1.442695
  %v3586 = vpow.pop %v3585
  %v3587 = vmul.f32 %v3583, 1.442695
  %v3588 = vpow.pop %v3587
  %v3589 = vmul.f32 %v3584, 1.442695
  %v3590 = vpow.pop %v3589
  %v3591 = vadd.f32 %v3586, 1.0
  %v3592 = vadd.f32 %v3588, 1.0
  %v3593 = vadd.f32 %v3590, 1.0
  %v3594 = vrcp.pop %v3591
  %v3595 = vmul.f32 1.0, %v3594
  %v3596 = vrcp.pop %v3592
  %v3597 = vmul.f32 1.0, %v3596
  %v3598 = vrcp.pop %v3593
  %v3599 = vmul.f32 1.0, %v3598
  %v3600 = vtanh.pop %v3579
  %v3601 = vtanh.pop %v3580
  %v3602 = vtanh.pop %v3581
  %v3603 = vmul.f32 %v3595, %v3496
  %v3604 = vmul.f32 %v3597, %v3497
  %v3605 = vmul.f32 %v3599, %v3498
  %3609 = vrot.lane.b32.xlu0 %v3600, 64
  %v3610 = vpop.permute.xlu0 %3609
  %3611 = vrot.lane.b32.xlu0 %v3601, 64
  %v3612 = vpop.permute.xlu0 %3611
  %3613 = vrot.lane.b32.xlu0 %v3602, 64
  %v3614 = vpop.permute.xlu0 %3613
  %v3618 = vmul.f32 %v3595, %v3610
  %v3619 = vmul.f32 %v3597, %v3612
  %v3620 = vmul.f32 %v3599, %v3614
  %3624 = vrot.lane.b32.xlu0 %v3618, 32
  %v3625 = vpop.permute.xlu0 %3624
  %3626 = vrot.lane.b32.xlu0 %v3619, 32
  %v3627 = vpop.permute.xlu0 %3626
  %3628 = vrot.lane.b32.xlu0 %v3620, 32
  %v3629 = vpop.permute.xlu0 %3628
  %v3633 = vadd.f32 %v3603, %v3625
  %v3634 = vadd.f32 %v3604, %v3627
  %v3635 = vadd.f32 %v3605, %v3629
  %v3636 = vtanh.pop %v3633
  %v3637 = vtanh.pop %v3634
  %v3638 = vtanh.pop %v3635
  %3642 = vrot.lane.b32.xlu0 %v3636, 64
  %v3643 = vpop.permute.xlu0 %3642
  %3644 = vrot.lane.b32.xlu0 %v3637, 64
  %v3645 = vpop.permute.xlu0 %3644
  %3646 = vrot.lane.b32.xlu0 %v3638, 64
  %v3647 = vpop.permute.xlu0 %3646
  %v3651 = vmul.f32 %v3595, %v3643
  %v3652 = vmul.f32 %v3597, %v3645
  %v3653 = vmul.f32 %v3599, %v3647
  %v3654 = vpack.c.bf16 %v3652, %v3651
  %v3655 = vpack.c.bf16 %v3653, %v3653
  %3658 = vrot.lane.b32.xlu0 %v3654, 32
  %v3659 = vpop.permute.xlu0 %3658
  %3660 = vrot.lane.b32.xlu0 %v3655, 32
  %v3661 = vpop.permute.xlu0 %3660
  %v3663 = vsel %vm872, %v3659, 0
  %v3666 = vsel %vm872, %v3661, 0
  %3668 = vmatprep.subr.bf16.mxu0 0
  %3669 = vmatpush1.bf16.msra.mxu0 %v3253
  %3670 = vmatprep.subr.bf16.mxu0 0
  %3671 = vmatpush1.bf16.msra.mxu0 %v3254
  %3672 = vmatprep.subr.bf16.mxu0 0
  %3673 = vmatpush1.bf16.msra.mxu0 0
  %3674 = vmatprep.subr.bf16.mxu0 0
  %3675 = vmatpush1.bf16.msra.mxu0 0
  %3676 = vmatprep.subr.bf16.mxu0 0
  %3677 = vmatpush1.bf16.msra.mxu0 0
  %3678 = vmatprep.subr.bf16.mxu0 0
  %3679 = vmatpush1.bf16.msra.mxu0 0
  %3680 = vmatprep.subr.bf16.mxu0 0
  %3681 = vmatpush1.bf16.msra.mxu0 0
  %3682 = vmatprep.subr.bf16.mxu0 0
  %3683 = vmatpush1.bf16.msra.mxu0 0
  %3684 = vmatprep.subr.bf16.mxu0 0
  %3685 = vmatpush1.bf16.msra.mxu0 0
  %3686 = vmatprep.subr.bf16.mxu0 0
  %3687 = vmatpush1.bf16.msra.mxu0 0
  %3688 = vmatprep.subr.bf16.mxu0 0
  %3689 = vmatpush1.bf16.msra.mxu0 0
  %3690 = vmatprep.subr.bf16.mxu0 0
  %3691 = vmatpush1.bf16.msra.mxu0 0
  %3692 = vmatprep.subr.bf16.mxu0 0
  %3693 = vmatpush1.bf16.msra.mxu0 0
  %3694 = vmatprep.subr.bf16.mxu0 0
  %3695 = vmatpush1.bf16.msra.mxu0 0
  %3696 = vmatprep.subr.bf16.mxu0 0
  %3697 = vmatpush1.bf16.msra.mxu0 0
  %3698 = vmatprep.subr.bf16.mxu0 0
  %3699 = vmatpush1.bf16.msra.mxu0 0
  %3700 = vmatprep.mubr.bf16.mxu0 0
  %3701 = vmatmul.mubr.bf16.gmra.mrb[0].mxu0 %v3663
  %v3702 = vpop.f32.mrb[0].mxu0
  %v3703 = vadd.f32 0.0, %v3702
  %v3704 = vpop.f32.mrb[0].mxu0
  %v3705 = vpop.f32.mrb[0].mxu0
  %v3706 = vadd.f32 0.0, %v3705
  %v3707 = vpop.f32.mrb[0].mxu0
  %3708 = vmatprep.mubr.bf16.mxu0 0
  %3709 = vmatmul.mubr.bf16.gmra.mrb[0].mxu0 %v3666
  %v3710 = vpop.f32.mrb[0].mxu0
  %v3711 = vadd.f32 0.0, %v3710
  %v3712 = vpop.f32.mrb[0].mxu0
  %v3713 = vpop.f32.mrb[0].mxu0
  %v3714 = vpop.f32.mrb[0].mxu0
  %3715 = vdwg.mxu0
  %v3716 = vadd.f32 %v3163, %v3703
  %v3717 = vadd.f32 %v3166, %v3706
  %v3718 = vadd.f32 %v3171, %v3711
  %v3719 = vxor.u32 %v3716, 2147483648
  %v3720 = vxor.u32 %v3717, 2147483648
  %v3721 = vxor.u32 %v3718, 2147483648
  %v3722 = vmul.f32 %v3719, 1.442695
  %v3723 = vpow.pop %v3722
  %v3724 = vmul.f32 %v3720, 1.442695
  %v3725 = vpow.pop %v3724
  %v3726 = vmul.f32 %v3721, 1.442695
  %v3727 = vpow.pop %v3726
  %v3728 = vadd.f32 %v3723, 1.0
  %v3729 = vadd.f32 %v3725, 1.0
  %v3730 = vadd.f32 %v3727, 1.0
  %v3731 = vrcp.pop %v3728
  %v3732 = vmul.f32 1.0, %v3731
  %v3733 = vrcp.pop %v3729
  %v3734 = vmul.f32 1.0, %v3733
  %v3735 = vrcp.pop %v3730
  %v3736 = vmul.f32 1.0, %v3735
  %v3737 = vtanh.pop %v3716
  %v3738 = vtanh.pop %v3717
  %v3739 = vtanh.pop %v3718
  %v3740 = vmul.f32 %v3732, %v3633
  %v3741 = vmul.f32 %v3734, %v3634
  %v3742 = vmul.f32 %v3736, %v3635
  %3746 = vrot.lane.b32.xlu0 %v3737, 64
  %v3747 = vpop.permute.xlu0 %3746
  %3748 = vrot.lane.b32.xlu0 %v3738, 64
  %v3749 = vpop.permute.xlu0 %3748
  %3750 = vrot.lane.b32.xlu0 %v3739, 64
  %v3751 = vpop.permute.xlu0 %3750
  %v3755 = vmul.f32 %v3732, %v3747
  %v3756 = vmul.f32 %v3734, %v3749
  %v3757 = vmul.f32 %v3736, %v3751
  %3761 = vrot.lane.b32.xlu0 %v3755, 32
  %v3762 = vpop.permute.xlu0 %3761
  %3763 = vrot.lane.b32.xlu0 %v3756, 32
  %v3764 = vpop.permute.xlu0 %3763
  %3765 = vrot.lane.b32.xlu0 %v3757, 32
  %v3766 = vpop.permute.xlu0 %3765
  %v3770 = vadd.f32 %v3740, %v3762
  %v3771 = vadd.f32 %v3741, %v3764
  %v3772 = vadd.f32 %v3742, %v3766
  %v3773 = vtanh.pop %v3770
  %v3774 = vtanh.pop %v3771
  %v3775 = vtanh.pop %v3772
  %3779 = vrot.lane.b32.xlu0 %v3773, 64
  %v3780 = vpop.permute.xlu0 %3779
  %3781 = vrot.lane.b32.xlu0 %v3774, 64
  %v3782 = vpop.permute.xlu0 %3781
  %3783 = vrot.lane.b32.xlu0 %v3775, 64
  %v3784 = vpop.permute.xlu0 %3783
  %v3788 = vmul.f32 %v3732, %v3780
  %v3789 = vmul.f32 %v3734, %v3782
  %v3790 = vmul.f32 %v3736, %v3784
  %v3791 = vpack.c.bf16 %v3789, %v3788
  %v3792 = vpack.c.bf16 %v3790, %v3790
  %3795 = vrot.lane.b32.xlu0 %v3791, 32
  %v3796 = vpop.permute.xlu0 %3795
  %3797 = vrot.lane.b32.xlu0 %v3792, 32
  %v3798 = vpop.permute.xlu0 %3797
  %v3800 = vsel %vm872, %v3796, 0
  %v3803 = vsel %vm872, %v3798, 0
  %3805 = vmatprep.subr.bf16.mxu0 0
  %3806 = vmatpush1.bf16.msra.mxu0 %v3253
  %3807 = vmatprep.subr.bf16.mxu0 0
  %3808 = vmatpush1.bf16.msra.mxu0 %v3254
  %3809 = vmatprep.subr.bf16.mxu0 0
  %3810 = vmatpush1.bf16.msra.mxu0 0
  %3811 = vmatprep.subr.bf16.mxu0 0
  %3812 = vmatpush1.bf16.msra.mxu0 0
  %3813 = vmatprep.subr.bf16.mxu0 0
  %3814 = vmatpush1.bf16.msra.mxu0 0
  %3815 = vmatprep.subr.bf16.mxu0 0
  %3816 = vmatpush1.bf16.msra.mxu0 0
  %3817 = vmatprep.subr.bf16.mxu0 0
  %3818 = vmatpush1.bf16.msra.mxu0 0
  %3819 = vmatprep.subr.bf16.mxu0 0
  %3820 = vmatpush1.bf16.msra.mxu0 0
  %3821 = vmatprep.subr.bf16.mxu0 0
  %3822 = vmatpush1.bf16.msra.mxu0 0
  %3823 = vmatprep.subr.bf16.mxu0 0
  %3824 = vmatpush1.bf16.msra.mxu0 0
  %3825 = vmatprep.subr.bf16.mxu0 0
  %3826 = vmatpush1.bf16.msra.mxu0 0
  %3827 = vmatprep.subr.bf16.mxu0 0
  %3828 = vmatpush1.bf16.msra.mxu0 0
  %3829 = vmatprep.subr.bf16.mxu0 0
  %3830 = vmatpush1.bf16.msra.mxu0 0
  %3831 = vmatprep.subr.bf16.mxu0 0
  %3832 = vmatpush1.bf16.msra.mxu0 0
  %3833 = vmatprep.subr.bf16.mxu0 0
  %3834 = vmatpush1.bf16.msra.mxu0 0
  %3835 = vmatprep.subr.bf16.mxu0 0
  %3836 = vmatpush1.bf16.msra.mxu0 0
  %3837 = vmatprep.mubr.bf16.mxu0 0
  %3838 = vmatmul.mubr.bf16.gmra.mrb[0].mxu0 %v3800
  %v3839 = vpop.f32.mrb[0].mxu0
  %v3840 = vadd.f32 0.0, %v3839
  %v3841 = vpop.f32.mrb[0].mxu0
  %v3842 = vpop.f32.mrb[0].mxu0
  %v3843 = vadd.f32 0.0, %v3842
  %v3844 = vpop.f32.mrb[0].mxu0
  %3845 = vmatprep.mubr.bf16.mxu0 0
  %3846 = vmatmul.mubr.bf16.gmra.mrb[0].mxu0 %v3803
  %v3847 = vpop.f32.mrb[0].mxu0
  %v3848 = vadd.f32 0.0, %v3847
  %v3849 = vpop.f32.mrb[0].mxu0
  %v3850 = vpop.f32.mrb[0].mxu0
  %v3851 = vpop.f32.mrb[0].mxu0
  %3852 = vdwg.mxu0
  %v3853 = vadd.f32 %v3174, %v3840
  %v3854 = vadd.f32 %v3179, %v3843
  %v3855 = vadd.f32 %v3182, %v3848
  %v3856 = vxor.u32 %v3853, 2147483648
  %v3857 = vxor.u32 %v3854, 2147483648
  %v3858 = vxor.u32 %v3855, 2147483648
  %v3859 = vmul.f32 %v3856, 1.442695
  %v3860 = vpow.pop %v3859
  %v3861 = vmul.f32 %v3857, 1.442695
  %v3862 = vpow.pop %v3861
  %v3863 = vmul.f32 %v3858, 1.442695
  %v3864 = vpow.pop %v3863
  %v3865 = vadd.f32 %v3860, 1.0
  %v3866 = vadd.f32 %v3862, 1.0
  %v3867 = vadd.f32 %v3864, 1.0
  %v3868 = vrcp.pop %v3865
  %v3869 = vmul.f32 1.0, %v3868
  %v3870 = vrcp.pop %v3866
  %v3871 = vmul.f32 1.0, %v3870
  %v3872 = vrcp.pop %v3867
  %v3873 = vmul.f32 1.0, %v3872
  %v3874 = vtanh.pop %v3853
  %v3875 = vtanh.pop %v3854
  %v3876 = vtanh.pop %v3855
  %v3877 = vmul.f32 %v3869, %v3770
  %v3878 = vmul.f32 %v3871, %v3771
  %v3879 = vmul.f32 %v3873, %v3772
  %3883 = vrot.lane.b32.xlu0 %v3874, 64
  %v3884 = vpop.permute.xlu0 %3883
  %3885 = vrot.lane.b32.xlu0 %v3875, 64
  %v3886 = vpop.permute.xlu0 %3885
  %3887 = vrot.lane.b32.xlu0 %v3876, 64
  %v3888 = vpop.permute.xlu0 %3887
  %v3892 = vmul.f32 %v3869, %v3884
  %v3893 = vmul.f32 %v3871, %v3886
  %v3894 = vmul.f32 %v3873, %v3888
  %3898 = vrot.lane.b32.xlu0 %v3892, 32
  %v3899 = vpop.permute.xlu0 %3898
  %3900 = vrot.lane.b32.xlu0 %v3893, 32
  %v3901 = vpop.permute.xlu0 %3900
  %3902 = vrot.lane.b32.xlu0 %v3894, 32
  %v3903 = vpop.permute.xlu0 %3902
  %v3907 = vadd.f32 %v3877, %v3899
  %v3908 = vadd.f32 %v3878, %v3901
  %v3909 = vadd.f32 %v3879, %v3903
  %v3910 = vtanh.pop %v3907
  %v3911 = vtanh.pop %v3908
  %v3912 = vtanh.pop %v3909
  %3916 = vrot.lane.b32.xlu0 %v3910, 64
  %v3917 = vpop.permute.xlu0 %3916
  %3918 = vrot.lane.b32.xlu0 %v3911, 64
  %v3919 = vpop.permute.xlu0 %3918
  %3920 = vrot.lane.b32.xlu0 %v3912, 64
  %v3921 = vpop.permute.xlu0 %3920
  %v3925 = vmul.f32 %v3869, %v3917
  %v3926 = vmul.f32 %v3871, %v3919
  %v3927 = vmul.f32 %v3873, %v3921
  %3931 = vrot.lane.b32.xlu0 %v3514, 32
  %v3932 = vpop.permute.xlu0 %3931
  %3933 = vrot.lane.b32.xlu0 %v3515, 32
  %v3934 = vpop.permute.xlu0 %3933
  %3935 = vrot.lane.b32.xlu0 %v3516, 32
  %v3936 = vpop.permute.xlu0 %3935
  %3943 = vrot.lane.b32.xlu0 %v3651, 64
  %v3944 = vpop.permute.xlu0 %3943
  %3945 = vrot.lane.b32.xlu0 %v3652, 64
  %v3946 = vpop.permute.xlu0 %3945
  %3947 = vrot.lane.b32.xlu0 %v3653, 64
  %v3948 = vpop.permute.xlu0 %3947
  %3955 = vrot.lane.b32.xlu0 %v3788, 96
  %v3956 = vpop.permute.xlu0 %3955
  %3957 = vrot.lane.b32.xlu0 %v3789, 96
  %v3958 = vpop.permute.xlu0 %3957
  %3959 = vrot.lane.b32.xlu0 %v3790, 96
  %v3960 = vpop.permute.xlu0 %3959
  %v3964 = vsel %vm872, %v3932, %v3944
  %v3965 = vsel %vm872, %v3934, %v3946
  %v3966 = vsel %vm872, %v3936, %v3948
  %vm3967 = vcmask 523264
  %v3968 = vsel %vm3967, %v3964, %v3956
  %v3969 = vsel %vm3967, %v3965, %v3958
  %v3970 = vsel %vm3967, %v3966, %v3960
  %vm3971 = vcmask 785408
  %v3972 = vsel %vm3971, %v3968, %v3925
  %v3973 = vsel %vm3971, %v3969, %v3926
  %v3974 = vsel %vm3971, %v3970, %v3927
  %v3975 = vld [vmem:[%s6] sm:$0xf]
  %v3976 = vld [vmem:[%s6 + $0x4] sm:$0xf]
  %v3977 = vld [vmem:[%s6 + $0x8] sm:$0xf]
  %v3978 = vld [vmem:[%s6 + $0xc] sm:$0xf]
  %v3979 = vld [vmem:[%s6 + $0x10] sm:$0xf]
  %v3980 = vld [vmem:[%s6 + $0x14] sm:$0xf]
  %v3981 = vld [vmem:[%s6 + $0x18] sm:$0xf]
  %v3982 = vld [vmem:[%s6 + $0x1c] sm:$0xf]
  %v3983 = vld [vmem:[%s6 + $0x20] sm:$0xf]
  %v3984 = vld [vmem:[%s6 + $0x24] sm:$0xf]
  %v3985 = vld [vmem:[%s6 + $0x28] sm:$0xf]
  %v3986 = vld [vmem:[%s6 + $0x2c] sm:$0xf]
  %v3987 = vld [vmem:[%s6 + $0x30] sm:$0xf]
  %v3988 = vld [vmem:[%s6 + $0x34] sm:$0xf]
  %v3989 = vld [vmem:[%s6 + $0x38] sm:$0xf]
  %v3990 = vld [vmem:[%s6 + $0x3c] sm:$0xf]
  %v3991 = vpack.c.bf16 %v3973, %v3972
  %v3992 = vpack.c.bf16 %v3974, %v3974
  %v3993 = vld [vmem:[%s8 + $0x3] sm:$0x1]
  %v3994 = vlaneseq
  %v3995 = vshrl.u32 %v3994, 7
  %v3996 = vsub.s32 0, %v3995
  %v3997 = vrot.slane %v3993, %v3996
  %v4014 = vunpack.c.l.b16 %v3975
  %v4015 = vunpack.c.l.b16 %v3976
  %v4016 = vunpack.c.l.b16 %v3977
  %v4017 = vunpack.c.l.b16 %v3978
  %v4018 = vunpack.c.l.b16 %v3979
  %v4019 = vunpack.c.l.b16 %v3980
  %v4020 = vunpack.c.l.b16 %v3981
  %v4021 = vunpack.c.l.b16 %v3982
  %v4022 = vunpack.c.l.b16 %v3983
  %v4023 = vunpack.c.l.b16 %v3984
  %v4024 = vunpack.c.l.b16 %v3985
  %v4025 = vunpack.c.l.b16 %v3986
  %v4026 = vunpack.c.l.b16 %v3987
  %v4027 = vunpack.c.l.b16 %v3988
  %v4028 = vunpack.c.l.b16 %v3989
  %v4029 = vunpack.c.l.b16 %v3990
  %v4030 = vpack.c.b16 %v4015, %v4014
  %v4031 = vpack.c.b16 %v4017, %v4016
  %v4032 = vpack.c.b16 %v4019, %v4018
  %v4033 = vpack.c.b16 %v4021, %v4020
  %v4034 = vpack.c.b16 %v4023, %v4022
  %v4035 = vpack.c.b16 %v4025, %v4024
  %v4036 = vpack.c.b16 %v4027, %v4026
  %v4037 = vpack.c.b16 %v4029, %v4028
  %4046 = vmatprep.subr.bf16.mxu0 0
  %4047 = vmatpush1.bf16.msra.mxu0 %v4030
  %4048 = vmatprep.subr.bf16.mxu0 0
  %4049 = vmatpush1.bf16.msra.mxu0 %v4031
  %4050 = vmatprep.subr.bf16.mxu0 0
  %4051 = vmatpush1.bf16.msra.mxu0 %v4032
  %4052 = vmatprep.subr.bf16.mxu0 0
  %4053 = vmatpush1.bf16.msra.mxu0 %v4033
  %4054 = vmatprep.subr.bf16.mxu0 0
  %4055 = vmatpush1.bf16.msra.mxu0 %v4034
  %4056 = vmatprep.subr.bf16.mxu0 0
  %4057 = vmatpush1.bf16.msra.mxu0 %v4035
  %4058 = vmatprep.subr.bf16.mxu0 0
  %4059 = vmatpush1.bf16.msra.mxu0 %v4036
  %4060 = vmatprep.subr.bf16.mxu0 0
  %4061 = vmatpush1.bf16.msra.mxu0 %v4037
  %4062 = vmatprep.subr.bf16.mxu0 0
  %4063 = vmatpush1.bf16.msra.mxu0 0
  %4064 = vmatprep.subr.bf16.mxu0 0
  %4065 = vmatpush1.bf16.msra.mxu0 0
  %4066 = vmatprep.subr.bf16.mxu0 0
  %4067 = vmatpush1.bf16.msra.mxu0 0
  %4068 = vmatprep.subr.bf16.mxu0 0
  %4069 = vmatpush1.bf16.msra.mxu0 0
  %4070 = vmatprep.subr.bf16.mxu0 0
  %4071 = vmatpush1.bf16.msra.mxu0 0
  %4072 = vmatprep.subr.bf16.mxu0 0
  %4073 = vmatpush1.bf16.msra.mxu0 0
  %4074 = vmatprep.subr.bf16.mxu0 0
  %4075 = vmatpush1.bf16.msra.mxu0 0
  %4076 = vmatprep.subr.bf16.mxu0 0
  %4077 = vmatpush1.bf16.msra.mxu0 0
  %4078 = vmatprep.mubr.bf16.mxu0 0
  %4079 = vmatmul.mubr.bf16.gmra.mrb[0].mxu0 %v3991
  %v4080 = vpop.f32.mrb[0].mxu0
  %v4081 = vadd.f32 %v3997, %v4080
  %v4082 = vpop.f32.mrb[0].mxu0
  %v4083 = vpop.f32.mrb[0].mxu0
  %v4084 = vadd.f32 %v3997, %v4083
  %v4085 = vpop.f32.mrb[0].mxu0
  %4086 = vmatprep.mubr.bf16.mxu0 0
  %4087 = vmatmul.mubr.bf16.gmra.mrb[0].mxu0 %v3992
  %v4088 = vpop.f32.mrb[0].mxu0
  %v4089 = vadd.f32 %v3997, %v4088
  %v4090 = vpop.f32.mrb[0].mxu0
  %v4091 = vpop.f32.mrb[0].mxu0
  %v4092 = vpop.f32.mrb[0].mxu0
  %4093 = vdwg.mxu0
  %4094 = vst [vmem:[%s11] sm:$0xff] %v4081
  %4095 = vst [vmem:[%s11 + $0x8] sm:$0xff] %v4084
  %4096 = vst [vmem:[%s11 + $0x10] sm:$0xff] %v4089
  // Predicated region
  $region38: #{uc5_forward.1} parent=0 // pred_check
    _
  $region39: #{uc5_forward.1} parent=0 // pred_check_branch
    %4098 = sbr.rel (0) target = $region41
  $region40: #{uc5_forward.1} parent=0 // pred_region
    _
  $region41: #{uc5_forward.1} parent=0 // pred_fallthru
    _
  // Predicated region
  $region42: #{uc5_forward.1} parent=0 // pred_check
    _
  $region43: #{uc5_forward.1} parent=0 // pred_check_branch
    %4100 = sbr.rel (0) target = $region45
  $region44: #{uc5_forward.1} parent=0 // pred_region
    _
  $region45: #{uc5_forward.1} parent=0 // pred_fallthru
    _
  // Predicated region
  $region46: #{uc5_forward.1} parent=0 // pred_check
    _
  $region47: #{uc5_forward.1} parent=0 // pred_check_branch
    %4102 = sbr.rel (0) target = $region49
  $region48: #{uc5_forward.1} parent=0 // pred_region
    _
  $region49: #{uc5_forward.1} parent=0 // pred_fallthru
    _
  // Predicated region
  $region50: #{uc5_forward.1} parent=0 // pred_check
    _
  $region51: #{uc5_forward.1} parent=0 // pred_check_branch
    %4104 = sbr.rel (0) target = $region53
  $region52: #{uc5_forward.1} parent=0 // pred_region
    _
  $region53: #{uc5_forward.1} parent=0 // pred_fallthru
    _
  // Predicated region
  $region54: #{uc5_forward.1} parent=0 // pred_check
    _
  $region55: #{uc5_forward.1} parent=0 // pred_check_branch
    %4106 = sbr.rel (0) target = $region57
  $region56: #{uc5_forward.1} parent=0 // pred_region
    _
  $region57: #{uc5_forward.1} parent=0 // pred_fallthru
    _
  // Predicated region
  $region58: #{uc5_forward.1} parent=0 // pred_check
    _
  $region59: #{uc5_forward.1} parent=0 // pred_check_branch
    %4108 = sbr.rel (0) target = $region61
  $region60: #{uc5_forward.1} parent=0 // pred_region
    _
  $region61: #{uc5_forward.1} parent=0 // pred_fallthru
    _

</llo_original>
